<compile_context>
chip_gen: v7x
topology: tpu7x:2x2x1
jax: 0.10.0
libtpu: 0.0.40
codegen_flags: <defaults>
</compile_context>

<pallas_src>
import math
import functools

import jax
import jax.numpy as jnp
import numpy as np
from jax.experimental import pallas as pl
from jax.experimental.pallas import tpu as pltpu


def _round_up(v, m):
    return (v + m - 1) // m * m


# ---------------------------------------------------------------------------
# The fused VAE forward kernel (one batch element per grid step)
# ---------------------------------------------------------------------------
def _vae_kernel(x_ref, w_ref, b_ref, d_ref, u_ref,
                recon_ref, mu_ref, logvar_ref, *, layout, latent):
    f32 = jnp.float32

    def im2col(x, k, pad):
        # Stack the k stride-1 shifted views of x (C, L) along sublanes ->
        # (k*C, L_out).  Shifts = zero-pad + static lane slices (no MXU work).
        c, l = x.shape
        if pad > 0:
            z = jnp.zeros((c, pad), f32)
            x = jnp.concatenate([z, x, z], axis=1)
        lout = l + 2 * pad - k + 1
        return jnp.concatenate([x[:, j:j + lout] for j in range(k)], axis=0)

    def conv_slab(slab, name):
        # One MXU matmul per conv: (Cout, K*Cin) @ (K*Cin, L_out), f32 acc.
        r0, cout, kcin = layout[name]
        w = w_ref[r0:r0 + cout, 0:kcin]             # bf16 packed weight slice
        b = b_ref[r0:r0 + cout, :]                  # f32 (Cout, 1), BN folded
        y = jnp.dot(w, slab.astype(w.dtype), preferred_element_type=f32)
        return y + b

    def kernel_size(name, cin):
        return layout[name][2] // cin

    def conv(x, name, pad=None):
        k = kernel_size(name, x.shape[0])
        p = k // 2 if pad is None else pad
        return conv_slab(im2col(x, k, p), name)

    def silu(v):
        return v * jax.nn.sigmoid(v)

    # ------------------------------- encoder -------------------------------
    x = x_ref[...].astype(f32)                                   # (1, L)
    h = silu(conv(x, "conv_in"))                                 # (ch, L)
    for i in range(1, 5):                                        # 4x ResDown
        blk = f"rd{i}"
        l = h.shape[1]
        k = kernel_size(blk + ".conv1", h.shape[0])
        slab = im2col(h, k, k // 2)                              # (k*Cin, L)
        # Fold the stride-2 by decimating the slab columns with one selection
        # matmul; the decimated slab is shared by conv1 and conv3.
        slab2 = jnp.dot(slab, d_ref[0:l, 0:l // 2],
                        preferred_element_type=f32)              # (k*Cin, L/2)
        skip = conv_slab(slab2, blk + ".conv3")                  # bn2 scale folded
        t = silu(conv_slab(slab2, blk + ".conv1"))               # bn1 folded
        h = silu(conv(t, blk + ".conv2") + skip)                 # bn2 folded
    head = conv(h, "conv_head", pad=0)                           # fused mu|logvar
    mu = head[:latent, :]
    logvar = head[latent:, :]
    z = mu  # TODO(synk): training-mode reparameterization (randn_like) omitted; eval z = mu

    # ------------------------------- decoder -------------------------------
    k_t = kernel_size("conv_t_up", z.shape[0])
    h = silu(conv(z, "conv_t_up", pad=k_t - 1))      # ConvTranspose1d(stride=1)
    u_off = 0
    for i in range(1, 5):                                        # 4x ResUp
        blk = f"ru{i}"
        l = h.shape[1]
        up = u_ref[u_off:u_off + l, 0:2 * l]         # 2x linear-upsample matrix
        u_off += l
        u = jnp.dot(h, up, preferred_element_type=f32)           # (Cin, 2L)
        k = kernel_size(blk + ".conv1", u.shape[0])
        slab = im2col(u, k, k // 2)                  # shared by conv1 & conv3
        skip = conv_slab(slab, blk + ".conv3")
        t = silu(conv_slab(slab, blk + ".conv1"))
        h = silu(conv(t, blk + ".conv2") + skip)
    y = jnp.tanh(conv(h, "conv_out")) * (2.0 * math.pi)

    recon_ref[...] = y.astype(recon_ref.dtype)
    mu_ref[...] = mu.astype(mu_ref.dtype)
    logvar_ref[...] = logvar.astype(logvar_ref.dtype)


# ---------------------------------------------------------------------------
# Wrapper
# ---------------------------------------------------------------------------
def _upsample_matrix_np(l):
    # (x @ U) == F.interpolate(x, scale_factor=2, mode='linear',
    #                          align_corners=False) along the length axis.
    m = np.zeros((l, 2 * l), np.float32)
    r = np.arange(l)
    m[r, 2 * r] += 0.75
    m[r, 2 * r + 1] += 0.75
    m[r[:-1], 2 * r[:-1] + 2] += 0.25
    m[r[1:], 2 * r[1:] - 1] += 0.25
    m[0, 0] += 0.25                                  # left edge clamp
    m[l - 1, 2 * l - 1] += 0.25                      # right edge clamp
    return m


@functools.partial(jax.jit, static_argnums=(0, 1, 2, 3))
def _vae_forward_impl(layout, latent, c_out, k_head, wbuf, bbuf, x):
    B, L = x.shape
    assert L % 16 == 0 and L // 16 >= k_head, "L must be a multiple of 16 and large enough"
    x3 = x[:, None, :].astype(jnp.float32)                        # (B, 1, L)

    l_bot = L // 16                                               # after 4 ResDowns
    l_mu = l_bot - k_head + 1

    # Host-built (trace-time) constants: stride-2 decimation + 2x upsample.
    dmat = np.zeros((L, L // 2), np.float32)
    dmat[2 * np.arange(L // 2), np.arange(L // 2)] = 1.0
    up_lens = [l_bot, 2 * l_bot, 4 * l_bot, 8 * l_bot]
    ubuf = np.zeros((sum(up_lens), 2 * up_lens[-1]), np.float32)
    off = 0
    for l in up_lens:
        ubuf[off:off + l, 0:2 * l] = _upsample_matrix_np(l)
        off += l
    dmat = jnp.asarray(dmat)
    ubuf = jnp.asarray(ubuf)

    lay = {name: (r0, cout, kcin) for name, r0, cout, kcin in layout}
    kernel = functools.partial(_vae_kernel, layout=lay, latent=latent)

    in_specs = [
        pl.BlockSpec((None, 1, L), lambda b: (b, 0, 0)),          # x (per batch)
        pl.BlockSpec(wbuf.shape, lambda b: (0, 0)),               # packed weights
        pl.BlockSpec(bbuf.shape, lambda b: (0, 0)),               # packed biases
        pl.BlockSpec(dmat.shape, lambda b: (0, 0)),               # decimation
        pl.BlockSpec(ubuf.shape, lambda b: (0, 0)),               # upsample
    ]
    out_specs = (
        pl.BlockSpec((None, c_out, L), lambda b: (b, 0, 0)),
        pl.BlockSpec((None, latent, l_mu), lambda b: (b, 0, 0)),
        pl.BlockSpec((None, latent, l_mu), lambda b: (b, 0, 0)),
    )
    out_shape = (
        jax.ShapeDtypeStruct((B, c_out, L), jnp.float32),
        jax.ShapeDtypeStruct((B, latent, l_mu), jnp.float32),
        jax.ShapeDtypeStruct((B, latent, l_mu), jnp.float32),
    )
    return pl.pallas_call(
        kernel,
        grid=(B,),
        in_specs=in_specs,
        out_specs=out_specs,
        out_shape=out_shape,
        compiler_params=pltpu.CompilerParams(
            dimension_semantics=("parallel",)),                   # megacore on v7x
    )(x3, wbuf, bbuf, dmat, ubuf)


def vae_forward(prepared, x):
    return _vae_forward_impl(prepared["layout"], prepared["latent"],
                             prepared["c_out"], prepared["k_head"],
                             prepared["wbuf"], prepared["bbuf"], x)


# ---------------------------------------------------------------------------
# Host-side parameter preparation: BN folding + im2col weight packing
# (runs once, outside the jitted forward)
# ---------------------------------------------------------------------------
def prepare_inference_params(params, weight_dtype=jnp.bfloat16):
    enc, dec = params["enc"], params["dec"]

    def bn_fold(bn):
        s = np.asarray(bn["gamma"]) / np.sqrt(np.asarray(bn["var"]) + bn["eps"])
        t = np.asarray(bn["beta"]) - np.asarray(bn["mean"]) * s
        return s.astype(np.float32), t.astype(np.float32)

    def to_mat(w):
        # (Cout, Cin, K) -> (Cout, K*Cin); column index j*Cin + c matches the
        # in-kernel im2col slab layout (tap-major, channel-minor).
        w = np.asarray(w, np.float32)
        cout, cin, k = w.shape
        return np.transpose(w, (0, 2, 1)).reshape(cout, k * cin)

    def folded(conv, scale=None, shift=None):
        w = np.asarray(conv["w"], np.float32)
        b = np.asarray(conv["b"], np.float32)
        cout = w.shape[0]
        s = np.ones((cout,), np.float32) if scale is None else scale
        t = np.zeros((cout,), np.float32) if shift is None else shift
        return to_mat(w) * s[:, None], b * s + t

    entries = []

    def add(name, conv, scale=None, shift=None):
        wm, bb = folded(conv, scale, shift)
        entries.append((name, wm, bb))

    # encoder
    add("conv_in", enc["conv_in"])
    for i in range(1, 5):
        blk = enc[f"rd{i}"]
        s1, t1 = bn_fold(blk["bn1"])
        s2, t2 = bn_fold(blk["bn2"])
        add(f"rd{i}.conv1", blk["conv1"], s1, t1)
        add(f"rd{i}.conv2", blk["conv2"], s2, t2)    # bn2 shift added once here
        add(f"rd{i}.conv3", blk["conv3"], s2, None)  # bn2 scale also on skip
    # fused latent head: mu and logvar share one im2col slab and one matmul
    wm_mu, b_mu = folded(enc["conv_mu"])
    wm_lv, b_lv = folded(enc["conv_logvar"])
    entries.append(("conv_head", np.concatenate([wm_mu, wm_lv], axis=0),
                    np.concatenate([b_mu, b_lv], axis=0)))

    # decoder: ConvTranspose1d(stride=1) == Conv1d with flipped, swapped kernel
    wt = np.asarray(dec["conv_t_up"]["w"], np.float32)            # (Cin, Cout, K)
    w_conv = np.flip(np.transpose(wt, (1, 0, 2)), axis=-1)
    add("conv_t_up", {"w": w_conv, "b": dec["conv_t_up"]["b"]})
    for i in range(1, 5):
        blk = dec[f"ru{i}"]
        s1, t1 = bn_fold(blk["bn1"])
        s2, t2 = bn_fold(blk["bn2"])
        add(f"ru{i}.conv1", blk["conv1"], s1, t1)
        add(f"ru{i}.conv2", blk["conv2"], s2, t2)
        add(f"ru{i}.conv3", blk["conv3"], s2, None)
    add("conv_out", dec["conv_out"])

    # pack everything into ONE weight slab + ONE bias slab (8-aligned rows)
    kcin_pad = _round_up(max(wm.shape[1] for _, wm, _ in entries), 128)
    layout, r = [], 0
    for name, wm, _ in entries:
        layout.append((name, int(r), int(wm.shape[0]), int(wm.shape[1])))
        r += _round_up(wm.shape[0], 8)
    rtot = _round_up(r, 8)
    wbuf = np.zeros((rtot, kcin_pad), np.float32)
    bbuf = np.zeros((rtot, 1), np.float32)
    for (name, r0, cout, kcin), (_, wm, bb) in zip(layout, entries):
        wbuf[r0:r0 + cout, :kcin] = wm
        bbuf[r0:r0 + cout, 0] = bb

    return {
        "layout": tuple(layout),
        "wbuf": jnp.asarray(wbuf, weight_dtype),   # bf16 matmul side
        "bbuf": jnp.asarray(bbuf, jnp.float32),    # f32 bias / BN shift
        "latent": int(enc["conv_mu"]["w"].shape[0]),
        "c_out": int(dec["conv_out"]["w"].shape[0]),
        "k_head": int(enc["conv_mu"]["w"].shape[2]),
    }


# ---------------------------------------------------------------------------
# Deterministic parameter construction (mirrors nn.Module __init__ shapes)
# ---------------------------------------------------------------------------
def _conv_init(key, cout, cin, k):
    kw, kb = jax.random.split(key)
    bound = 1.0 / math.sqrt(cin * k)
    return {"w": jax.random.uniform(kw, (cout, cin, k), jnp.float32, -bound, bound),
            "b": jax.random.uniform(kb, (cout,), jnp.float32, -bound, bound)}


def _convT_init(key, cin, cout, k):
    kw, kb = jax.random.split(key)
    bound = 1.0 / math.sqrt(cout * k)
    return {"w": jax.random.uniform(kw, (cin, cout, k), jnp.float32, -bound, bound),
            "b": jax.random.uniform(kb, (cout,), jnp.float32, -bound, bound)}


def _bn_init(c, eps):
    return {"gamma": jnp.ones((c,), jnp.float32), "beta": jnp.zeros((c,), jnp.float32),
            "mean": jnp.zeros((c,), jnp.float32), "var": jnp.ones((c,), jnp.float32),
            "eps": eps}


def _res_down_init(key, cin, cout, k=3):
    k1, k2, k3 = jax.random.split(key, 3)
    return {"conv1": _conv_init(k1, cout // 2, cin, k), "bn1": _bn_init(cout // 2, 1e-5),
            "conv2": _conv_init(k2, cout, cout // 2, k), "bn2": _bn_init(cout, 1e-5),
            "conv3": _conv_init(k3, cout, cin, k)}


def _res_up_init(key, cin, cout, k=3):
    k1, k2, k3 = jax.random.split(key, 3)
    return {"conv1": _conv_init(k1, cin // 2, cin, k), "bn1": _bn_init(cin // 2, 1e-4),
            "conv2": _conv_init(k2, cout, cin // 2, k), "bn2": _bn_init(cout, 1e-4),
            "conv3": _conv_init(k3, cout, cin, k)}


def init_vae_params(key, in_channels=1, latent_dim=8, ch=4):
    ks = jax.random.split(key, 16)
    enc = {
        "conv_in": _conv_init(ks[0], ch, in_channels, 7),
        "rd1": _res_down_init(ks[1], ch, ch * 2),
        "rd2": _res_down_init(ks[2], ch * 2, ch * 4),
        "rd3": _res_down_init(ks[3], ch * 4, ch * 8),
        "rd4": _res_down_init(ks[4], ch * 8, ch * 16),
        "conv_mu": _conv_init(ks[5], latent_dim, ch * 16, 4),
        "conv_logvar": _conv_init(ks[6], latent_dim, ch * 16, 4),
    }
    dec = {
        "conv_t_up": _convT_init(ks[7], latent_dim, ch * 16, 4),
        "ru1": _res_up_init(ks[8], ch * 16, ch * 8),
        "ru2": _res_up_init(ks[9], ch * 8, ch * 4),
        "ru3": _res_up_init(ks[10], ch * 4, ch * 2),
        "ru4": _res_up_init(ks[11], ch * 2, ch),
        "conv_out": _conv_init(ks[12], in_channels, ch, 3),
    }
    return {"enc": enc, "dec": dec}


# ---------------------------------------------------------------------------
if __name__ == "__main__":
    B, L, LATENT = 2, 128, 8
    key = jax.random.PRNGKey(0)
    kparam, kx = jax.random.split(key)

    params = init_vae_params(kparam, in_channels=1, latent_dim=LATENT, ch=4)
    x = jax.random.normal(kx, (B, L), jnp.float32)

    prepared = prepare_inference_params(params)      # BN fold + weight repack (once)
    recon, mu, logvar = vae_forward(prepared, x)
    jax.block_until_ready((recon, mu, logvar))

    assert recon.shape == (B, 1, L), recon.shape
    assert mu.shape == (B, LATENT, L // 16 - 3), mu.shape
    assert logvar.shape == mu.shape, logvar.shape
    assert bool(jnp.all(jnp.isfinite(recon)))
    assert bool(jnp.all(jnp.isfinite(mu))) and bool(jnp.all(jnp.isfinite(logvar)))
    print("KERNEL_OK")
</pallas_src>

<mosaic_0001>
module attributes {stable_mosaic.version = 11 : i64} {
  func.func @_vae_kernel(%arg0: i32, %arg1: memref<1x1x128xf32, #tpu.memory_space<vmem>>, %arg2: memref<592x256xbf16, #tpu.memory_space<vmem>>, %arg3: memref<592x1xf32, #tpu.memory_space<vmem>>, %arg4: memref<128x64xf32, #tpu.memory_space<vmem>>, %arg5: memref<120x128xf32, #tpu.memory_space<vmem>>, %arg6: memref<1x1x128xf32, #tpu.memory_space<vmem>>, %arg7: memref<1x8x5xf32, #tpu.memory_space<vmem>>, %arg8: memref<1x8x5xf32, #tpu.memory_space<vmem>>) attributes {dimension_semantics = [#tpu.dimension_semantics<parallel>], iteration_bounds = array<i64: 2>, scalar_prefetch = 0 : i64, scratch_operands = 0 : i64, tpu.core_type = #tpu.core_type<tc>, window_params = [{transform_indices = @transform_0, window_bounds = array<i64: 1, 1, 128>}, {pipeline_mode = #tpu.pipeline_mode<synchronous>, transform_indices = @transform_1, window_bounds = array<i64: 592, 256>}, {pipeline_mode = #tpu.pipeline_mode<synchronous>, transform_indices = @transform_2, window_bounds = array<i64: 592, 1>}, {pipeline_mode = #tpu.pipeline_mode<synchronous>, transform_indices = @transform_3, window_bounds = array<i64: 128, 64>}, {pipeline_mode = #tpu.pipeline_mode<synchronous>, transform_indices = @transform_4, window_bounds = array<i64: 120, 128>}, {transform_indices = @transform_5, window_bounds = array<i64: 1, 1, 128>}, {transform_indices = @transform_6, window_bounds = array<i64: 1, 8, 5>}, {transform_indices = @transform_7, window_bounds = array<i64: 1, 8, 5>}]} {
    %c0 = arith.constant 0 : index
    %c0_0 = arith.constant 0 : index
    %c0_1 = arith.constant 0 : index
    %0 = vector.load %arg1[%c0, %c0_0, %c0_1] : memref<1x1x128xf32, #tpu.memory_space<vmem>>, vector<1x1x128xf32>
    %1 = vector.shape_cast %0 : vector<1x1x128xf32> to vector<1x128xf32>
    %cst = arith.constant 0.000000e+00 : f32
    %2 = vector.broadcast %cst : f32 to vector<1x3xf32>
    %3 = tpu.concatenate %2, %1, %2 in 1 : vector<1x3xf32>, vector<1x128xf32>, vector<1x3xf32> -> vector<1x134xf32>
    %4 = vector.extract_strided_slice %3 {offsets = [0, 0], sizes = [1, 128], strides = [1, 1]} : vector<1x134xf32> to vector<1x128xf32>
    %5 = vector.extract_strided_slice %3 {offsets = [0, 1], sizes = [1, 128], strides = [1, 1]} : vector<1x134xf32> to vector<1x128xf32>
    %6 = vector.extract_strided_slice %3 {offsets = [0, 2], sizes = [1, 128], strides = [1, 1]} : vector<1x134xf32> to vector<1x128xf32>
    %7 = vector.extract_strided_slice %3 {offsets = [0, 3], sizes = [1, 128], strides = [1, 1]} : vector<1x134xf32> to vector<1x128xf32>
    %8 = vector.extract_strided_slice %3 {offsets = [0, 4], sizes = [1, 128], strides = [1, 1]} : vector<1x134xf32> to vector<1x128xf32>
    %9 = vector.extract_strided_slice %3 {offsets = [0, 5], sizes = [1, 128], strides = [1, 1]} : vector<1x134xf32> to vector<1x128xf32>
    %10 = vector.extract_strided_slice %3 {offsets = [0, 6], sizes = [1, 128], strides = [1, 1]} : vector<1x134xf32> to vector<1x128xf32>
    %11 = tpu.concatenate %4, %5, %6, %7, %8, %9, %10 in 0 : vector<1x128xf32>, vector<1x128xf32>, vector<1x128xf32>, vector<1x128xf32>, vector<1x128xf32>, vector<1x128xf32>, vector<1x128xf32> -> vector<7x128xf32>
    %c0_2 = arith.constant 0 : index
    %c0_3 = arith.constant 0 : index
    %12 = vector.load %arg2[%c0_2, %c0_3] : memref<592x256xbf16, #tpu.memory_space<vmem>>, vector<4x7xbf16>
    %c0_4 = arith.constant 0 : index
    %c0_5 = arith.constant 0 : index
    %13 = vector.load %arg3[%c0_4, %c0_5] : memref<592x1xf32, #tpu.memory_space<vmem>>, vector<4x1xf32>
    %14 = arith.truncf %11 : vector<7x128xf32> to vector<7x128xbf16>
    %cst_6 = arith.constant dense<0.000000e+00> : vector<4x128xf32>
    %15 = tpu.matmul %12, %14, %cst_6 {dimension_numbers = #tpu.dot_dimension_numbers<[1], [0], [0], [1], [0, 0, 1, 1], [], []>} : vector<4x7xbf16>, vector<7x128xbf16>, vector<4x128xf32> -> vector<4x128xf32>
    %16 = vector.broadcast %13 : vector<4x1xf32> to vector<4x128xf32>
    %17 = arith.addf %15, %16 : vector<4x128xf32>
    %18 = arith.negf %17 : vector<4x128xf32>
    %19 = math.exp %18 : vector<4x128xf32>
    %cst_7 = arith.constant 1.000000e+00 : f32
    %20 = vector.broadcast %cst_7 : f32 to vector<4x128xf32>
    %21 = arith.addf %20, %19 : vector<4x128xf32>
    %22 = arith.divf %20, %21 : vector<4x128xf32>
    %23 = arith.mulf %17, %22 : vector<4x128xf32>
    %cst_8 = arith.constant 0.000000e+00 : f32
    %24 = vector.broadcast %cst_8 : f32 to vector<4x1xf32>
    %25 = tpu.concatenate %24, %23, %24 in 1 : vector<4x1xf32>, vector<4x128xf32>, vector<4x1xf32> -> vector<4x130xf32>
    %26 = vector.extract_strided_slice %25 {offsets = [0, 0], sizes = [4, 128], strides = [1, 1]} : vector<4x130xf32> to vector<4x128xf32>
    %27 = vector.extract_strided_slice %25 {offsets = [0, 1], sizes = [4, 128], strides = [1, 1]} : vector<4x130xf32> to vector<4x128xf32>
    %28 = vector.extract_strided_slice %25 {offsets = [0, 2], sizes = [4, 128], strides = [1, 1]} : vector<4x130xf32> to vector<4x128xf32>
    %29 = tpu.concatenate %26, %27, %28 in 0 : vector<4x128xf32>, vector<4x128xf32>, vector<4x128xf32> -> vector<12x128xf32>
    %c0_9 = arith.constant 0 : index
    %c0_10 = arith.constant 0 : index
    %30 = vector.load %arg4[%c0_9, %c0_10] : memref<128x64xf32, #tpu.memory_space<vmem>>, vector<128x64xf32>
    %cst_11 = arith.constant dense<0.000000e+00> : vector<12x64xf32>
    %31 = tpu.matmul %29, %30, %cst_11 {dimension_numbers = #tpu.dot_dimension_numbers<[1], [0], [0], [1], [0, 0, 1, 1], [], []>} : vector<12x128xf32>, vector<128x64xf32>, vector<12x64xf32> -> vector<12x64xf32>
    %c24 = arith.constant 24 : index
    %c0_12 = arith.constant 0 : index
    %32 = vector.load %arg2[%c24, %c0_12] : memref<592x256xbf16, #tpu.memory_space<vmem>>, vector<8x12xbf16>
    %c24_13 = arith.constant 24 : index
    %c0_14 = arith.constant 0 : index
    %33 = vector.load %arg3[%c24_13, %c0_14] : memref<592x1xf32, #tpu.memory_space<vmem>>, vector<8x1xf32>
    %34 = arith.truncf %31 : vector<12x64xf32> to vector<12x64xbf16>
    %cst_15 = arith.constant dense<0.000000e+00> : vector<8x64xf32>
    %35 = tpu.matmul %32, %34, %cst_15 {dimension_numbers = #tpu.dot_dimension_numbers<[1], [0], [0], [1], [0, 0, 1, 1], [], []>} : vector<8x12xbf16>, vector<12x64xbf16>, vector<8x64xf32> -> vector<8x64xf32>
    %36 = vector.broadcast %33 : vector<8x1xf32> to vector<8x64xf32>
    %37 = arith.addf %35, %36 : vector<8x64xf32>
    %c8 = arith.constant 8 : index
    %c0_16 = arith.constant 0 : index
    %38 = vector.load %arg2[%c8, %c0_16] : memref<592x256xbf16, #tpu.memory_space<vmem>>, vector<4x12xbf16>
    %c8_17 = arith.constant 8 : index
    %c0_18 = arith.constant 0 : index
    %39 = vector.load %arg3[%c8_17, %c0_18] : memref<592x1xf32, #tpu.memory_space<vmem>>, vector<4x1xf32>
    %40 = arith.truncf %31 : vector<12x64xf32> to vector<12x64xbf16>
    %cst_19 = arith.constant dense<0.000000e+00> : vector<4x64xf32>
    %41 = tpu.matmul %38, %40, %cst_19 {dimension_numbers = #tpu.dot_dimension_numbers<[1], [0], [0], [1], [0, 0, 1, 1], [], []>} : vector<4x12xbf16>, vector<12x64xbf16>, vector<4x64xf32> -> vector<4x64xf32>
    %42 = vector.broadcast %39 : vector<4x1xf32> to vector<4x64xf32>
    %43 = arith.addf %41, %42 : vector<4x64xf32>
    %44 = arith.negf %43 : vector<4x64xf32>
    %45 = math.exp %44 : vector<4x64xf32>
    %cst_20 = arith.constant 1.000000e+00 : f32
    %46 = vector.broadcast %cst_20 : f32 to vector<4x64xf32>
    %47 = arith.addf %46, %45 : vector<4x64xf32>
    %48 = arith.divf %46, %47 : vector<4x64xf32>
    %49 = arith.mulf %43, %48 : vector<4x64xf32>
    %cst_21 = arith.constant 0.000000e+00 : f32
    %50 = vector.broadcast %cst_21 : f32 to vector<4x1xf32>
    %51 = tpu.concatenate %50, %49, %50 in 1 : vector<4x1xf32>, vector<4x64xf32>, vector<4x1xf32> -> vector<4x66xf32>
    %52 = vector.extract_strided_slice %51 {offsets = [0, 0], sizes = [4, 64], strides = [1, 1]} : vector<4x66xf32> to vector<4x64xf32>
    %53 = vector.extract_strided_slice %51 {offsets = [0, 1], sizes = [4, 64], strides = [1, 1]} : vector<4x66xf32> to vector<4x64xf32>
    %54 = vector.extract_strided_slice %51 {offsets = [0, 2], sizes = [4, 64], strides = [1, 1]} : vector<4x66xf32> to vector<4x64xf32>
    %55 = tpu.concatenate %52, %53, %54 in 0 : vector<4x64xf32>, vector<4x64xf32>, vector<4x64xf32> -> vector<12x64xf32>
    %c16 = arith.constant 16 : index
    %c0_22 = arith.constant 0 : index
    %56 = vector.load %arg2[%c16, %c0_22] : memref<592x256xbf16, #tpu.memory_space<vmem>>, vector<8x12xbf16>
    %c16_23 = arith.constant 16 : index
    %c0_24 = arith.constant 0 : index
    %57 = vector.load %arg3[%c16_23, %c0_24] : memref<592x1xf32, #tpu.memory_space<vmem>>, vector<8x1xf32>
    %58 = arith.truncf %55 : vector<12x64xf32> to vector<12x64xbf16>
    %cst_25 = arith.constant dense<0.000000e+00> : vector<8x64xf32>
    %59 = tpu.matmul %56, %58, %cst_25 {dimension_numbers = #tpu.dot_dimension_numbers<[1], [0], [0], [1], [0, 0, 1, 1], [], []>} : vector<8x12xbf16>, vector<12x64xbf16>, vector<8x64xf32> -> vector<8x64xf32>
    %60 = vector.broadcast %57 : vector<8x1xf32> to vector<8x64xf32>
    %61 = arith.addf %59, %60 : vector<8x64xf32>
    %62 = arith.addf %61, %37 : vector<8x64xf32>
    %63 = arith.negf %62 : vector<8x64xf32>
    %64 = math.exp %63 : vector<8x64xf32>
    %cst_26 = arith.constant 1.000000e+00 : f32
    %65 = vector.broadcast %cst_26 : f32 to vector<8x64xf32>
    %66 = arith.addf %65, %64 : vector<8x64xf32>
    %67 = arith.divf %65, %66 : vector<8x64xf32>
    %68 = arith.mulf %62, %67 : vector<8x64xf32>
    %cst_27 = arith.constant 0.000000e+00 : f32
    %69 = vector.broadcast %cst_27 : f32 to vector<8x1xf32>
    %70 = tpu.concatenate %69, %68, %69 in 1 : vector<8x1xf32>, vector<8x64xf32>, vector<8x1xf32> -> vector<8x66xf32>
    %71 = vector.extract_strided_slice %70 {offsets = [0, 0], sizes = [8, 64], strides = [1, 1]} : vector<8x66xf32> to vector<8x64xf32>
    %72 = vector.extract_strided_slice %70 {offsets = [0, 1], sizes = [8, 64], strides = [1, 1]} : vector<8x66xf32> to vector<8x64xf32>
    %73 = vector.extract_strided_slice %70 {offsets = [0, 2], sizes = [8, 64], strides = [1, 1]} : vector<8x66xf32> to vector<8x64xf32>
    %74 = tpu.concatenate %71, %72, %73 in 0 : vector<8x64xf32>, vector<8x64xf32>, vector<8x64xf32> -> vector<24x64xf32>
    %c0_28 = arith.constant 0 : index
    %c0_29 = arith.constant 0 : index
    %75 = vector.load %arg4[%c0_28, %c0_29] : memref<128x64xf32, #tpu.memory_space<vmem>>, vector<64x32xf32>
    %cst_30 = arith.constant dense<0.000000e+00> : vector<24x32xf32>
    %76 = tpu.matmul %74, %75, %cst_30 {dimension_numbers = #tpu.dot_dimension_numbers<[1], [0], [0], [1], [0, 0, 1, 1], [], []>} : vector<24x64xf32>, vector<64x32xf32>, vector<24x32xf32> -> vector<24x32xf32>
    %c56 = arith.constant 56 : index
    %c0_31 = arith.constant 0 : index
    %77 = vector.load %arg2[%c56, %c0_31] : memref<592x256xbf16, #tpu.memory_space<vmem>>, vector<16x24xbf16>
    %c56_32 = arith.constant 56 : index
    %c0_33 = arith.constant 0 : index
    %78 = vector.load %arg3[%c56_32, %c0_33] : memref<592x1xf32, #tpu.memory_space<vmem>>, vector<16x1xf32>
    %79 = arith.truncf %76 : vector<24x32xf32> to vector<24x32xbf16>
    %cst_34 = arith.constant dense<0.000000e+00> : vector<16x32xf32>
    %80 = tpu.matmul %77, %79, %cst_34 {dimension_numbers = #tpu.dot_dimension_numbers<[1], [0], [0], [1], [0, 0, 1, 1], [], []>} : vector<16x24xbf16>, vector<24x32xbf16>, vector<16x32xf32> -> vector<16x32xf32>
    %81 = vector.broadcast %78 : vector<16x1xf32> to vector<16x32xf32>
    %82 = arith.addf %80, %81 : vector<16x32xf32>
    %c32 = arith.constant 32 : index
    %c0_35 = arith.constant 0 : index
    %83 = vector.load %arg2[%c32, %c0_35] : memref<592x256xbf16, #tpu.memory_space<vmem>>, vector<8x24xbf16>
    %c32_36 = arith.constant 32 : index
    %c0_37 = arith.constant 0 : index
    %84 = vector.load %arg3[%c32_36, %c0_37] : memref<592x1xf32, #tpu.memory_space<vmem>>, vector<8x1xf32>
    %85 = arith.truncf %76 : vector<24x32xf32> to vector<24x32xbf16>
    %cst_38 = arith.constant dense<0.000000e+00> : vector<8x32xf32>
    %86 = tpu.matmul %83, %85, %cst_38 {dimension_numbers = #tpu.dot_dimension_numbers<[1], [0], [0], [1], [0, 0, 1, 1], [], []>} : vector<8x24xbf16>, vector<24x32xbf16>, vector<8x32xf32> -> vector<8x32xf32>
    %87 = vector.broadcast %84 : vector<8x1xf32> to vector<8x32xf32>
    %88 = arith.addf %86, %87 : vector<8x32xf32>
    %89 = arith.negf %88 : vector<8x32xf32>
    %90 = math.exp %89 : vector<8x32xf32>
    %cst_39 = arith.constant 1.000000e+00 : f32
    %91 = vector.broadcast %cst_39 : f32 to vector<8x32xf32>
    %92 = arith.addf %91, %90 : vector<8x32xf32>
    %93 = arith.divf %91, %92 : vector<8x32xf32>
    %94 = arith.mulf %88, %93 : vector<8x32xf32>
    %cst_40 = arith.constant 0.000000e+00 : f32
    %95 = vector.broadcast %cst_40 : f32 to vector<8x1xf32>
    %96 = tpu.concatenate %95, %94, %95 in 1 : vector<8x1xf32>, vector<8x32xf32>, vector<8x1xf32> -> vector<8x34xf32>
    %97 = vector.extract_strided_slice %96 {offsets = [0, 0], sizes = [8, 32], strides = [1, 1]} : vector<8x34xf32> to vector<8x32xf32>
    %98 = vector.extract_strided_slice %96 {offsets = [0, 1], sizes = [8, 32], strides = [1, 1]} : vector<8x34xf32> to vector<8x32xf32>
    %99 = vector.extract_strided_slice %96 {offsets = [0, 2], sizes = [8, 32], strides = [1, 1]} : vector<8x34xf32> to vector<8x32xf32>
    %100 = tpu.concatenate %97, %98, %99 in 0 : vector<8x32xf32>, vector<8x32xf32>, vector<8x32xf32> -> vector<24x32xf32>
    %c40 = arith.constant 40 : index
    %c0_41 = arith.constant 0 : index
    %101 = vector.load %arg2[%c40, %c0_41] : memref<592x256xbf16, #tpu.memory_space<vmem>>, vector<16x24xbf16>
    %c40_42 = arith.constant 40 : index
    %c0_43 = arith.constant 0 : index
    %102 = vector.load %arg3[%c40_42, %c0_43] : memref<592x1xf32, #tpu.memory_space<vmem>>, vector<16x1xf32>
    %103 = arith.truncf %100 : vector<24x32xf32> to vector<24x32xbf16>
    %cst_44 = arith.constant dense<0.000000e+00> : vector<16x32xf32>
    %104 = tpu.matmul %101, %103, %cst_44 {dimension_numbers = #tpu.dot_dimension_numbers<[1], [0], [0], [1], [0, 0, 1, 1], [], []>} : vector<16x24xbf16>, vector<24x32xbf16>, vector<16x32xf32> -> vector<16x32xf32>
    %105 = vector.broadcast %102 : vector<16x1xf32> to vector<16x32xf32>
    %106 = arith.addf %104, %105 : vector<16x32xf32>
    %107 = arith.addf %106, %82 : vector<16x32xf32>
    %108 = arith.negf %107 : vector<16x32xf32>
    %109 = math.exp %108 : vector<16x32xf32>
    %cst_45 = arith.constant 1.000000e+00 : f32
    %110 = vector.broadcast %cst_45 : f32 to vector<16x32xf32>
    %111 = arith.addf %110, %109 : vector<16x32xf32>
    %112 = arith.divf %110, %111 : vector<16x32xf32>
    %113 = arith.mulf %107, %112 : vector<16x32xf32>
    %cst_46 = arith.constant 0.000000e+00 : f32
    %114 = vector.broadcast %cst_46 : f32 to vector<16x1xf32>
    %115 = tpu.concatenate %114, %113, %114 in 1 : vector<16x1xf32>, vector<16x32xf32>, vector<16x1xf32> -> vector<16x34xf32>
    %116 = vector.extract_strided_slice %115 {offsets = [0, 0], sizes = [16, 32], strides = [1, 1]} : vector<16x34xf32> to vector<16x32xf32>
    %117 = vector.extract_strided_slice %115 {offsets = [0, 1], sizes = [16, 32], strides = [1, 1]} : vector<16x34xf32> to vector<16x32xf32>
    %118 = vector.extract_strided_slice %115 {offsets = [0, 2], sizes = [16, 32], strides = [1, 1]} : vector<16x34xf32> to vector<16x32xf32>
    %119 = tpu.concatenate %116, %117, %118 in 0 : vector<16x32xf32>, vector<16x32xf32>, vector<16x32xf32> -> vector<48x32xf32>
    %c0_47 = arith.constant 0 : index
    %c0_48 = arith.constant 0 : index
    %120 = vector.load %arg4[%c0_47, %c0_48] : memref<128x64xf32, #tpu.memory_space<vmem>>, vector<32x16xf32>
    %cst_49 = arith.constant dense<0.000000e+00> : vector<48x16xf32>
    %121 = tpu.matmul %119, %120, %cst_49 {dimension_numbers = #tpu.dot_dimension_numbers<[1], [0], [0], [1], [0, 0, 1, 1], [], []>} : vector<48x32xf32>, vector<32x16xf32>, vector<48x16xf32> -> vector<48x16xf32>
    %c120 = arith.constant 120 : index
    %c0_50 = arith.constant 0 : index
    %122 = vector.load %arg2[%c120, %c0_50] : memref<592x256xbf16, #tpu.memory_space<vmem>>, vector<32x48xbf16>
    %c120_51 = arith.constant 120 : index
    %c0_52 = arith.constant 0 : index
    %123 = vector.load %arg3[%c120_51, %c0_52] : memref<592x1xf32, #tpu.memory_space<vmem>>, vector<32x1xf32>
    %124 = arith.truncf %121 : vector<48x16xf32> to vector<48x16xbf16>
    %cst_53 = arith.constant dense<0.000000e+00> : vector<32x16xf32>
    %125 = tpu.matmul %122, %124, %cst_53 {dimension_numbers = #tpu.dot_dimension_numbers<[1], [0], [0], [1], [0, 0, 1, 1], [], []>} : vector<32x48xbf16>, vector<48x16xbf16>, vector<32x16xf32> -> vector<32x16xf32>
    %126 = vector.broadcast %123 : vector<32x1xf32> to vector<32x16xf32>
    %127 = arith.addf %125, %126 : vector<32x16xf32>
    %c72 = arith.constant 72 : index
    %c0_54 = arith.constant 0 : index
    %128 = vector.load %arg2[%c72, %c0_54] : memref<592x256xbf16, #tpu.memory_space<vmem>>, vector<16x48xbf16>
    %c72_55 = arith.constant 72 : index
    %c0_56 = arith.constant 0 : index
    %129 = vector.load %arg3[%c72_55, %c0_56] : memref<592x1xf32, #tpu.memory_space<vmem>>, vector<16x1xf32>
    %130 = arith.truncf %121 : vector<48x16xf32> to vector<48x16xbf16>
    %cst_57 = arith.constant dense<0.000000e+00> : vector<16x16xf32>
    %131 = tpu.matmul %128, %130, %cst_57 {dimension_numbers = #tpu.dot_dimension_numbers<[1], [0], [0], [1], [0, 0, 1, 1], [], []>} : vector<16x48xbf16>, vector<48x16xbf16>, vector<16x16xf32> -> vector<16x16xf32>
    %132 = vector.broadcast %129 : vector<16x1xf32> to vector<16x16xf32>
    %133 = arith.addf %131, %132 : vector<16x16xf32>
    %134 = arith.negf %133 : vector<16x16xf32>
    %135 = math.exp %134 : vector<16x16xf32>
    %cst_58 = arith.constant 1.000000e+00 : f32
    %136 = vector.broadcast %cst_58 : f32 to vector<16x16xf32>
    %137 = arith.addf %136, %135 : vector<16x16xf32>
    %138 = arith.divf %136, %137 : vector<16x16xf32>
    %139 = arith.mulf %133, %138 : vector<16x16xf32>
    %cst_59 = arith.constant 0.000000e+00 : f32
    %140 = vector.broadcast %cst_59 : f32 to vector<16x1xf32>
    %141 = tpu.concatenate %140, %139, %140 in 1 : vector<16x1xf32>, vector<16x16xf32>, vector<16x1xf32> -> vector<16x18xf32>
    %142 = vector.extract_strided_slice %141 {offsets = [0, 0], sizes = [16, 16], strides = [1, 1]} : vector<16x18xf32> to vector<16x16xf32>
    %143 = vector.extract_strided_slice %141 {offsets = [0, 1], sizes = [16, 16], strides = [1, 1]} : vector<16x18xf32> to vector<16x16xf32>
    %144 = vector.extract_strided_slice %141 {offsets = [0, 2], sizes = [16, 16], strides = [1, 1]} : vector<16x18xf32> to vector<16x16xf32>
    %145 = tpu.concatenate %142, %143, %144 in 0 : vector<16x16xf32>, vector<16x16xf32>, vector<16x16xf32> -> vector<48x16xf32>
    %c88 = arith.constant 88 : index
    %c0_60 = arith.constant 0 : index
    %146 = vector.load %arg2[%c88, %c0_60] : memref<592x256xbf16, #tpu.memory_space<vmem>>, vector<32x48xbf16>
    %c88_61 = arith.constant 88 : index
    %c0_62 = arith.constant 0 : index
    %147 = vector.load %arg3[%c88_61, %c0_62] : memref<592x1xf32, #tpu.memory_space<vmem>>, vector<32x1xf32>
    %148 = arith.truncf %145 : vector<48x16xf32> to vector<48x16xbf16>
    %cst_63 = arith.constant dense<0.000000e+00> : vector<32x16xf32>
    %149 = tpu.matmul %146, %148, %cst_63 {dimension_numbers = #tpu.dot_dimension_numbers<[1], [0], [0], [1], [0, 0, 1, 1], [], []>} : vector<32x48xbf16>, vector<48x16xbf16>, vector<32x16xf32> -> vector<32x16xf32>
    %150 = vector.broadcast %147 : vector<32x1xf32> to vector<32x16xf32>
    %151 = arith.addf %149, %150 : vector<32x16xf32>
    %152 = arith.addf %151, %127 : vector<32x16xf32>
    %153 = arith.negf %152 : vector<32x16xf32>
    %154 = math.exp %153 : vector<32x16xf32>
    %cst_64 = arith.constant 1.000000e+00 : f32
    %155 = vector.broadcast %cst_64 : f32 to vector<32x16xf32>
    %156 = arith.addf %155, %154 : vector<32x16xf32>
    %157 = arith.divf %155, %156 : vector<32x16xf32>
    %158 = arith.mulf %152, %157 : vector<32x16xf32>
    %cst_65 = arith.constant 0.000000e+00 : f32
    %159 = vector.broadcast %cst_65 : f32 to vector<32x1xf32>
    %160 = tpu.concatenate %159, %158, %159 in 1 : vector<32x1xf32>, vector<32x16xf32>, vector<32x1xf32> -> vector<32x18xf32>
    %161 = vector.extract_strided_slice %160 {offsets = [0, 0], sizes = [32, 16], strides = [1, 1]} : vector<32x18xf32> to vector<32x16xf32>
    %162 = vector.extract_strided_slice %160 {offsets = [0, 1], sizes = [32, 16], strides = [1, 1]} : vector<32x18xf32> to vector<32x16xf32>
    %163 = vector.extract_strided_slice %160 {offsets = [0, 2], sizes = [32, 16], strides = [1, 1]} : vector<32x18xf32> to vector<32x16xf32>
    %164 = tpu.concatenate %161, %162, %163 in 0 : vector<32x16xf32>, vector<32x16xf32>, vector<32x16xf32> -> vector<96x16xf32>
    %c0_66 = arith.constant 0 : index
    %c0_67 = arith.constant 0 : index
    %165 = vector.load %arg4[%c0_66, %c0_67] : memref<128x64xf32, #tpu.memory_space<vmem>>, vector<16x8xf32>
    %cst_68 = arith.constant dense<0.000000e+00> : vector<96x8xf32>
    %166 = tpu.matmul %164, %165, %cst_68 {dimension_numbers = #tpu.dot_dimension_numbers<[1], [0], [0], [1], [0, 0, 1, 1], [], []>} : vector<96x16xf32>, vector<16x8xf32>, vector<96x8xf32> -> vector<96x8xf32>
    %c248 = arith.constant 248 : index
    %c0_69 = arith.constant 0 : index
    %167 = vector.load %arg2[%c248, %c0_69] : memref<592x256xbf16, #tpu.memory_space<vmem>>, vector<64x96xbf16>
    %c248_70 = arith.constant 248 : index
    %c0_71 = arith.constant 0 : index
    %168 = vector.load %arg3[%c248_70, %c0_71] : memref<592x1xf32, #tpu.memory_space<vmem>>, vector<64x1xf32>
    %169 = arith.truncf %166 : vector<96x8xf32> to vector<96x8xbf16>
    %cst_72 = arith.constant dense<0.000000e+00> : vector<64x8xf32>
    %170 = tpu.matmul %167, %169, %cst_72 {dimension_numbers = #tpu.dot_dimension_numbers<[1], [0], [0], [1], [0, 0, 1, 1], [], []>} : vector<64x96xbf16>, vector<96x8xbf16>, vector<64x8xf32> -> vector<64x8xf32>
    %171 = vector.broadcast %168 : vector<64x1xf32> to vector<64x8xf32>
    %172 = arith.addf %170, %171 : vector<64x8xf32>
    %c152 = arith.constant 152 : index
    %c0_73 = arith.constant 0 : index
    %173 = vector.load %arg2[%c152, %c0_73] : memref<592x256xbf16, #tpu.memory_space<vmem>>, vector<32x96xbf16>
    %c152_74 = arith.constant 152 : index
    %c0_75 = arith.constant 0 : index
    %174 = vector.load %arg3[%c152_74, %c0_75] : memref<592x1xf32, #tpu.memory_space<vmem>>, vector<32x1xf32>
    %175 = arith.truncf %166 : vector<96x8xf32> to vector<96x8xbf16>
    %cst_76 = arith.constant dense<0.000000e+00> : vector<32x8xf32>
    %176 = tpu.matmul %173, %175, %cst_76 {dimension_numbers = #tpu.dot_dimension_numbers<[1], [0], [0], [1], [0, 0, 1, 1], [], []>} : vector<32x96xbf16>, vector<96x8xbf16>, vector<32x8xf32> -> vector<32x8xf32>
    %177 = vector.broadcast %174 : vector<32x1xf32> to vector<32x8xf32>
    %178 = arith.addf %176, %177 : vector<32x8xf32>
    %179 = arith.negf %178 : vector<32x8xf32>
    %180 = math.exp %179 : vector<32x8xf32>
    %cst_77 = arith.constant 1.000000e+00 : f32
    %181 = vector.broadcast %cst_77 : f32 to vector<32x8xf32>
    %182 = arith.addf %181, %180 : vector<32x8xf32>
    %183 = arith.divf %181, %182 : vector<32x8xf32>
    %184 = arith.mulf %178, %183 : vector<32x8xf32>
    %cst_78 = arith.constant 0.000000e+00 : f32
    %185 = vector.broadcast %cst_78 : f32 to vector<32x1xf32>
    %186 = tpu.concatenate %185, %184, %185 in 1 : vector<32x1xf32>, vector<32x8xf32>, vector<32x1xf32> -> vector<32x10xf32>
    %187 = vector.extract_strided_slice %186 {offsets = [0, 0], sizes = [32, 8], strides = [1, 1]} : vector<32x10xf32> to vector<32x8xf32>
    %188 = vector.extract_strided_slice %186 {offsets = [0, 1], sizes = [32, 8], strides = [1, 1]} : vector<32x10xf32> to vector<32x8xf32>
    %189 = vector.extract_strided_slice %186 {offsets = [0, 2], sizes = [32, 8], strides = [1, 1]} : vector<32x10xf32> to vector<32x8xf32>
    %190 = tpu.concatenate %187, %188, %189 in 0 : vector<32x8xf32>, vector<32x8xf32>, vector<32x8xf32> -> vector<96x8xf32>
    %c184 = arith.constant 184 : index
    %c0_79 = arith.constant 0 : index
    %191 = vector.load %arg2[%c184, %c0_79] : memref<592x256xbf16, #tpu.memory_space<vmem>>, vector<64x96xbf16>
    %c184_80 = arith.constant 184 : index
    %c0_81 = arith.constant 0 : index
    %192 = vector.load %arg3[%c184_80, %c0_81] : memref<592x1xf32, #tpu.memory_space<vmem>>, vector<64x1xf32>
    %193 = arith.truncf %190 : vector<96x8xf32> to vector<96x8xbf16>
    %cst_82 = arith.constant dense<0.000000e+00> : vector<64x8xf32>
    %194 = tpu.matmul %191, %193, %cst_82 {dimension_numbers = #tpu.dot_dimension_numbers<[1], [0], [0], [1], [0, 0, 1, 1], [], []>} : vector<64x96xbf16>, vector<96x8xbf16>, vector<64x8xf32> -> vector<64x8xf32>
    %195 = vector.broadcast %192 : vector<64x1xf32> to vector<64x8xf32>
    %196 = arith.addf %194, %195 : vector<64x8xf32>
    %197 = arith.addf %196, %172 : vector<64x8xf32>
    %198 = arith.negf %197 : vector<64x8xf32>
    %199 = math.exp %198 : vector<64x8xf32>
    %cst_83 = arith.constant 1.000000e+00 : f32
    %200 = vector.broadcast %cst_83 : f32 to vector<64x8xf32>
    %201 = arith.addf %200, %199 : vector<64x8xf32>
    %202 = arith.divf %200, %201 : vector<64x8xf32>
    %203 = arith.mulf %197, %202 : vector<64x8xf32>
    %204 = vector.extract_strided_slice %203 {offsets = [0, 0], sizes = [64, 5], strides = [1, 1]} : vector<64x8xf32> to vector<64x5xf32>
    %205 = vector.extract_strided_slice %203 {offsets = [0, 1], sizes = [64, 5], strides = [1, 1]} : vector<64x8xf32> to vector<64x5xf32>
    %206 = vector.extract_strided_slice %203 {offsets = [0, 2], sizes = [64, 5], strides = [1, 1]} : vector<64x8xf32> to vector<64x5xf32>
    %207 = vector.extract_strided_slice %203 {offsets = [0, 3], sizes = [64, 5], strides = [1, 1]} : vector<64x8xf32> to vector<64x5xf32>
    %208 = tpu.concatenate %204, %205, %206, %207 in 0 : vector<64x5xf32>, vector<64x5xf32>, vector<64x5xf32>, vector<64x5xf32> -> vector<256x5xf32>
    %c312 = arith.constant 312 : index
    %c0_84 = arith.constant 0 : index
    %209 = vector.load %arg2[%c312, %c0_84] : memref<592x256xbf16, #tpu.memory_space<vmem>>, vector<16x256xbf16>
    %c312_85 = arith.constant 312 : index
    %c0_86 = arith.constant 0 : index
    %210 = vector.load %arg3[%c312_85, %c0_86] : memref<592x1xf32, #tpu.memory_space<vmem>>, vector<16x1xf32>
    %211 = arith.truncf %208 : vector<256x5xf32> to vector<256x5xbf16>
    %cst_87 = arith.constant dense<0.000000e+00> : vector<16x5xf32>
    %212 = tpu.matmul %209, %211, %cst_87 {dimension_numbers = #tpu.dot_dimension_numbers<[1], [0], [0], [1], [0, 0, 1, 1], [], []>} : vector<16x256xbf16>, vector<256x5xbf16>, vector<16x5xf32> -> vector<16x5xf32>
    %213 = vector.broadcast %210 : vector<16x1xf32> to vector<16x5xf32>
    %214 = arith.addf %212, %213 : vector<16x5xf32>
    %215 = vector.extract_strided_slice %214 {offsets = [0, 0], sizes = [8, 5], strides = [1, 1]} : vector<16x5xf32> to vector<8x5xf32>
    %216 = vector.extract_strided_slice %214 {offsets = [8, 0], sizes = [8, 5], strides = [1, 1]} : vector<16x5xf32> to vector<8x5xf32>
    %cst_88 = arith.constant 0.000000e+00 : f32
    %217 = vector.broadcast %cst_88 : f32 to vector<8x3xf32>
    %218 = tpu.concatenate %217, %215, %217 in 1 : vector<8x3xf32>, vector<8x5xf32>, vector<8x3xf32> -> vector<8x11xf32>
    %219 = vector.extract_strided_slice %218 {offsets = [0, 0], sizes = [8, 8], strides = [1, 1]} : vector<8x11xf32> to vector<8x8xf32>
    %220 = vector.extract_strided_slice %218 {offsets = [0, 1], sizes = [8, 8], strides = [1, 1]} : vector<8x11xf32> to vector<8x8xf32>
    %221 = vector.extract_strided_slice %218 {offsets = [0, 2], sizes = [8, 8], strides = [1, 1]} : vector<8x11xf32> to vector<8x8xf32>
    %222 = vector.extract_strided_slice %218 {offsets = [0, 3], sizes = [8, 8], strides = [1, 1]} : vector<8x11xf32> to vector<8x8xf32>
    %223 = tpu.concatenate %219, %220, %221, %222 in 0 : vector<8x8xf32>, vector<8x8xf32>, vector<8x8xf32>, vector<8x8xf32> -> vector<32x8xf32>
    %c328 = arith.constant 328 : index
    %c0_89 = arith.constant 0 : index
    %224 = vector.load %arg2[%c328, %c0_89] : memref<592x256xbf16, #tpu.memory_space<vmem>>, vector<64x32xbf16>
    %c328_90 = arith.constant 328 : index
    %c0_91 = arith.constant 0 : index
    %225 = vector.load %arg3[%c328_90, %c0_91] : memref<592x1xf32, #tpu.memory_space<vmem>>, vector<64x1xf32>
    %226 = arith.truncf %223 : vector<32x8xf32> to vector<32x8xbf16>
    %cst_92 = arith.constant dense<0.000000e+00> : vector<64x8xf32>
    %227 = tpu.matmul %224, %226, %cst_92 {dimension_numbers = #tpu.dot_dimension_numbers<[1], [0], [0], [1], [0, 0, 1, 1], [], []>} : vector<64x32xbf16>, vector<32x8xbf16>, vector<64x8xf32> -> vector<64x8xf32>
    %228 = vector.broadcast %225 : vector<64x1xf32> to vector<64x8xf32>
    %229 = arith.addf %227, %228 : vector<64x8xf32>
    %230 = arith.negf %229 : vector<64x8xf32>
    %231 = math.exp %230 : vector<64x8xf32>
    %cst_93 = arith.constant 1.000000e+00 : f32
    %232 = vector.broadcast %cst_93 : f32 to vector<64x8xf32>
    %233 = arith.addf %232, %231 : vector<64x8xf32>
    %234 = arith.divf %232, %233 : vector<64x8xf32>
    %235 = arith.mulf %229, %234 : vector<64x8xf32>
    %c0_94 = arith.constant 0 : index
    %c0_95 = arith.constant 0 : index
    %236 = vector.load %arg5[%c0_94, %c0_95] : memref<120x128xf32, #tpu.memory_space<vmem>>, vector<8x16xf32>
    %cst_96 = arith.constant dense<0.000000e+00> : vector<64x16xf32>
    %237 = tpu.matmul %235, %236, %cst_96 {dimension_numbers = #tpu.dot_dimension_numbers<[1], [0], [0], [1], [0, 0, 1, 1], [], []>} : vector<64x8xf32>, vector<8x16xf32>, vector<64x16xf32> -> vector<64x16xf32>
    %cst_97 = arith.constant 0.000000e+00 : f32
    %238 = vector.broadcast %cst_97 : f32 to vector<64x1xf32>
    %239 = tpu.concatenate %238, %237, %238 in 1 : vector<64x1xf32>, vector<64x16xf32>, vector<64x1xf32> -> vector<64x18xf32>
    %240 = vector.extract_strided_slice %239 {offsets = [0, 0], sizes = [64, 16], strides = [1, 1]} : vector<64x18xf32> to vector<64x16xf32>
    %241 = vector.extract_strided_slice %239 {offsets = [0, 1], sizes = [64, 16], strides = [1, 1]} : vector<64x18xf32> to vector<64x16xf32>
    %242 = vector.extract_strided_slice %239 {offsets = [0, 2], sizes = [64, 16], strides = [1, 1]} : vector<64x18xf32> to vector<64x16xf32>
    %243 = tpu.concatenate %240, %241, %242 in 0 : vector<64x16xf32>, vector<64x16xf32>, vector<64x16xf32> -> vector<192x16xf32>
    %c456 = arith.constant 456 : index
    %c0_98 = arith.constant 0 : index
    %244 = vector.load %arg2[%c456, %c0_98] : memref<592x256xbf16, #tpu.memory_space<vmem>>, vector<32x192xbf16>
    %c456_99 = arith.constant 456 : index
    %c0_100 = arith.constant 0 : index
    %245 = vector.load %arg3[%c456_99, %c0_100] : memref<592x1xf32, #tpu.memory_space<vmem>>, vector<32x1xf32>
    %246 = arith.truncf %243 : vector<192x16xf32> to vector<192x16xbf16>
    %cst_101 = arith.constant dense<0.000000e+00> : vector<32x16xf32>
    %247 = tpu.matmul %244, %246, %cst_101 {dimension_numbers = #tpu.dot_dimension_numbers<[1], [0], [0], [1], [0, 0, 1, 1], [], []>} : vector<32x192xbf16>, vector<192x16xbf16>, vector<32x16xf32> -> vector<32x16xf32>
    %248 = vector.broadcast %245 : vector<32x1xf32> to vector<32x16xf32>
    %249 = arith.addf %247, %248 : vector<32x16xf32>
    %c392 = arith.constant 392 : index
    %c0_102 = arith.constant 0 : index
    %250 = vector.load %arg2[%c392, %c0_102] : memref<592x256xbf16, #tpu.memory_space<vmem>>, vector<32x192xbf16>
    %c392_103 = arith.constant 392 : index
    %c0_104 = arith.constant 0 : index
    %251 = vector.load %arg3[%c392_103, %c0_104] : memref<592x1xf32, #tpu.memory_space<vmem>>, vector<32x1xf32>
    %252 = arith.truncf %243 : vector<192x16xf32> to vector<192x16xbf16>
    %cst_105 = arith.constant dense<0.000000e+00> : vector<32x16xf32>
    %253 = tpu.matmul %250, %252, %cst_105 {dimension_numbers = #tpu.dot_dimension_numbers<[1], [0], [0], [1], [0, 0, 1, 1], [], []>} : vector<32x192xbf16>, vector<192x16xbf16>, vector<32x16xf32> -> vector<32x16xf32>
    %254 = vector.broadcast %251 : vector<32x1xf32> to vector<32x16xf32>
    %255 = arith.addf %253, %254 : vector<32x16xf32>
    %256 = arith.negf %255 : vector<32x16xf32>
    %257 = math.exp %256 : vector<32x16xf32>
    %cst_106 = arith.constant 1.000000e+00 : f32
    %258 = vector.broadcast %cst_106 : f32 to vector<32x16xf32>
    %259 = arith.addf %258, %257 : vector<32x16xf32>
    %260 = arith.divf %258, %259 : vector<32x16xf32>
    %261 = arith.mulf %255, %260 : vector<32x16xf32>
    %cst_107 = arith.constant 0.000000e+00 : f32
    %262 = vector.broadcast %cst_107 : f32 to vector<32x1xf32>
    %263 = tpu.concatenate %262, %261, %262 in 1 : vector<32x1xf32>, vector<32x16xf32>, vector<32x1xf32> -> vector<32x18xf32>
    %264 = vector.extract_strided_slice %263 {offsets = [0, 0], sizes = [32, 16], strides = [1, 1]} : vector<32x18xf32> to vector<32x16xf32>
    %265 = vector.extract_strided_slice %263 {offsets = [0, 1], sizes = [32, 16], strides = [1, 1]} : vector<32x18xf32> to vector<32x16xf32>
    %266 = vector.extract_strided_slice %263 {offsets = [0, 2], sizes = [32, 16], strides = [1, 1]} : vector<32x18xf32> to vector<32x16xf32>
    %267 = tpu.concatenate %264, %265, %266 in 0 : vector<32x16xf32>, vector<32x16xf32>, vector<32x16xf32> -> vector<96x16xf32>
    %c424 = arith.constant 424 : index
    %c0_108 = arith.constant 0 : index
    %268 = vector.load %arg2[%c424, %c0_108] : memref<592x256xbf16, #tpu.memory_space<vmem>>, vector<32x96xbf16>
    %c424_109 = arith.constant 424 : index
    %c0_110 = arith.constant 0 : index
    %269 = vector.load %arg3[%c424_109, %c0_110] : memref<592x1xf32, #tpu.memory_space<vmem>>, vector<32x1xf32>
    %270 = arith.truncf %267 : vector<96x16xf32> to vector<96x16xbf16>
    %cst_111 = arith.constant dense<0.000000e+00> : vector<32x16xf32>
    %271 = tpu.matmul %268, %270, %cst_111 {dimension_numbers = #tpu.dot_dimension_numbers<[1], [0], [0], [1], [0, 0, 1, 1], [], []>} : vector<32x96xbf16>, vector<96x16xbf16>, vector<32x16xf32> -> vector<32x16xf32>
    %272 = vector.broadcast %269 : vector<32x1xf32> to vector<32x16xf32>
    %273 = arith.addf %271, %272 : vector<32x16xf32>
    %274 = arith.addf %273, %249 : vector<32x16xf32>
    %275 = arith.negf %274 : vector<32x16xf32>
    %276 = math.exp %275 : vector<32x16xf32>
    %cst_112 = arith.constant 1.000000e+00 : f32
    %277 = vector.broadcast %cst_112 : f32 to vector<32x16xf32>
    %278 = arith.addf %277, %276 : vector<32x16xf32>
    %279 = arith.divf %277, %278 : vector<32x16xf32>
    %280 = arith.mulf %274, %279 : vector<32x16xf32>
    %c8_113 = arith.constant 8 : index
    %c0_114 = arith.constant 0 : index
    %281 = vector.load %arg5[%c8_113, %c0_114] : memref<120x128xf32, #tpu.memory_space<vmem>>, vector<16x32xf32>
    %cst_115 = arith.constant dense<0.000000e+00> : vector<32x32xf32>
    %282 = tpu.matmul %280, %281, %cst_115 {dimension_numbers = #tpu.dot_dimension_numbers<[1], [0], [0], [1], [0, 0, 1, 1], [], []>} : vector<32x16xf32>, vector<16x32xf32>, vector<32x32xf32> -> vector<32x32xf32>
    %cst_116 = arith.constant 0.000000e+00 : f32
    %283 = vector.broadcast %cst_116 : f32 to vector<32x1xf32>
    %284 = tpu.concatenate %283, %282, %283 in 1 : vector<32x1xf32>, vector<32x32xf32>, vector<32x1xf32> -> vector<32x34xf32>
    %285 = vector.extract_strided_slice %284 {offsets = [0, 0], sizes = [32, 32], strides = [1, 1]} : vector<32x34xf32> to vector<32x32xf32>
    %286 = vector.extract_strided_slice %284 {offsets = [0, 1], sizes = [32, 32], strides = [1, 1]} : vector<32x34xf32> to vector<32x32xf32>
    %287 = vector.extract_strided_slice %284 {offsets = [0, 2], sizes = [32, 32], strides = [1, 1]} : vector<32x34xf32> to vector<32x32xf32>
    %288 = tpu.concatenate %285, %286, %287 in 0 : vector<32x32xf32>, vector<32x32xf32>, vector<32x32xf32> -> vector<96x32xf32>
    %c520 = arith.constant 520 : index
    %c0_117 = arith.constant 0 : index
    %289 = vector.load %arg2[%c520, %c0_117] : memref<592x256xbf16, #tpu.memory_space<vmem>>, vector<16x96xbf16>
    %c520_118 = arith.constant 520 : index
    %c0_119 = arith.constant 0 : index
    %290 = vector.load %arg3[%c520_118, %c0_119] : memref<592x1xf32, #tpu.memory_space<vmem>>, vector<16x1xf32>
    %291 = arith.truncf %288 : vector<96x32xf32> to vector<96x32xbf16>
    %cst_120 = arith.constant dense<0.000000e+00> : vector<16x32xf32>
    %292 = tpu.matmul %289, %291, %cst_120 {dimension_numbers = #tpu.dot_dimension_numbers<[1], [0], [0], [1], [0, 0, 1, 1], [], []>} : vector<16x96xbf16>, vector<96x32xbf16>, vector<16x32xf32> -> vector<16x32xf32>
    %293 = vector.broadcast %290 : vector<16x1xf32> to vector<16x32xf32>
    %294 = arith.addf %292, %293 : vector<16x32xf32>
    %c488 = arith.constant 488 : index
    %c0_121 = arith.constant 0 : index
    %295 = vector.load %arg2[%c488, %c0_121] : memref<592x256xbf16, #tpu.memory_space<vmem>>, vector<16x96xbf16>
    %c488_122 = arith.constant 488 : index
    %c0_123 = arith.constant 0 : index
    %296 = vector.load %arg3[%c488_122, %c0_123] : memref<592x1xf32, #tpu.memory_space<vmem>>, vector<16x1xf32>
    %297 = arith.truncf %288 : vector<96x32xf32> to vector<96x32xbf16>
    %cst_124 = arith.constant dense<0.000000e+00> : vector<16x32xf32>
    %298 = tpu.matmul %295, %297, %cst_124 {dimension_numbers = #tpu.dot_dimension_numbers<[1], [0], [0], [1], [0, 0, 1, 1], [], []>} : vector<16x96xbf16>, vector<96x32xbf16>, vector<16x32xf32> -> vector<16x32xf32>
    %299 = vector.broadcast %296 : vector<16x1xf32> to vector<16x32xf32>
    %300 = arith.addf %298, %299 : vector<16x32xf32>
    %301 = arith.negf %300 : vector<16x32xf32>
    %302 = math.exp %301 : vector<16x32xf32>
    %cst_125 = arith.constant 1.000000e+00 : f32
    %303 = vector.broadcast %cst_125 : f32 to vector<16x32xf32>
    %304 = arith.addf %303, %302 : vector<16x32xf32>
    %305 = arith.divf %303, %304 : vector<16x32xf32>
    %306 = arith.mulf %300, %305 : vector<16x32xf32>
    %cst_126 = arith.constant 0.000000e+00 : f32
    %307 = vector.broadcast %cst_126 : f32 to vector<16x1xf32>
    %308 = tpu.concatenate %307, %306, %307 in 1 : vector<16x1xf32>, vector<16x32xf32>, vector<16x1xf32> -> vector<16x34xf32>
    %309 = vector.extract_strided_slice %308 {offsets = [0, 0], sizes = [16, 32], strides = [1, 1]} : vector<16x34xf32> to vector<16x32xf32>
    %310 = vector.extract_strided_slice %308 {offsets = [0, 1], sizes = [16, 32], strides = [1, 1]} : vector<16x34xf32> to vector<16x32xf32>
    %311 = vector.extract_strided_slice %308 {offsets = [0, 2], sizes = [16, 32], strides = [1, 1]} : vector<16x34xf32> to vector<16x32xf32>
    %312 = tpu.concatenate %309, %310, %311 in 0 : vector<16x32xf32>, vector<16x32xf32>, vector<16x32xf32> -> vector<48x32xf32>
    %c504 = arith.constant 504 : index
    %c0_127 = arith.constant 0 : index
    %313 = vector.load %arg2[%c504, %c0_127] : memref<592x256xbf16, #tpu.memory_space<vmem>>, vector<16x48xbf16>
    %c504_128 = arith.constant 504 : index
    %c0_129 = arith.constant 0 : index
    %314 = vector.load %arg3[%c504_128, %c0_129] : memref<592x1xf32, #tpu.memory_space<vmem>>, vector<16x1xf32>
    %315 = arith.truncf %312 : vector<48x32xf32> to vector<48x32xbf16>
    %cst_130 = arith.constant dense<0.000000e+00> : vector<16x32xf32>
    %316 = tpu.matmul %313, %315, %cst_130 {dimension_numbers = #tpu.dot_dimension_numbers<[1], [0], [0], [1], [0, 0, 1, 1], [], []>} : vector<16x48xbf16>, vector<48x32xbf16>, vector<16x32xf32> -> vector<16x32xf32>
    %317 = vector.broadcast %314 : vector<16x1xf32> to vector<16x32xf32>
    %318 = arith.addf %316, %317 : vector<16x32xf32>
    %319 = arith.addf %318, %294 : vector<16x32xf32>
    %320 = arith.negf %319 : vector<16x32xf32>
    %321 = math.exp %320 : vector<16x32xf32>
    %cst_131 = arith.constant 1.000000e+00 : f32
    %322 = vector.broadcast %cst_131 : f32 to vector<16x32xf32>
    %323 = arith.addf %322, %321 : vector<16x32xf32>
    %324 = arith.divf %322, %323 : vector<16x32xf32>
    %325 = arith.mulf %319, %324 : vector<16x32xf32>
    %c24_132 = arith.constant 24 : index
    %c0_133 = arith.constant 0 : index
    %326 = vector.load %arg5[%c24_132, %c0_133] : memref<120x128xf32, #tpu.memory_space<vmem>>, vector<32x64xf32>
    %cst_134 = arith.constant dense<0.000000e+00> : vector<16x64xf32>
    %327 = tpu.matmul %325, %326, %cst_134 {dimension_numbers = #tpu.dot_dimension_numbers<[1], [0], [0], [1], [0, 0, 1, 1], [], []>} : vector<16x32xf32>, vector<32x64xf32>, vector<16x64xf32> -> vector<16x64xf32>
    %cst_135 = arith.constant 0.000000e+00 : f32
    %328 = vector.broadcast %cst_135 : f32 to vector<16x1xf32>
    %329 = tpu.concatenate %328, %327, %328 in 1 : vector<16x1xf32>, vector<16x64xf32>, vector<16x1xf32> -> vector<16x66xf32>
    %330 = vector.extract_strided_slice %329 {offsets = [0, 0], sizes = [16, 64], strides = [1, 1]} : vector<16x66xf32> to vector<16x64xf32>
    %331 = vector.extract_strided_slice %329 {offsets = [0, 1], sizes = [16, 64], strides = [1, 1]} : vector<16x66xf32> to vector<16x64xf32>
    %332 = vector.extract_strided_slice %329 {offsets = [0, 2], sizes = [16, 64], strides = [1, 1]} : vector<16x66xf32> to vector<16x64xf32>
    %333 = tpu.concatenate %330, %331, %332 in 0 : vector<16x64xf32>, vector<16x64xf32>, vector<16x64xf32> -> vector<48x64xf32>
    %c552 = arith.constant 552 : index
    %c0_136 = arith.constant 0 : index
    %334 = vector.load %arg2[%c552, %c0_136] : memref<592x256xbf16, #tpu.memory_space<vmem>>, vector<8x48xbf16>
    %c552_137 = arith.constant 552 : index
    %c0_138 = arith.constant 0 : index
    %335 = vector.load %arg3[%c552_137, %c0_138] : memref<592x1xf32, #tpu.memory_space<vmem>>, vector<8x1xf32>
    %336 = arith.truncf %333 : vector<48x64xf32> to vector<48x64xbf16>
    %cst_139 = arith.constant dense<0.000000e+00> : vector<8x64xf32>
    %337 = tpu.matmul %334, %336, %cst_139 {dimension_numbers = #tpu.dot_dimension_numbers<[1], [0], [0], [1], [0, 0, 1, 1], [], []>} : vector<8x48xbf16>, vector<48x64xbf16>, vector<8x64xf32> -> vector<8x64xf32>
    %338 = vector.broadcast %335 : vector<8x1xf32> to vector<8x64xf32>
    %339 = arith.addf %337, %338 : vector<8x64xf32>
    %c536 = arith.constant 536 : index
    %c0_140 = arith.constant 0 : index
    %340 = vector.load %arg2[%c536, %c0_140] : memref<592x256xbf16, #tpu.memory_space<vmem>>, vector<8x48xbf16>
    %c536_141 = arith.constant 536 : index
    %c0_142 = arith.constant 0 : index
    %341 = vector.load %arg3[%c536_141, %c0_142] : memref<592x1xf32, #tpu.memory_space<vmem>>, vector<8x1xf32>
    %342 = arith.truncf %333 : vector<48x64xf32> to vector<48x64xbf16>
    %cst_143 = arith.constant dense<0.000000e+00> : vector<8x64xf32>
    %343 = tpu.matmul %340, %342, %cst_143 {dimension_numbers = #tpu.dot_dimension_numbers<[1], [0], [0], [1], [0, 0, 1, 1], [], []>} : vector<8x48xbf16>, vector<48x64xbf16>, vector<8x64xf32> -> vector<8x64xf32>
    %344 = vector.broadcast %341 : vector<8x1xf32> to vector<8x64xf32>
    %345 = arith.addf %343, %344 : vector<8x64xf32>
    %346 = arith.negf %345 : vector<8x64xf32>
    %347 = math.exp %346 : vector<8x64xf32>
    %cst_144 = arith.constant 1.000000e+00 : f32
    %348 = vector.broadcast %cst_144 : f32 to vector<8x64xf32>
    %349 = arith.addf %348, %347 : vector<8x64xf32>
    %350 = arith.divf %348, %349 : vector<8x64xf32>
    %351 = arith.mulf %345, %350 : vector<8x64xf32>
    %cst_145 = arith.constant 0.000000e+00 : f32
    %352 = vector.broadcast %cst_145 : f32 to vector<8x1xf32>
    %353 = tpu.concatenate %352, %351, %352 in 1 : vector<8x1xf32>, vector<8x64xf32>, vector<8x1xf32> -> vector<8x66xf32>
    %354 = vector.extract_strided_slice %353 {offsets = [0, 0], sizes = [8, 64], strides = [1, 1]} : vector<8x66xf32> to vector<8x64xf32>
    %355 = vector.extract_strided_slice %353 {offsets = [0, 1], sizes = [8, 64], strides = [1, 1]} : vector<8x66xf32> to vector<8x64xf32>
    %356 = vector.extract_strided_slice %353 {offsets = [0, 2], sizes = [8, 64], strides = [1, 1]} : vector<8x66xf32> to vector<8x64xf32>
    %357 = tpu.concatenate %354, %355, %356 in 0 : vector<8x64xf32>, vector<8x64xf32>, vector<8x64xf32> -> vector<24x64xf32>
    %c544 = arith.constant 544 : index
    %c0_146 = arith.constant 0 : index
    %358 = vector.load %arg2[%c544, %c0_146] : memref<592x256xbf16, #tpu.memory_space<vmem>>, vector<8x24xbf16>
    %c544_147 = arith.constant 544 : index
    %c0_148 = arith.constant 0 : index
    %359 = vector.load %arg3[%c544_147, %c0_148] : memref<592x1xf32, #tpu.memory_space<vmem>>, vector<8x1xf32>
    %360 = arith.truncf %357 : vector<24x64xf32> to vector<24x64xbf16>
    %cst_149 = arith.constant dense<0.000000e+00> : vector<8x64xf32>
    %361 = tpu.matmul %358, %360, %cst_149 {dimension_numbers = #tpu.dot_dimension_numbers<[1], [0], [0], [1], [0, 0, 1, 1], [], []>} : vector<8x24xbf16>, vector<24x64xbf16>, vector<8x64xf32> -> vector<8x64xf32>
    %362 = vector.broadcast %359 : vector<8x1xf32> to vector<8x64xf32>
    %363 = arith.addf %361, %362 : vector<8x64xf32>
    %364 = arith.addf %363, %339 : vector<8x64xf32>
    %365 = arith.negf %364 : vector<8x64xf32>
    %366 = math.exp %365 : vector<8x64xf32>
    %cst_150 = arith.constant 1.000000e+00 : f32
    %367 = vector.broadcast %cst_150 : f32 to vector<8x64xf32>
    %368 = arith.addf %367, %366 : vector<8x64xf32>
    %369 = arith.divf %367, %368 : vector<8x64xf32>
    %370 = arith.mulf %364, %369 : vector<8x64xf32>
    %c56_151 = arith.constant 56 : index
    %c0_152 = arith.constant 0 : index
    %371 = vector.load %arg5[%c56_151, %c0_152] : memref<120x128xf32, #tpu.memory_space<vmem>>, vector<64x128xf32>
    %cst_153 = arith.constant dense<0.000000e+00> : vector<8x128xf32>
    %372 = tpu.matmul %370, %371, %cst_153 {dimension_numbers = #tpu.dot_dimension_numbers<[1], [0], [0], [1], [0, 0, 1, 1], [], []>} : vector<8x64xf32>, vector<64x128xf32>, vector<8x128xf32> -> vector<8x128xf32>
    %cst_154 = arith.constant 0.000000e+00 : f32
    %373 = vector.broadcast %cst_154 : f32 to vector<8x1xf32>
    %374 = tpu.concatenate %373, %372, %373 in 1 : vector<8x1xf32>, vector<8x128xf32>, vector<8x1xf32> -> vector<8x130xf32>
    %375 = vector.extract_strided_slice %374 {offsets = [0, 0], sizes = [8, 128], strides = [1, 1]} : vector<8x130xf32> to vector<8x128xf32>
    %376 = vector.extract_strided_slice %374 {offsets = [0, 1], sizes = [8, 128], strides = [1, 1]} : vector<8x130xf32> to vector<8x128xf32>
    %377 = vector.extract_strided_slice %374 {offsets = [0, 2], sizes = [8, 128], strides = [1, 1]} : vector<8x130xf32> to vector<8x128xf32>
    %378 = tpu.concatenate %375, %376, %377 in 0 : vector<8x128xf32>, vector<8x128xf32>, vector<8x128xf32> -> vector<24x128xf32>
    %c576 = arith.constant 576 : index
    %c0_155 = arith.constant 0 : index
    %379 = vector.load %arg2[%c576, %c0_155] : memref<592x256xbf16, #tpu.memory_space<vmem>>, vector<4x24xbf16>
    %c576_156 = arith.constant 576 : index
    %c0_157 = arith.constant 0 : index
    %380 = vector.load %arg3[%c576_156, %c0_157] : memref<592x1xf32, #tpu.memory_space<vmem>>, vector<4x1xf32>
    %381 = arith.truncf %378 : vector<24x128xf32> to vector<24x128xbf16>
    %cst_158 = arith.constant dense<0.000000e+00> : vector<4x128xf32>
    %382 = tpu.matmul %379, %381, %cst_158 {dimension_numbers = #tpu.dot_dimension_numbers<[1], [0], [0], [1], [0, 0, 1, 1], [], []>} : vector<4x24xbf16>, vector<24x128xbf16>, vector<4x128xf32> -> vector<4x128xf32>
    %383 = vector.broadcast %380 : vector<4x1xf32> to vector<4x128xf32>
    %384 = arith.addf %382, %383 : vector<4x128xf32>
    %c560 = arith.constant 560 : index
    %c0_159 = arith.constant 0 : index
    %385 = vector.load %arg2[%c560, %c0_159] : memref<592x256xbf16, #tpu.memory_space<vmem>>, vector<4x24xbf16>
    %c560_160 = arith.constant 560 : index
    %c0_161 = arith.constant 0 : index
    %386 = vector.load %arg3[%c560_160, %c0_161] : memref<592x1xf32, #tpu.memory_space<vmem>>, vector<4x1xf32>
    %387 = arith.truncf %378 : vector<24x128xf32> to vector<24x128xbf16>
    %cst_162 = arith.constant dense<0.000000e+00> : vector<4x128xf32>
    %388 = tpu.matmul %385, %387, %cst_162 {dimension_numbers = #tpu.dot_dimension_numbers<[1], [0], [0], [1], [0, 0, 1, 1], [], []>} : vector<4x24xbf16>, vector<24x128xbf16>, vector<4x128xf32> -> vector<4x128xf32>
    %389 = vector.broadcast %386 : vector<4x1xf32> to vector<4x128xf32>
    %390 = arith.addf %388, %389 : vector<4x128xf32>
    %391 = arith.negf %390 : vector<4x128xf32>
    %392 = math.exp %391 : vector<4x128xf32>
    %cst_163 = arith.constant 1.000000e+00 : f32
    %393 = vector.broadcast %cst_163 : f32 to vector<4x128xf32>
    %394 = arith.addf %393, %392 : vector<4x128xf32>
    %395 = arith.divf %393, %394 : vector<4x128xf32>
    %396 = arith.mulf %390, %395 : vector<4x128xf32>
    %cst_164 = arith.constant 0.000000e+00 : f32
    %397 = vector.broadcast %cst_164 : f32 to vector<4x1xf32>
    %398 = tpu.concatenate %397, %396, %397 in 1 : vector<4x1xf32>, vector<4x128xf32>, vector<4x1xf32> -> vector<4x130xf32>
    %399 = vector.extract_strided_slice %398 {offsets = [0, 0], sizes = [4, 128], strides = [1, 1]} : vector<4x130xf32> to vector<4x128xf32>
    %400 = vector.extract_strided_slice %398 {offsets = [0, 1], sizes = [4, 128], strides = [1, 1]} : vector<4x130xf32> to vector<4x128xf32>
    %401 = vector.extract_strided_slice %398 {offsets = [0, 2], sizes = [4, 128], strides = [1, 1]} : vector<4x130xf32> to vector<4x128xf32>
    %402 = tpu.concatenate %399, %400, %401 in 0 : vector<4x128xf32>, vector<4x128xf32>, vector<4x128xf32> -> vector<12x128xf32>
    %c568 = arith.constant 568 : index
    %c0_165 = arith.constant 0 : index
    %403 = vector.load %arg2[%c568, %c0_165] : memref<592x256xbf16, #tpu.memory_space<vmem>>, vector<4x12xbf16>
    %c568_166 = arith.constant 568 : index
    %c0_167 = arith.constant 0 : index
    %404 = vector.load %arg3[%c568_166, %c0_167] : memref<592x1xf32, #tpu.memory_space<vmem>>, vector<4x1xf32>
    %405 = arith.truncf %402 : vector<12x128xf32> to vector<12x128xbf16>
    %cst_168 = arith.constant dense<0.000000e+00> : vector<4x128xf32>
    %406 = tpu.matmul %403, %405, %cst_168 {dimension_numbers = #tpu.dot_dimension_numbers<[1], [0], [0], [1], [0, 0, 1, 1], [], []>} : vector<4x12xbf16>, vector<12x128xbf16>, vector<4x128xf32> -> vector<4x128xf32>
    %407 = vector.broadcast %404 : vector<4x1xf32> to vector<4x128xf32>
    %408 = arith.addf %406, %407 : vector<4x128xf32>
    %409 = arith.addf %408, %384 : vector<4x128xf32>
    %410 = arith.negf %409 : vector<4x128xf32>
    %411 = math.exp %410 : vector<4x128xf32>
    %cst_169 = arith.constant 1.000000e+00 : f32
    %412 = vector.broadcast %cst_169 : f32 to vector<4x128xf32>
    %413 = arith.addf %412, %411 : vector<4x128xf32>
    %414 = arith.divf %412, %413 : vector<4x128xf32>
    %415 = arith.mulf %409, %414 : vector<4x128xf32>
    %cst_170 = arith.constant 0.000000e+00 : f32
    %416 = vector.broadcast %cst_170 : f32 to vector<4x1xf32>
    %417 = tpu.concatenate %416, %415, %416 in 1 : vector<4x1xf32>, vector<4x128xf32>, vector<4x1xf32> -> vector<4x130xf32>
    %418 = vector.extract_strided_slice %417 {offsets = [0, 0], sizes = [4, 128], strides = [1, 1]} : vector<4x130xf32> to vector<4x128xf32>
    %419 = vector.extract_strided_slice %417 {offsets = [0, 1], sizes = [4, 128], strides = [1, 1]} : vector<4x130xf32> to vector<4x128xf32>
    %420 = vector.extract_strided_slice %417 {offsets = [0, 2], sizes = [4, 128], strides = [1, 1]} : vector<4x130xf32> to vector<4x128xf32>
    %421 = tpu.concatenate %418, %419, %420 in 0 : vector<4x128xf32>, vector<4x128xf32>, vector<4x128xf32> -> vector<12x128xf32>
    %c584 = arith.constant 584 : index
    %c0_171 = arith.constant 0 : index
    %422 = vector.load %arg2[%c584, %c0_171] : memref<592x256xbf16, #tpu.memory_space<vmem>>, vector<1x12xbf16>
    %c584_172 = arith.constant 584 : index
    %c0_173 = arith.constant 0 : index
    %423 = vector.load %arg3[%c584_172, %c0_173] : memref<592x1xf32, #tpu.memory_space<vmem>>, vector<1x1xf32>
    %424 = arith.truncf %421 : vector<12x128xf32> to vector<12x128xbf16>
    %cst_174 = arith.constant dense<0.000000e+00> : vector<1x128xf32>
    %425 = tpu.matmul %422, %424, %cst_174 {dimension_numbers = #tpu.dot_dimension_numbers<[1], [0], [0], [1], [0, 0, 1, 1], [], []>} : vector<1x12xbf16>, vector<12x128xbf16>, vector<1x128xf32> -> vector<1x128xf32>
    %426 = vector.broadcast %423 : vector<1x1xf32> to vector<1x128xf32>
    %427 = arith.addf %425, %426 : vector<1x128xf32>
    %428 = math.tanh %427 : vector<1x128xf32>
    %cst_175 = arith.constant 6.28318548 : f32
    %429 = vector.broadcast %cst_175 : f32 to vector<1x128xf32>
    %430 = arith.mulf %428, %429 : vector<1x128xf32>
    %c0_176 = arith.constant 0 : index
    %c0_177 = arith.constant 0 : index
    %c0_178 = arith.constant 0 : index
    %431 = vector.load %arg6[%c0_176, %c0_177, %c0_178] : memref<1x1x128xf32, #tpu.memory_space<vmem>>, vector<1x1x128xf32>
    %432 = vector.shape_cast %431 : vector<1x1x128xf32> to vector<1x128xf32>
    %433 = vector.shape_cast %430 : vector<1x128xf32> to vector<1x1x128xf32>
    tpu.vector_store %arg6[%c0_176, %c0_177, %c0_178], %433 {strides = array<i32>} : memref<1x1x128xf32, #tpu.memory_space<vmem>>, vector<1x1x128xf32>,
    %c0_179 = arith.constant 0 : index
    %c0_180 = arith.constant 0 : index
    %c0_181 = arith.constant 0 : index
    %434 = vector.load %arg7[%c0_179, %c0_180, %c0_181] : memref<1x8x5xf32, #tpu.memory_space<vmem>>, vector<1x8x5xf32>
    %435 = vector.shape_cast %434 : vector<1x8x5xf32> to vector<8x5xf32>
    %436 = vector.shape_cast %215 : vector<8x5xf32> to vector<1x8x5xf32>
    tpu.vector_store %arg7[%c0_179, %c0_180, %c0_181], %436 {strides = array<i32>} : memref<1x8x5xf32, #tpu.memory_space<vmem>>, vector<1x8x5xf32>,
    %c0_182 = arith.constant 0 : index
    %c0_183 = arith.constant 0 : index
    %c0_184 = arith.constant 0 : index
    %437 = vector.load %arg8[%c0_182, %c0_183, %c0_184] : memref<1x8x5xf32, #tpu.memory_space<vmem>>, vector<1x8x5xf32>
    %438 = vector.shape_cast %437 : vector<1x8x5xf32> to vector<8x5xf32>
    %439 = vector.shape_cast %216 : vector<8x5xf32> to vector<1x8x5xf32>
    tpu.vector_store %arg8[%c0_182, %c0_183, %c0_184], %439 {strides = array<i32>} : memref<1x8x5xf32, #tpu.memory_space<vmem>>, vector<1x8x5xf32>,
    return
  }
  func.func @transform_0(%arg0: i32) -> (i32, i32, i32) {
    %c0_i32 = arith.constant 0 : i32
    %c0_i32_0 = arith.constant 0 : i32
    %c0_i32_1 = arith.constant 0 : i32
    return %arg0, %c0_i32, %c0_i32_0 : i32, i32, i32
  }
  func.func @transform_1(%arg0: i32) -> (i32, i32) {
    %c0_i32 = arith.constant 0 : i32
    %c0_i32_0 = arith.constant 0 : i32
    %c0_i32_1 = arith.constant 0 : i32
    return %c0_i32, %c0_i32_0 : i32, i32
  }
  func.func @transform_2(%arg0: i32) -> (i32, i32) {
    %c0_i32 = arith.constant 0 : i32
    %c0_i32_0 = arith.constant 0 : i32
    %c0_i32_1 = arith.constant 0 : i32
    return %c0_i32, %c0_i32_0 : i32, i32
  }
  func.func @transform_3(%arg0: i32) -> (i32, i32) {
    %c0_i32 = arith.constant 0 : i32
    %c0_i32_0 = arith.constant 0 : i32
    %c0_i32_1 = arith.constant 0 : i32
    return %c0_i32, %c0_i32_0 : i32, i32
  }
  func.func @transform_4(%arg0: i32) -> (i32, i32) {
    %c0_i32 = arith.constant 0 : i32
    %c0_i32_0 = arith.constant 0 : i32
    %c0_i32_1 = arith.constant 0 : i32
    return %c0_i32, %c0_i32_0 : i32, i32
  }
  func.func @transform_5(%arg0: i32) -> (i32, i32, i32) {
    %c0_i32 = arith.constant 0 : i32
    %c0_i32_0 = arith.constant 0 : i32
    %c0_i32_1 = arith.constant 0 : i32
    return %arg0, %c0_i32, %c0_i32_0 : i32, i32, i32
  }
  func.func @transform_6(%arg0: i32) -> (i32, i32, i32) {
    %c0_i32 = arith.constant 0 : i32
    %c0_i32_0 = arith.constant 0 : i32
    %c0_i32_1 = arith.constant 0 : i32
    return %arg0, %c0_i32, %c0_i32_0 : i32, i32, i32
  }
  func.func @transform_7(%arg0: i32) -> (i32, i32, i32) {
    %c0_i32 = arith.constant 0 : i32
    %c0_i32_0 = arith.constant 0 : i32
    %c0_i32_1 = arith.constant 0 : i32
    return %arg0, %c0_i32, %c0_i32_0 : i32, i32, i32
  }
}

</mosaic_0001>

<llo_original>
// kernel: _vae_forward_impl.1
$region0: #{_vae_forward_impl.1}
  #allocation0 [shape = 'u32[]', space=smem, size = 0x4, offset = 0x4, fixed_abs, tag = 'smem constant byte address 0x4 - core index']
  #allocation1 [shape = 'u32[144,128]{1,0:T(1,128)}', space=vmem, size = 0x12000, scoped, tag = 'internal scratch']
  %s0 = inlined_call_operand.vmem [shape: f32[2,1,128], index: 0, kind: input, shape index: {}]
  %s1 = inlined_call_operand.vmem [shape: bf16[592,256], index: 1, kind: input, shape index: {}]
  %s2 = inlined_call_operand.vmem [shape: f32[592,1], index: 2, kind: input, shape index: {}]
  %s3 = inlined_call_operand.hbm [shape: f32[128,64], index: 3, kind: input, shape index: {}]
  %s4 = inlined_call_operand.hbm [shape: f32[120,128], index: 4, kind: input, shape index: {}]
  %s5 = inlined_call_operand.hbm [shape: f32[2,1,128], index: 5, kind: output, shape index: {0}]
  %s6 = inlined_call_operand.vmem [shape: f32[2,8,5], index: 6, kind: output, shape index: {1}]
  %s7 = inlined_call_operand.vmem [shape: f32[2,8,5], index: 7, kind: output, shape index: {2}]
  %8 = xla_tuple %s5, %s6, %s7
  %s9 = sld [smem:[#allocation0]]
  $region77: #{_vae_forward_impl.1} parent=0
    _
  %s11 = ssub.s32 1, %s9
  %s12 = scalar_select 0, %s11, %s9
  $region1: #{_vae_forward_impl.1} parent=0
    #allocation2 [shape = 'u8[65536]{0}', space=vmem, size = 0x10000, scoped, tag = 'input window, operand 3, single buffered']
    #allocation3 [shape = 's32[2]{0}', space=sflag, size = 0x8, scoped, tag = 'scoped memory for _vae_forward_impl.1']
    #allocation4 [shape = 's32[2]{0}', space=sflag, size = 0x8, scoped, tag = 'scoped memory for _vae_forward_impl.1']
    #allocation5 [shape = 'u8[61440]{0}', space=vmem, size = 0xf000, scoped, tag = 'input window, operand 4, single buffered']
    #allocation6 [shape = 's32[1]{0}', space=sflag, size = 0x4, scoped, tag = 'scoped memory for _vae_forward_impl.1']
    #allocation7 [shape = 'u8[1024]{0}', space=vmem, size = 0x400, scoped, tag = 'output window, operand 0']
    %13 = vsyncpa [#allocation3], 0
    %14 = vsyncpa [#allocation6], 0
    %15 = vsyncpa [#allocation4], 0
    %s16 = scalar_lea.sflag [#allocation4], 1
    %17 = vsyncpa %s16, 0
    loop: start=0, step=1, limit=4
    $region2: #{_vae_forward_impl.1} parent=1 // loop_pre_header
      _
    $region3: #{_vae_forward_impl.1} parent=1 // loop_header
      %s19 = sphi 0, %s23
      %p20 = scmp.ge.s32.totalorder %s19, 4
      %s29 = sphi 0, %s31
      %s32 = sphi 0, %s29
      %s33 = sphi 0, %s32
      %s49 = sphi 0, %s33
      %s53 = sphi 0, %s53
      %s55 = sphi 0, %s53
      %s56 = sphi 0, %s55
      %s70 = sphi 0, %s56
      %s74 = sphi 0, %s74
      %s76 = sphi 0, %s74
      %s77 = sphi 0, %s76
      %s91 = sphi 0, %s77
      %s95 = sphi 0, %s95
      %s97 = sphi 0, %s95
      %s98 = sphi 0, %s97
      %s112 = sphi 0, %s98
      %s116 = sphi 0, %s116
      %s118 = sphi 0, %s116
      %s119 = sphi 0, %s118
      %s133 = sphi 0, %s119
      %s139 = sphi 0, %s141
      %s142 = sphi 0, %s139
      %s143 = sphi 0, %s142
      %s159 = sphi 0, %s143
      %s165 = sphi 0, %s167
      %s168 = sphi 0, %s165
      %s169 = sphi 0, %s168
      %s185 = sphi 0, %s169
      %s191 = sphi 0, %s193
      %s194 = sphi 0, %s191
      %s195 = sphi 0, %s194
      %s211 = sphi 0, %s195
    $region4: #{_vae_forward_impl.1} parent=1 // loop_header_branch
      %22 = sbr.rel (%p20) target = $region8
    $region5: #{_vae_forward_impl.1} parent=1 // loop_body
      %s24 = ssub.s32 %s19, 1
      %s25 = ssub.s32 %s19, 2
      %s26 = sadd.s32 %s19, 1
      %s27 = ssub.s32 %s19, %s26
      %p28 = scmp.eq.s32.totalorder %s27, 0
      %s30 = sadd.s32 %s29, 1
      %s31 = scalar_select %p28, %s29, %s30
      %p34 = pneg %p28
      %p35 = scmp.eq.s32.totalorder %s19, 1
      %p36 = por %p34, %p35
      %p37 = scmp.ne.s32.totalorder %s29, %s32
      %p38 = scmp.eq.s32.totalorder %s19, 0
      %p39 = por %p37, %p38
      %p40 = scmp.ne.s32.totalorder %s29, %s32
      %p41 = scmp.eq.s32.totalorder %s24, 1
      %p42 = por %p40, %p41
      %p43 = scmp.ne.s32.totalorder %s32, %s33
      %p44 = scmp.eq.s32.totalorder %s24, 0
      %p45 = por %p43, %p44
      %p46 = scmp.ne.s32.totalorder %s32, %s33
      %p47 = scmp.eq.s32.totalorder %s25, 1
      %p48 = por %p46, %p47
      %p50 = scmp.ne.s32.totalorder %s33, %s49
      %p51 = scmp.eq.s32.totalorder %s25, 0
      %p52 = por %p50, %p51
      %s54 = sadd.s32 %s53, 1
      %p57 = scmp.eq.s32.totalorder %s19, 1
      %p58 = scmp.ne.s32.totalorder %s53, %s55
      %p59 = scmp.eq.s32.totalorder %s19, 0
      %p60 = por %p58, %p59
      %p61 = scmp.ne.s32.totalorder %s53, %s55
      %p62 = scmp.eq.s32.totalorder %s24, 1
      %p63 = por %p61, %p62
      %p64 = scmp.ne.s32.totalorder %s55, %s56
      %p65 = scmp.eq.s32.totalorder %s24, 0
      %p66 = por %p64, %p65
      %p67 = scmp.ne.s32.totalorder %s55, %s56
      %p68 = scmp.eq.s32.totalorder %s25, 1
      %p69 = por %p67, %p68
      %p71 = scmp.ne.s32.totalorder %s56, %s70
      %p72 = scmp.eq.s32.totalorder %s25, 0
      %p73 = por %p71, %p72
      %s75 = sadd.s32 %s74, 1
      %p78 = scmp.eq.s32.totalorder %s19, 1
      %p79 = scmp.ne.s32.totalorder %s74, %s76
      %p80 = scmp.eq.s32.totalorder %s19, 0
      %p81 = por %p79, %p80
      %p82 = scmp.ne.s32.totalorder %s74, %s76
      %p83 = scmp.eq.s32.totalorder %s24, 1
      %p84 = por %p82, %p83
      %p85 = scmp.ne.s32.totalorder %s76, %s77
      %p86 = scmp.eq.s32.totalorder %s24, 0
      %p87 = por %p85, %p86
      %p88 = scmp.ne.s32.totalorder %s76, %s77
      %p89 = scmp.eq.s32.totalorder %s25, 1
      %p90 = por %p88, %p89
      %p92 = scmp.ne.s32.totalorder %s77, %s91
      %p93 = scmp.eq.s32.totalorder %s25, 0
      %p94 = por %p92, %p93
      %s96 = sadd.s32 %s95, 1
      %p99 = scmp.eq.s32.totalorder %s19, 1
      %p100 = scmp.ne.s32.totalorder %s95, %s97
      %p101 = scmp.eq.s32.totalorder %s19, 0
      %p102 = por %p100, %p101
      %p103 = scmp.ne.s32.totalorder %s95, %s97
      %p104 = scmp.eq.s32.totalorder %s24, 1
      %p105 = por %p103, %p104
      %p106 = scmp.ne.s32.totalorder %s97, %s98
      %p107 = scmp.eq.s32.totalorder %s24, 0
      %p108 = por %p106, %p107
      %p109 = scmp.ne.s32.totalorder %s97, %s98
      %p110 = scmp.eq.s32.totalorder %s25, 1
      %p111 = por %p109, %p110
      %p113 = scmp.ne.s32.totalorder %s98, %s112
      %p114 = scmp.eq.s32.totalorder %s25, 0
      %p115 = por %p113, %p114
      %s117 = sadd.s32 %s116, 1
      %p120 = scmp.eq.s32.totalorder %s19, 1
      %p121 = scmp.ne.s32.totalorder %s116, %s118
      %p122 = scmp.eq.s32.totalorder %s19, 0
      %p123 = por %p121, %p122
      %p124 = scmp.ne.s32.totalorder %s116, %s118
      %p125 = scmp.eq.s32.totalorder %s24, 1
      %p126 = por %p124, %p125
      %p127 = scmp.ne.s32.totalorder %s118, %s119
      %p128 = scmp.eq.s32.totalorder %s24, 0
      %p129 = por %p127, %p128
      %p130 = scmp.ne.s32.totalorder %s118, %s119
      %p131 = scmp.eq.s32.totalorder %s25, 1
      %p132 = por %p130, %p131
      %p134 = scmp.ne.s32.totalorder %s119, %s133
      %p135 = scmp.eq.s32.totalorder %s25, 0
      %p136 = por %p134, %p135
      %s137 = ssub.s32 %s19, %s26
      %p138 = scmp.eq.s32.totalorder %s137, 0
      %s140 = sadd.s32 %s139, 1
      %s141 = scalar_select %p138, %s139, %s140
      %p144 = pneg %p138
      %p145 = scmp.eq.s32.totalorder %s19, 1
      %p146 = por %p144, %p145
      %p147 = scmp.ne.s32.totalorder %s139, %s142
      %p148 = scmp.eq.s32.totalorder %s19, 0
      %p149 = por %p147, %p148
      %p150 = scmp.ne.s32.totalorder %s139, %s142
      %p151 = scmp.eq.s32.totalorder %s24, 1
      %p152 = por %p150, %p151
      %p153 = scmp.ne.s32.totalorder %s142, %s143
      %p154 = scmp.eq.s32.totalorder %s24, 0
      %p155 = por %p153, %p154
      %p156 = scmp.ne.s32.totalorder %s142, %s143
      %p157 = scmp.eq.s32.totalorder %s25, 1
      %p158 = por %p156, %p157
      %p160 = scmp.ne.s32.totalorder %s143, %s159
      %p161 = scmp.eq.s32.totalorder %s25, 0
      %p162 = por %p160, %p161
      %s163 = ssub.s32 %s19, %s26
      %p164 = scmp.eq.s32.totalorder %s163, 0
      %s166 = sadd.s32 %s165, 1
      %s167 = scalar_select %p164, %s165, %s166
      %p170 = pneg %p164
      %p171 = scmp.eq.s32.totalorder %s19, 1
      %p172 = por %p170, %p171
      %p173 = scmp.ne.s32.totalorder %s165, %s168
      %p174 = scmp.eq.s32.totalorder %s19, 0
      %p175 = por %p173, %p174
      %p176 = scmp.ne.s32.totalorder %s165, %s168
      %p177 = scmp.eq.s32.totalorder %s24, 1
      %p178 = por %p176, %p177
      %p179 = scmp.ne.s32.totalorder %s168, %s169
      %p180 = scmp.eq.s32.totalorder %s24, 0
      %p181 = por %p179, %p180
      %p182 = scmp.ne.s32.totalorder %s168, %s169
      %p183 = scmp.eq.s32.totalorder %s25, 1
      %p184 = por %p182, %p183
      %p186 = scmp.ne.s32.totalorder %s169, %s185
      %p187 = scmp.eq.s32.totalorder %s25, 0
      %p188 = por %p186, %p187
      %s189 = ssub.s32 %s19, %s26
      %p190 = scmp.eq.s32.totalorder %s189, 0
      %s192 = sadd.s32 %s191, 1
      %s193 = scalar_select %p190, %s191, %s192
      %p196 = pneg %p190
      %p197 = scmp.eq.s32.totalorder %s19, 1
      %p198 = por %p196, %p197
      %p199 = scmp.ne.s32.totalorder %s191, %s194
      %p200 = scmp.eq.s32.totalorder %s19, 0
      %p201 = por %p199, %p200
      %p202 = scmp.ne.s32.totalorder %s191, %s194
      %p203 = scmp.eq.s32.totalorder %s24, 1
      %p204 = por %p202, %p203
      %p205 = scmp.ne.s32.totalorder %s194, %s195
      %p206 = scmp.eq.s32.totalorder %s24, 0
      %p207 = por %p205, %p206
      %p208 = scmp.ne.s32.totalorder %s194, %s195
      %p209 = scmp.eq.s32.totalorder %s25, 1
      %p210 = por %p208, %p209
      %p212 = scmp.ne.s32.totalorder %s195, %s211
      %p213 = scmp.eq.s32.totalorder %s25, 0
      %p214 = por %p212, %p213
      %p215 = scmp.le.s32.totalorder 1, %s19
      %p216 = scmp.lt.s32.totalorder %s19, 3
      %p217 = pnand %p215, %p216
      %p218 = pneg %p217
      // Predicated region
      $region9: #{_vae_forward_impl.1} parent=5 // pred_check
        _
      $region10: #{_vae_forward_impl.1} parent=5 // pred_check_branch
        %220 = sbr.rel (%p217) target = $region12
      $region11: #{_vae_forward_impl.1} parent=5 // pred_region
        %s221 = ssub.s32 %s19, 1
        // Predicated region
        $region13: #{_vae_forward_impl.1} parent=11 // pred_check
          %p222 = pneg %p66
        $region14: #{_vae_forward_impl.1} parent=11 // pred_check_branch
          %224 = sbr.rel (%p222) target = $region16
        $region15: #{_vae_forward_impl.1} parent=11 // pred_region
          _
        $region16: #{_vae_forward_impl.1} parent=11 // pred_fallthru
          _
        // Predicated region
        $region17: #{_vae_forward_impl.1} parent=11 // pred_check
          %p225 = pneg %p87
        $region18: #{_vae_forward_impl.1} parent=11 // pred_check_branch
          %227 = sbr.rel (%p225) target = $region20
        $region19: #{_vae_forward_impl.1} parent=11 // pred_region
          _
        $region20: #{_vae_forward_impl.1} parent=11 // pred_fallthru
          _
        // Predicated region
        $region21: #{_vae_forward_impl.1} parent=11 // pred_check
          %p228 = pneg %p108
        $region22: #{_vae_forward_impl.1} parent=11 // pred_check_branch
          %230 = sbr.rel (%p228) target = $region24
        $region23: #{_vae_forward_impl.1} parent=11 // pred_region
          %s232 = ssub.s32 2048, 2048
          %233 = vsyncadd [#allocation3], %s232
          %s234 = sshll.u32 [#allocation2], 4
          %s235 = int_to_ptr.vmem [resolvable:$true] %s234
          %240 = dma.hbm_to_vmem [thread:$0]  %s3, 2048, %s235, [#allocation3], 128, 128, 8
        $region24: #{_vae_forward_impl.1} parent=11 // pred_fallthru
          _
        // Predicated region
        $region25: #{_vae_forward_impl.1} parent=11 // pred_check
          %p241 = pneg %p129
        $region26: #{_vae_forward_impl.1} parent=11 // pred_check_branch
          %243 = sbr.rel (%p241) target = $region28
        $region27: #{_vae_forward_impl.1} parent=11 // pred_region
          %s245 = ssub.s32 1920, 1920
          %246 = vsyncadd [#allocation6], %s245
          %s247 = sshll.u32 [#allocation5], 4
          %s248 = int_to_ptr.vmem [resolvable:$true] %s247
          %253 = dma.hbm_to_vmem [thread:$0]  %s4, 1920, %s248, [#allocation6], 128, 128, 8
        $region28: #{_vae_forward_impl.1} parent=11 // pred_fallthru
          _
      $region12: #{_vae_forward_impl.1} parent=5 // pred_fallthru
        _
      %p254 = scmp.lt.s32.totalorder %s19, 2
      // Predicated region
      $region29: #{_vae_forward_impl.1} parent=5 // pred_check
        %p255 = pneg %p254
      $region30: #{_vae_forward_impl.1} parent=5 // pred_check_branch
        %257 = sbr.rel (%p255) target = $region32
      $region31: #{_vae_forward_impl.1} parent=5 // pred_region
        // Predicated region
        $region33: #{_vae_forward_impl.1} parent=31 // pred_check
          %p258 = pneg %p39
        $region34: #{_vae_forward_impl.1} parent=31 // pred_check_branch
          %260 = sbr.rel (%p258) target = $region36
        $region35: #{_vae_forward_impl.1} parent=31 // pred_region
          %p261 = scmp.lt.s32.totalorder %s19, 1
          %s262 = scalar_select %p261, %s19, 1
          %s263 = scalar_lea.vmem %s0, %s262
        $region36: #{_vae_forward_impl.1} parent=31 // pred_fallthru
          _
      $region32: #{_vae_forward_impl.1} parent=5 // pred_fallthru
        _
      %p264 = scmp.le.s32.totalorder 1, %s19
      %p265 = scmp.lt.s32.totalorder %s19, 3
      %p266 = pnand %p264, %p265
      %p267 = pneg %p266
      // Predicated region
      $region37: #{_vae_forward_impl.1} parent=5 // pred_check
        _
      $region38: #{_vae_forward_impl.1} parent=5 // pred_check_branch
        %269 = sbr.rel (%p266) target = $region40
      $region39: #{_vae_forward_impl.1} parent=5 // pred_region
        %s270 = ssub.s32 %s19, 1
        // Predicated region
        $region41: #{_vae_forward_impl.1} parent=39 // pred_check
          %p271 = pneg %p108
        $region42: #{_vae_forward_impl.1} parent=39 // pred_check_branch
          %273 = sbr.rel (%p271) target = $region44
        $region43: #{_vae_forward_impl.1} parent=39 // pred_region
          %274 = dma.done [#allocation3], 2048
        $region44: #{_vae_forward_impl.1} parent=39 // pred_fallthru
          _
        // Predicated region
        $region45: #{_vae_forward_impl.1} parent=39 // pred_check
          %p275 = pneg %p129
        $region46: #{_vae_forward_impl.1} parent=39 // pred_check_branch
          %277 = sbr.rel (%p275) target = $region48
        $region47: #{_vae_forward_impl.1} parent=39 // pred_region
          %278 = dma.done [#allocation6], 1920
        $region48: #{_vae_forward_impl.1} parent=39 // pred_fallthru
          _
        %p279 = scmp.lt.s32.totalorder %s24, 1
        %s280 = scalar_select %p279, %s24, 1
        %s281 = scalar_lea.vmem %s0, %s280
        %p282 = pneg %p45
        %p283 = pneg %p42
        %p284 = pneg %p66
        %p285 = pneg %p63
        %p286 = pneg %p87
        %p287 = pneg %p84
        %p288 = pneg %p108
        %p289 = pneg %p105
        %p290 = pneg %p129
        %p291 = pneg %p126
        %p292 = pneg %p155
        %p293 = pneg %p152
        %s294 = sand.u32 %s142, 1
        %s295 = scalar_lea.sflag [#allocation4], %s294
        %s296 = sand.u32 %s142, 1
        %s297 = scalar_lea.vmem [#allocation7], %s296
        %p298 = pneg %p181
        %p299 = pneg %p178
        %p300 = scmp.lt.s32.totalorder %s24, 1
        %s301 = scalar_select %p300, %s24, 1
        %s302 = smul.addr %s301, 8
        %s303 = scalar_lea.vmem %s6, %s302
        %p304 = pneg %p207
        %p305 = pneg %p204
        %p306 = scmp.lt.s32.totalorder %s24, 1
        %s307 = scalar_select %p306, %s24, 1
        %s308 = smul.addr %s307, 8
        %s309 = scalar_lea.vmem %s7, %s308
        %p310 = scmp.lt.s32.totalorder %s24, 1
        %s311 = scalar_select %p310, %s24, 1
        %s312 = scalar_lea.vmem %s0, %s311
        %p313 = scmp.lt.s32.totalorder %s24, 1
        %s314 = scalar_select %p313, %s24, 1
        %s315 = smul.addr %s314, 8
        %s316 = scalar_lea.vmem %s6, %s315
        %p317 = scmp.lt.s32.totalorder %s24, 1
        %s318 = scalar_select %p317, %s24, 1
        %s319 = smul.addr %s318, 8
        %s320 = scalar_lea.vmem %s7, %s319
        %v322 = vld [vmem:[%s312] sm:$0x1]
        %v324 = vlaneseq
        %v325 = vshrl.u32 %v324, 7
        %v326 = vsub.s32 0, %v325
        %v327 = vrot.slane %v322, %v326
        %328 = vrot.lane.b32.xlu0 %v327, 3
        %v329 = vpop.permute.xlu0 %328
        %vm331 = vcmask 23552
        %v332 = vsel %vm331, 0.0, %v329
        %v333 = vsel %vm331, %v329, 0.0
        %v336 = vrot.slane %v332, 7
        %v337 = vrot.slane %v333, 7
        %338 = vrot.lane.b32.xlu0 %v336, 127
        %v339 = vpop.permute.xlu0 %338
        %340 = vrot.lane.b32.xlu0 %v337, 127
        %v341 = vpop.permute.xlu0 %340
        %vm342 = vcmask 1039360
        %v343 = vsel %vm342, %v339, %v341
        %v345 = vrot.slane %v332, 6
        %v346 = vrot.slane %v333, 6
        %347 = vrot.lane.b32.xlu0 %v345, 126
        %v348 = vpop.permute.xlu0 %347
        %349 = vrot.lane.b32.xlu0 %v346, 126
        %v350 = vpop.permute.xlu0 %349
        %vm351 = vcmask 1031168
        %v352 = vsel %vm351, %v348, %v350
        %v354 = vrot.slane %v332, 5
        %v355 = vrot.slane %v333, 5
        %356 = vrot.lane.b32.xlu0 %v354, 125
        %v357 = vpop.permute.xlu0 %356
        %358 = vrot.lane.b32.xlu0 %v355, 125
        %v359 = vpop.permute.xlu0 %358
        %vm360 = vcmask 1022976
        %v361 = vsel %vm360, %v357, %v359
        %v363 = vrot.slane %v332, 4
        %v364 = vrot.slane %v333, 4
        %365 = vrot.lane.b32.xlu0 %v363, 124
        %v366 = vpop.permute.xlu0 %365
        %367 = vrot.lane.b32.xlu0 %v364, 124
        %v368 = vpop.permute.xlu0 %367
        %vm369 = vcmask 1014784
        %v370 = vsel %vm369, %v366, %v368
        %v372 = vrot.slane %v332, 3
        %v373 = vrot.slane %v333, 3
        %374 = vrot.lane.b32.xlu0 %v372, 123
        %v375 = vpop.permute.xlu0 %374
        %376 = vrot.lane.b32.xlu0 %v373, 123
        %v377 = vpop.permute.xlu0 %376
        %vm378 = vcmask 1006592
        %v379 = vsel %vm378, %v375, %v377
        %v381 = vrot.slane %v332, 2
        %v382 = vrot.slane %v333, 2
        %383 = vrot.lane.b32.xlu0 %v381, 122
        %v384 = vpop.permute.xlu0 %383
        %385 = vrot.lane.b32.xlu0 %v382, 122
        %v386 = vpop.permute.xlu0 %385
        %vm387 = vcmask 998400
        %v388 = vsel %vm387, %v384, %v386
        %vm390 = vcmask 1040384
        %v391 = vsel %vm390, %v332, %v343
        %vm392 = vcmask 1041408
        %v393 = vsel %vm392, %v391, %v352
        %vm394 = vcmask 1042432
        %v395 = vsel %vm394, %v393, %v361
        %vm396 = vcmask 1043456
        %v397 = vsel %vm396, %v395, %v370
        %vm398 = vcmask 1044480
        %v399 = vsel %vm398, %v397, %v379
        %vm400 = vcmask 1045504
        %v401 = vsel %vm400, %v399, %v388
        %v402 = vld [vmem:[%s1] sm:$0x3]
        %v403 = vld [vmem:[%s2] sm:$0xf]
        %v404 = vpack.c.bf16 %v401, %v401
        %406 = vset.pattern.permute.xlu0 0
        %407 = vperm.xlu0 %406, %v403
        %v408 = vpop.permute.xlu0 %407
        %vm410 = vcmask 56320
        %v412 = vsel %vm410, %v402, 0
        %v414 = vsel %vm394, 4294967295, 65535
        %v415 = vsel %vm396, %v414, 0
        %v417 = vand.u32 %v404, %v415
        %419 = vmatprep.subr.bf16.mxu0 0
        %420 = vmatpush1.bf16.msra.mxu0 %v417
        %421 = vmatprep.subr.bf16.mxu0 0
        %422 = vmatpush1.bf16.msra.mxu0 0
        %423 = vmatprep.subr.bf16.mxu0 0
        %424 = vmatpush1.bf16.msra.mxu0 0
        %425 = vmatprep.subr.bf16.mxu0 0
        %426 = vmatpush1.bf16.msra.mxu0 0
        %427 = vmatprep.subr.bf16.mxu0 0
        %428 = vmatpush1.bf16.msra.mxu0 0
        %429 = vmatprep.subr.bf16.mxu0 0
        %430 = vmatpush1.bf16.msra.mxu0 0
        %431 = vmatprep.subr.bf16.mxu0 0
        %432 = vmatpush1.bf16.msra.mxu0 0
        %433 = vmatprep.subr.bf16.mxu0 0
        %434 = vmatpush1.bf16.msra.mxu0 0
        %435 = vmatprep.subr.bf16.mxu0 0
        %436 = vmatpush1.bf16.msra.mxu0 0
        %437 = vmatprep.subr.bf16.mxu0 0
        %438 = vmatpush1.bf16.msra.mxu0 0
        %439 = vmatprep.subr.bf16.mxu0 0
        %440 = vmatpush1.bf16.msra.mxu0 0
        %441 = vmatprep.subr.bf16.mxu0 0
        %442 = vmatpush1.bf16.msra.mxu0 0
        %443 = vmatprep.subr.bf16.mxu0 0
        %444 = vmatpush1.bf16.msra.mxu0 0
        %445 = vmatprep.subr.bf16.mxu0 0
        %446 = vmatpush1.bf16.msra.mxu0 0
        %447 = vmatprep.subr.bf16.mxu0 0
        %448 = vmatpush1.bf16.msra.mxu0 0
        %449 = vmatprep.subr.bf16.mxu0 0
        %450 = vmatpush1.bf16.msra.mxu0 0
        %451 = vmatprep.mubr.bf16.mxu0 0
        %452 = vmatmul.mubr.bf16.gmra.mrb[0].mxu0 %v412
        %v453 = vpop.f32.mrb[0].mxu0
        %v454 = vadd.f32 %v408, %v453
        %v455 = vpop.f32.mrb[0].mxu0
        %v456 = vpop.f32.mrb[0].mxu0
        %v457 = vpop.f32.mrb[0].mxu0
        %458 = vdwg.mxu0
        %v459 = vxor.u32 %v454, 2147483648
        %v460 = vmul.f32 %v459, 1.442695
        %v461 = vpow.pop %v460
        %v462 = vadd.f32 %v461, 1.0
        %v463 = vrcp.pop %v462
        %v464 = vmul.f32 1.0, %v463
        %v465 = vmul.f32 %v454, %v464
        %467 = vrot.lane.b32.xlu0 %v465, 1
        %v468 = vpop.permute.xlu0 %467
        %vm470 = vcmask 7168
        %v471 = vsel %vm470, 0.0, %v468
        %v472 = vsel %vm470, %v468, 0.0
        %v475 = vrot.slane %v471, 4
        %v476 = vrot.slane %v472, 4
        %477 = vrot.lane.b32.xlu0 %v475, 127
        %v478 = vpop.permute.xlu0 %477
        %479 = vrot.lane.b32.xlu0 %v476, 127
        %v480 = vpop.permute.xlu0 %479
        %v481 = vsel %vm342, %v478, %v480
        %483 = vrot.lane.b32.xlu0 %v471, 126
        %v484 = vpop.permute.xlu0 %483
        %485 = vrot.lane.b32.xlu0 %v472, 126
        %v486 = vpop.permute.xlu0 %485
        %v487 = vsel %vm351, %v484, %v486
        %v489 = vsel %vm396, %v471, %v481
        %v490 = vld [vmem:[#allocation2] sm:$0xff]
        %v491 = vld [vmem:[#allocation2 + $0x8] sm:$0xff]
        %v492 = vld [vmem:[#allocation2 + $0x10] sm:$0xff]
        %v493 = vld [vmem:[#allocation2 + $0x18] sm:$0xff]
        %v494 = vld [vmem:[#allocation2 + $0x20] sm:$0xff]
        %v495 = vld [vmem:[#allocation2 + $0x28] sm:$0xff]
        %v496 = vld [vmem:[#allocation2 + $0x30] sm:$0xff]
        %v497 = vld [vmem:[#allocation2 + $0x38] sm:$0xff]
        %v498 = vld [vmem:[#allocation2 + $0x40] sm:$0xff]
        %v499 = vld [vmem:[#allocation2 + $0x48] sm:$0xff]
        %v500 = vld [vmem:[#allocation2 + $0x50] sm:$0xff]
        %v501 = vld [vmem:[#allocation2 + $0x58] sm:$0xff]
        %v502 = vld [vmem:[#allocation2 + $0x60] sm:$0xff]
        %v503 = vld [vmem:[#allocation2 + $0x68] sm:$0xff]
        %v504 = vld [vmem:[#allocation2 + $0x70] sm:$0xff]
        %v505 = vld [vmem:[#allocation2 + $0x78] sm:$0xff]
        %506 = vmatprep.subr.mxu0 0.0
        %507 = vmatpush1.msra.mxu0 %v490
        %508 = vmatprep.subr.mxu0 0.0
        %509 = vmatpush1.msra.mxu0 %v491
        %510 = vmatprep.subr.mxu0 0.0
        %511 = vmatpush1.msra.mxu0 %v492
        %512 = vmatprep.subr.mxu0 0.0
        %513 = vmatpush1.msra.mxu0 %v493
        %514 = vmatprep.subr.mxu0 0.0
        %515 = vmatpush1.msra.mxu0 %v494
        %516 = vmatprep.subr.mxu0 0.0
        %517 = vmatpush1.msra.mxu0 %v495
        %518 = vmatprep.subr.mxu0 0.0
        %519 = vmatpush1.msra.mxu0 %v496
        %520 = vmatprep.subr.mxu0 0.0
        %521 = vmatpush1.msra.mxu0 %v497
        %522 = vmatprep.subr.mxu0 0.0
        %523 = vmatpush1.msra.mxu0 %v498
        %524 = vmatprep.subr.mxu0 0.0
        %525 = vmatpush1.msra.mxu0 %v499
        %526 = vmatprep.subr.mxu0 0.0
        %527 = vmatpush1.msra.mxu0 %v500
        %528 = vmatprep.subr.mxu0 0.0
        %529 = vmatpush1.msra.mxu0 %v501
        %530 = vmatprep.subr.mxu0 0.0
        %531 = vmatpush1.msra.mxu0 %v502
        %532 = vmatprep.subr.mxu0 0.0
        %533 = vmatpush1.msra.mxu0 %v503
        %534 = vmatprep.subr.mxu0 0.0
        %535 = vmatpush1.msra.mxu0 %v504
        %536 = vmatprep.subr.mxu0 0.0
        %537 = vmatpush1.msra.mxu0 %v505
        %538 = vmatprep.subr.mxu0 0.0
        %539 = vmatpush1.msra.mxu0 0.0
        %540 = vmatprep.subr.mxu0 0.0
        %541 = vmatpush1.msra.mxu0 0.0
        %542 = vmatprep.subr.mxu0 0.0
        %543 = vmatpush1.msra.mxu0 0.0
        %544 = vmatprep.subr.mxu0 0.0
        %545 = vmatpush1.msra.mxu0 0.0
        %546 = vmatprep.subr.mxu0 0.0
        %547 = vmatpush1.msra.mxu0 0.0
        %548 = vmatprep.subr.mxu0 0.0
        %549 = vmatpush1.msra.mxu0 0.0
        %550 = vmatprep.subr.mxu0 0.0
        %551 = vmatpush1.msra.mxu0 0.0
        %552 = vmatprep.subr.mxu0 0.0
        %553 = vmatpush1.msra.mxu0 0.0
        %554 = vmatprep.subr.mxu0 0.0
        %555 = vmatpush1.msra.mxu0 0.0
        %556 = vmatprep.subr.mxu0 0.0
        %557 = vmatpush1.msra.mxu0 0.0
        %558 = vmatprep.subr.mxu0 0.0
        %559 = vmatpush1.msra.mxu0 0.0
        %560 = vmatprep.subr.mxu0 0.0
        %561 = vmatpush1.msra.mxu0 0.0
        %562 = vmatprep.subr.mxu0 0.0
        %563 = vmatpush1.msra.mxu0 0.0
        %564 = vmatprep.subr.mxu0 0.0
        %565 = vmatpush1.msra.mxu0 0.0
        %566 = vmatprep.subr.mxu0 0.0
        %567 = vmatpush1.msra.mxu0 0.0
        %568 = vmatprep.subr.mxu0 0.0
        %569 = vmatpush1.msra.mxu0 0.0
        %570 = vmatprep.mubr.f32.mxu0 0.0
        %571 = vmatmul.mubr.f32.gmra.mrb[0].mxu0 %v489
        %v572 = vpop.f32.mrb[0].mxu0
        %v573 = vadd.f32 0.0, %v572
        %v574 = vpop.f32.mrb[0].mxu0
        %575 = vmatprep.mubr.f32.mxu0 0.0
        %576 = vmatmul.mubr.f32.gmra.mrb[0].mxu0 %v487
        %v577 = vpop.f32.mrb[0].mxu0
        %v578 = vadd.f32 0.0, %v577
        %v579 = vpop.f32.mrb[0].mxu0
        %580 = vdwg.mxu0
        %v581 = vld [vmem:[%s1 + $0x18] sm:$0xf]
        %v582 = vld [vmem:[%s2 + $0x18] sm:$0xff]
        %v583 = vpack.c.bf16 %v578, %v573
        %585 = vset.pattern.permute.xlu0 0
        %586 = vperm.xlu0 %585, %v582
        %v587 = vpop.permute.xlu0 %586
        %vm589 = vcmask 97280
        %v591 = vsel %vm589, %v581, 0
        %v594 = vsel %vm400, %v583, 0
        %596 = vmatprep.subr.bf16.mxu0 0
        %597 = vmatpush1.bf16.msra.mxu0 %v594
        %598 = vmatprep.subr.bf16.mxu0 0
        %599 = vmatpush1.bf16.msra.mxu0 0
        %600 = vmatprep.subr.bf16.mxu0 0
        %601 = vmatpush1.bf16.msra.mxu0 0
        %602 = vmatprep.subr.bf16.mxu0 0
        %603 = vmatpush1.bf16.msra.mxu0 0
        %604 = vmatprep.subr.bf16.mxu0 0
        %605 = vmatpush1.bf16.msra.mxu0 0
        %606 = vmatprep.subr.bf16.mxu0 0
        %607 = vmatpush1.bf16.msra.mxu0 0
        %608 = vmatprep.subr.bf16.mxu0 0
        %609 = vmatpush1.bf16.msra.mxu0 0
        %610 = vmatprep.subr.bf16.mxu0 0
        %611 = vmatpush1.bf16.msra.mxu0 0
        %612 = vmatprep.subr.bf16.mxu0 0
        %613 = vmatpush1.bf16.msra.mxu0 0
        %614 = vmatprep.subr.bf16.mxu0 0
        %615 = vmatpush1.bf16.msra.mxu0 0
        %616 = vmatprep.subr.bf16.mxu0 0
        %617 = vmatpush1.bf16.msra.mxu0 0
        %618 = vmatprep.subr.bf16.mxu0 0
        %619 = vmatpush1.bf16.msra.mxu0 0
        %620 = vmatprep.subr.bf16.mxu0 0
        %621 = vmatpush1.bf16.msra.mxu0 0
        %622 = vmatprep.subr.bf16.mxu0 0
        %623 = vmatpush1.bf16.msra.mxu0 0
        %624 = vmatprep.subr.bf16.mxu0 0
        %625 = vmatpush1.bf16.msra.mxu0 0
        %626 = vmatprep.subr.bf16.mxu0 0
        %627 = vmatpush1.bf16.msra.mxu0 0
        %628 = vmatprep.mubr.bf16.mxu0 0
        %629 = vmatmul.mubr.bf16.gmra.mrb[0].mxu0 %v591
        %v630 = vpop.f32.mrb[0].mxu0
        %v631 = vadd.f32 %v587, %v630
        %v632 = vpop.f32.mrb[0].mxu0
        %v633 = vpop.f32.mrb[0].mxu0
        %v634 = vpop.f32.mrb[0].mxu0
        %635 = vdwg.mxu0
        %v636 = vld [vmem:[%s1 + $0x8] sm:$0x3]
        %v637 = vld [vmem:[%s2 + $0x8] sm:$0xf]
        %639 = vset.pattern.permute.xlu0 0
        %640 = vperm.xlu0 %639, %v637
        %v641 = vpop.permute.xlu0 %640
        %v644 = vsel %vm589, %v636, 0
        %646 = vmatprep.subr.bf16.mxu0 0
        %647 = vmatpush1.bf16.msra.mxu0 %v594
        %648 = vmatprep.subr.bf16.mxu0 0
        %649 = vmatpush1.bf16.msra.mxu0 0
        %650 = vmatprep.subr.bf16.mxu0 0
        %651 = vmatpush1.bf16.msra.mxu0 0
        %652 = vmatprep.subr.bf16.mxu0 0
        %653 = vmatpush1.bf16.msra.mxu0 0
        %654 = vmatprep.subr.bf16.mxu0 0
        %655 = vmatpush1.bf16.msra.mxu0 0
        %656 = vmatprep.subr.bf16.mxu0 0
        %657 = vmatpush1.bf16.msra.mxu0 0
        %658 = vmatprep.subr.bf16.mxu0 0
        %659 = vmatpush1.bf16.msra.mxu0 0
        %660 = vmatprep.subr.bf16.mxu0 0
        %661 = vmatpush1.bf16.msra.mxu0 0
        %662 = vmatprep.subr.bf16.mxu0 0
        %663 = vmatpush1.bf16.msra.mxu0 0
        %664 = vmatprep.subr.bf16.mxu0 0
        %665 = vmatpush1.bf16.msra.mxu0 0
        %666 = vmatprep.subr.bf16.mxu0 0
        %667 = vmatpush1.bf16.msra.mxu0 0
        %668 = vmatprep.subr.bf16.mxu0 0
        %669 = vmatpush1.bf16.msra.mxu0 0
        %670 = vmatprep.subr.bf16.mxu0 0
        %671 = vmatpush1.bf16.msra.mxu0 0
        %672 = vmatprep.subr.bf16.mxu0 0
        %673 = vmatpush1.bf16.msra.mxu0 0
        %674 = vmatprep.subr.bf16.mxu0 0
        %675 = vmatpush1.bf16.msra.mxu0 0
        %676 = vmatprep.subr.bf16.mxu0 0
        %677 = vmatpush1.bf16.msra.mxu0 0
        %678 = vmatprep.mubr.bf16.mxu0 0
        %679 = vmatmul.mubr.bf16.gmra.mrb[0].mxu0 %v644
        %v680 = vpop.f32.mrb[0].mxu0
        %v681 = vadd.f32 %v641, %v680
        %v682 = vpop.f32.mrb[0].mxu0
        %v683 = vpop.f32.mrb[0].mxu0
        %v684 = vpop.f32.mrb[0].mxu0
        %685 = vdwg.mxu0
        %v686 = vxor.u32 %v681, 2147483648
        %v687 = vmul.f32 %v686, 1.442695
        %v688 = vpow.pop %v687
        %v689 = vadd.f32 %v688, 1.0
        %v690 = vrcp.pop %v689
        %v691 = vmul.f32 1.0, %v690
        %v692 = vmul.f32 %v681, %v691
        %694 = vrot.lane.b32.xlu0 %v692, 1
        %v695 = vpop.permute.xlu0 %694
        %v697 = vsel %vm470, 0.0, %v695
        %vm698 = vcmask 531456
        %v699 = vsel %vm698, %v697, 0.0
        %v701 = vrot.slane %v699, 4
        %702 = vrot.lane.b32.xlu0 %v701, 127
        %v703 = vpop.permute.xlu0 %702
        %705 = vrot.lane.b32.xlu0 %v699, 126
        %v706 = vpop.permute.xlu0 %705
        %v708 = vsel %vm396, %v699, %v703
        %v709 = vld [vmem:[%s1 + $0x10] sm:$0xf]
        %v710 = vld [vmem:[%s2 + $0x10] sm:$0xff]
        %v711 = vpack.c.bf16 %v706, %v708
        %713 = vset.pattern.permute.xlu0 0
        %714 = vperm.xlu0 %713, %v710
        %v715 = vpop.permute.xlu0 %714
        %v718 = vsel %vm589, %v709, 0
        %v721 = vsel %vm400, %v711, 0
        %723 = vmatprep.subr.bf16.mxu0 0
        %724 = vmatpush1.bf16.msra.mxu0 %v721
        %725 = vmatprep.subr.bf16.mxu0 0
        %726 = vmatpush1.bf16.msra.mxu0 0
        %727 = vmatprep.subr.bf16.mxu0 0
        %728 = vmatpush1.bf16.msra.mxu0 0
        %729 = vmatprep.subr.bf16.mxu0 0
        %730 = vmatpush1.bf16.msra.mxu0 0
        %731 = vmatprep.subr.bf16.mxu0 0
        %732 = vmatpush1.bf16.msra.mxu0 0
        %733 = vmatprep.subr.bf16.mxu0 0
        %734 = vmatpush1.bf16.msra.mxu0 0
        %735 = vmatprep.subr.bf16.mxu0 0
        %736 = vmatpush1.bf16.msra.mxu0 0
        %737 = vmatprep.subr.bf16.mxu0 0
        %738 = vmatpush1.bf16.msra.mxu0 0
        %739 = vmatprep.subr.bf16.mxu0 0
        %740 = vmatpush1.bf16.msra.mxu0 0
        %741 = vmatprep.subr.bf16.mxu0 0
        %742 = vmatpush1.bf16.msra.mxu0 0
        %743 = vmatprep.subr.bf16.mxu0 0
        %744 = vmatpush1.bf16.msra.mxu0 0
        %745 = vmatprep.subr.bf16.mxu0 0
        %746 = vmatpush1.bf16.msra.mxu0 0
        %747 = vmatprep.subr.bf16.mxu0 0
        %748 = vmatpush1.bf16.msra.mxu0 0
        %749 = vmatprep.subr.bf16.mxu0 0
        %750 = vmatpush1.bf16.msra.mxu0 0
        %751 = vmatprep.subr.bf16.mxu0 0
        %752 = vmatpush1.bf16.msra.mxu0 0
        %753 = vmatprep.subr.bf16.mxu0 0
        %754 = vmatpush1.bf16.msra.mxu0 0
        %755 = vmatprep.mubr.bf16.mxu0 0
        %756 = vmatmul.mubr.bf16.gmra.mrb[0].mxu0 %v718
        %v757 = vpop.f32.mrb[0].mxu0
        %v758 = vadd.f32 %v715, %v757
        %v759 = vpop.f32.mrb[0].mxu0
        %v760 = vpop.f32.mrb[0].mxu0
        %v761 = vpop.f32.mrb[0].mxu0
        %762 = vdwg.mxu0
        %v763 = vadd.f32 %v758, %v631
        %v764 = vxor.u32 %v763, 2147483648
        %v765 = vmul.f32 %v764, 1.442695
        %v766 = vpow.pop %v765
        %v767 = vadd.f32 %v766, 1.0
        %v768 = vrcp.pop %v767
        %v769 = vmul.f32 1.0, %v768
        %v770 = vmul.f32 %v763, %v769
        %772 = vrot.lane.b32.xlu0 %v770, 1
        %v773 = vpop.permute.xlu0 %772
        %v775 = vsel %vm470, 0.0, %v773
        %v776 = vsel %vm698, %v775, 0.0
        %778 = vrot.lane.b32.xlu0 %v776, 127
        %v779 = vpop.permute.xlu0 %778
        %780 = vrot.lane.b32.xlu0 %v776, 126
        %v781 = vpop.permute.xlu0 %780
        %v782 = vld [vmem:[#allocation2] sm:$0xff]
        %v783 = vld [vmem:[#allocation2 + $0x8] sm:$0xff]
        %v784 = vld [vmem:[#allocation2 + $0x10] sm:$0xff]
        %v785 = vld [vmem:[#allocation2 + $0x18] sm:$0xff]
        %v786 = vld [vmem:[#allocation2 + $0x20] sm:$0xff]
        %v787 = vld [vmem:[#allocation2 + $0x28] sm:$0xff]
        %v788 = vld [vmem:[#allocation2 + $0x30] sm:$0xff]
        %v789 = vld [vmem:[#allocation2 + $0x38] sm:$0xff]
        %vm790 = vcmask 523264
        %v791 = vsel %vm790, %v776, 0
        %v793 = vsel %vm790, %v779, 0
        %v795 = vsel %vm790, %v781, 0
        %797 = vmatprep.subr.mxu0 0.0
        %798 = vmatpush1.msra.mxu0 %v782
        %799 = vmatprep.subr.mxu0 0.0
        %800 = vmatpush1.msra.mxu0 %v783
        %801 = vmatprep.subr.mxu0 0.0
        %802 = vmatpush1.msra.mxu0 %v784
        %803 = vmatprep.subr.mxu0 0.0
        %804 = vmatpush1.msra.mxu0 %v785
        %805 = vmatprep.subr.mxu0 0.0
        %806 = vmatpush1.msra.mxu0 %v786
        %807 = vmatprep.subr.mxu0 0.0
        %808 = vmatpush1.msra.mxu0 %v787
        %809 = vmatprep.subr.mxu0 0.0
        %810 = vmatpush1.msra.mxu0 %v788
        %811 = vmatprep.subr.mxu0 0.0
        %812 = vmatpush1.msra.mxu0 %v789
        %813 = vmatprep.subr.mxu0 0.0
        %814 = vmatpush1.msra.mxu0 0.0
        %815 = vmatprep.subr.mxu0 0.0
        %816 = vmatpush1.msra.mxu0 0.0
        %817 = vmatprep.subr.mxu0 0.0
        %818 = vmatpush1.msra.mxu0 0.0
        %819 = vmatprep.subr.mxu0 0.0
        %820 = vmatpush1.msra.mxu0 0.0
        %821 = vmatprep.subr.mxu0 0.0
        %822 = vmatpush1.msra.mxu0 0.0
        %823 = vmatprep.subr.mxu0 0.0
        %824 = vmatpush1.msra.mxu0 0.0
        %825 = vmatprep.subr.mxu0 0.0
        %826 = vmatpush1.msra.mxu0 0.0
        %827 = vmatprep.subr.mxu0 0.0
        %828 = vmatpush1.msra.mxu0 0.0
        %829 = vmatprep.subr.mxu0 0.0
        %830 = vmatpush1.msra.mxu0 0.0
        %831 = vmatprep.subr.mxu0 0.0
        %832 = vmatpush1.msra.mxu0 0.0
        %833 = vmatprep.subr.mxu0 0.0
        %834 = vmatpush1.msra.mxu0 0.0
        %835 = vmatprep.subr.mxu0 0.0
        %836 = vmatpush1.msra.mxu0 0.0
        %837 = vmatprep.subr.mxu0 0.0
        %838 = vmatpush1.msra.mxu0 0.0
        %839 = vmatprep.subr.mxu0 0.0
        %840 = vmatpush1.msra.mxu0 0.0
        %841 = vmatprep.subr.mxu0 0.0
        %842 = vmatpush1.msra.mxu0 0.0
        %843 = vmatprep.subr.mxu0 0.0
        %844 = vmatpush1.msra.mxu0 0.0
        %845 = vmatprep.subr.mxu0 0.0
        %846 = vmatpush1.msra.mxu0 0.0
        %847 = vmatprep.subr.mxu0 0.0
        %848 = vmatpush1.msra.mxu0 0.0
        %849 = vmatprep.subr.mxu0 0.0
        %850 = vmatpush1.msra.mxu0 0.0
        %851 = vmatprep.subr.mxu0 0.0
        %852 = vmatpush1.msra.mxu0 0.0
        %853 = vmatprep.subr.mxu0 0.0
        %854 = vmatpush1.msra.mxu0 0.0
        %855 = vmatprep.subr.mxu0 0.0
        %856 = vmatpush1.msra.mxu0 0.0
        %857 = vmatprep.subr.mxu0 0.0
        %858 = vmatpush1.msra.mxu0 0.0
        %859 = vmatprep.subr.mxu0 0.0
        %860 = vmatpush1.msra.mxu0 0.0
        %861 = vmatprep.mubr.f32.mxu0 0.0
        %862 = vmatmul.mubr.f32.gmra.mrb[0].mxu0 %v791
        %v863 = vpop.f32.mrb[0].mxu0
        %v864 = vadd.f32 0.0, %v863
        %v865 = vpop.f32.mrb[0].mxu0
        %866 = vmatprep.mubr.f32.mxu0 0.0
        %867 = vmatmul.mubr.f32.gmra.mrb[0].mxu0 %v793
        %v868 = vpop.f32.mrb[0].mxu0
        %v869 = vadd.f32 0.0, %v868
        %v870 = vpop.f32.mrb[0].mxu0
        %871 = vmatprep.mubr.f32.mxu0 0.0
        %872 = vmatmul.mubr.f32.gmra.mrb[0].mxu0 %v795
        %v873 = vpop.f32.mrb[0].mxu0
        %v874 = vadd.f32 0.0, %v873
        %v875 = vpop.f32.mrb[0].mxu0
        %876 = vdwg.mxu0
        %v877 = vld [vmem:[%s1 + $0x38] sm:$0xf]
        %v878 = vld [vmem:[%s1 + $0x40] sm:$0xf]
        %v879 = vld [vmem:[%s2 + $0x38] sm:$0xff]
        %v880 = vld [vmem:[%s2 + $0x40] sm:$0xff]
        %v881 = vpack.c.bf16 %v869, %v864
        %v882 = vpack.c.bf16 %v874, %v874
        %884 = vset.pattern.permute.xlu0 0
        %885 = vperm.xlu0 %884, %v879
        %v886 = vpop.permute.xlu0 %885
        %889 = vset.pattern.permute.xlu0 0
        %890 = vperm.xlu0 %889, %v880
        %v891 = vpop.permute.xlu0 %890
        %v895 = vunpack.c.l.b16 %v877
        %v896 = vunpack.c.l.b16 %v878
        %v897 = vpack.c.b16 %v896, %v895
        %vm898 = vcmask 195584
        %v900 = vsel %vm898, %v897, 0
        %v903 = vsel %vm396, %v882, 0
        %905 = vmatprep.subr.bf16.mxu0 0
        %906 = vmatpush1.bf16.msra.mxu0 %v881
        %907 = vmatprep.subr.bf16.mxu0 0
        %908 = vmatpush1.bf16.msra.mxu0 %v903
        %909 = vmatprep.subr.bf16.mxu0 0
        %910 = vmatpush1.bf16.msra.mxu0 0
        %911 = vmatprep.subr.bf16.mxu0 0
        %912 = vmatpush1.bf16.msra.mxu0 0
        %913 = vmatprep.subr.bf16.mxu0 0
        %914 = vmatpush1.bf16.msra.mxu0 0
        %915 = vmatprep.subr.bf16.mxu0 0
        %916 = vmatpush1.bf16.msra.mxu0 0
        %917 = vmatprep.subr.bf16.mxu0 0
        %918 = vmatpush1.bf16.msra.mxu0 0
        %919 = vmatprep.subr.bf16.mxu0 0
        %920 = vmatpush1.bf16.msra.mxu0 0
        %921 = vmatprep.subr.bf16.mxu0 0
        %922 = vmatpush1.bf16.msra.mxu0 0
        %923 = vmatprep.subr.bf16.mxu0 0
        %924 = vmatpush1.bf16.msra.mxu0 0
        %925 = vmatprep.subr.bf16.mxu0 0
        %926 = vmatpush1.bf16.msra.mxu0 0
        %927 = vmatprep.subr.bf16.mxu0 0
        %928 = vmatpush1.bf16.msra.mxu0 0
        %929 = vmatprep.subr.bf16.mxu0 0
        %930 = vmatpush1.bf16.msra.mxu0 0
        %931 = vmatprep.subr.bf16.mxu0 0
        %932 = vmatpush1.bf16.msra.mxu0 0
        %933 = vmatprep.subr.bf16.mxu0 0
        %934 = vmatpush1.bf16.msra.mxu0 0
        %935 = vmatprep.subr.bf16.mxu0 0
        %936 = vmatpush1.bf16.msra.mxu0 0
        %937 = vmatprep.mubr.bf16.mxu0 0
        %938 = vmatmul.mubr.bf16.gmra.mrb[0].mxu0 %v900
        %v939 = vpop.f32.mrb[0].mxu0
        %v940 = vadd.f32 %v886, %v939
        %v941 = vpop.f32.mrb[0].mxu0
        %v942 = vpop.f32.mrb[0].mxu0
        %v943 = vadd.f32 %v891, %v942
        %v944 = vpop.f32.mrb[0].mxu0
        %945 = vdwg.mxu0
        %v946 = vld [vmem:[%s1 + $0x20] sm:$0xf]
        %v947 = vld [vmem:[%s2 + $0x20] sm:$0xff]
        %949 = vset.pattern.permute.xlu0 0
        %950 = vperm.xlu0 %949, %v947
        %v951 = vpop.permute.xlu0 %950
        %v954 = vsel %vm898, %v946, 0
        %956 = vmatprep.subr.bf16.mxu0 0
        %957 = vmatpush1.bf16.msra.mxu0 %v881
        %958 = vmatprep.subr.bf16.mxu0 0
        %959 = vmatpush1.bf16.msra.mxu0 %v903
        %960 = vmatprep.subr.bf16.mxu0 0
        %961 = vmatpush1.bf16.msra.mxu0 0
        %962 = vmatprep.subr.bf16.mxu0 0
        %963 = vmatpush1.bf16.msra.mxu0 0
        %964 = vmatprep.subr.bf16.mxu0 0
        %965 = vmatpush1.bf16.msra.mxu0 0
        %966 = vmatprep.subr.bf16.mxu0 0
        %967 = vmatpush1.bf16.msra.mxu0 0
        %968 = vmatprep.subr.bf16.mxu0 0
        %969 = vmatpush1.bf16.msra.mxu0 0
        %970 = vmatprep.subr.bf16.mxu0 0
        %971 = vmatpush1.bf16.msra.mxu0 0
        %972 = vmatprep.subr.bf16.mxu0 0
        %973 = vmatpush1.bf16.msra.mxu0 0
        %974 = vmatprep.subr.bf16.mxu0 0
        %975 = vmatpush1.bf16.msra.mxu0 0
        %976 = vmatprep.subr.bf16.mxu0 0
        %977 = vmatpush1.bf16.msra.mxu0 0
        %978 = vmatprep.subr.bf16.mxu0 0
        %979 = vmatpush1.bf16.msra.mxu0 0
        %980 = vmatprep.subr.bf16.mxu0 0
        %981 = vmatpush1.bf16.msra.mxu0 0
        %982 = vmatprep.subr.bf16.mxu0 0
        %983 = vmatpush1.bf16.msra.mxu0 0
        %984 = vmatprep.subr.bf16.mxu0 0
        %985 = vmatpush1.bf16.msra.mxu0 0
        %986 = vmatprep.subr.bf16.mxu0 0
        %987 = vmatpush1.bf16.msra.mxu0 0
        %988 = vmatprep.mubr.bf16.mxu0 0
        %989 = vmatmul.mubr.bf16.gmra.mrb[0].mxu0 %v954
        %v990 = vpop.f32.mrb[0].mxu0
        %v991 = vadd.f32 %v951, %v990
        %v992 = vpop.f32.mrb[0].mxu0
        %v993 = vpop.f32.mrb[0].mxu0
        %v994 = vpop.f32.mrb[0].mxu0
        %995 = vdwg.mxu0
        %v996 = vxor.u32 %v991, 2147483648
        %v997 = vmul.f32 %v996, 1.442695
        %v998 = vpow.pop %v997
        %v999 = vadd.f32 %v998, 1.0
        %v1000 = vrcp.pop %v999
        %v1001 = vmul.f32 1.0, %v1000
        %v1002 = vmul.f32 %v991, %v1001
        %1004 = vrot.lane.b32.xlu0 %v1002, 1
        %v1005 = vpop.permute.xlu0 %1004
        %v1007 = vsel %vm470, 0.0, %v1005
        %vm1008 = vcmask 269312
        %v1009 = vsel %vm1008, %v1007, 0.0
        %1011 = vrot.lane.b32.xlu0 %v1009, 127
        %v1012 = vpop.permute.xlu0 %1011
        %1014 = vrot.lane.b32.xlu0 %v1009, 126
        %v1015 = vpop.permute.xlu0 %1014
        %v1017 = vld [vmem:[%s1 + $0x28] sm:$0xf]
        %v1018 = vld [vmem:[%s1 + $0x30] sm:$0xf]
        %v1019 = vld [vmem:[%s2 + $0x28] sm:$0xff]
        %v1020 = vld [vmem:[%s2 + $0x30] sm:$0xff]
        %v1021 = vpack.c.bf16 %v1012, %v1009
        %v1022 = vpack.c.bf16 %v1015, %v1015
        %1024 = vset.pattern.permute.xlu0 0
        %1025 = vperm.xlu0 %1024, %v1019
        %v1026 = vpop.permute.xlu0 %1025
        %1029 = vset.pattern.permute.xlu0 0
        %1030 = vperm.xlu0 %1029, %v1020
        %v1031 = vpop.permute.xlu0 %1030
        %v1035 = vunpack.c.l.b16 %v1017
        %v1036 = vunpack.c.l.b16 %v1018
        %v1037 = vpack.c.b16 %v1036, %v1035
        %v1039 = vsel %vm898, %v1037, 0
        %v1042 = vsel %vm396, %v1022, 0
        %1044 = vmatprep.subr.bf16.mxu0 0
        %1045 = vmatpush1.bf16.msra.mxu0 %v1021
        %1046 = vmatprep.subr.bf16.mxu0 0
        %1047 = vmatpush1.bf16.msra.mxu0 %v1042
        %1048 = vmatprep.subr.bf16.mxu0 0
        %1049 = vmatpush1.bf16.msra.mxu0 0
        %1050 = vmatprep.subr.bf16.mxu0 0
        %1051 = vmatpush1.bf16.msra.mxu0 0
        %1052 = vmatprep.subr.bf16.mxu0 0
        %1053 = vmatpush1.bf16.msra.mxu0 0
        %1054 = vmatprep.subr.bf16.mxu0 0
        %1055 = vmatpush1.bf16.msra.mxu0 0
        %1056 = vmatprep.subr.bf16.mxu0 0
        %1057 = vmatpush1.bf16.msra.mxu0 0
        %1058 = vmatprep.subr.bf16.mxu0 0
        %1059 = vmatpush1.bf16.msra.mxu0 0
        %1060 = vmatprep.subr.bf16.mxu0 0
        %1061 = vmatpush1.bf16.msra.mxu0 0
        %1062 = vmatprep.subr.bf16.mxu0 0
        %1063 = vmatpush1.bf16.msra.mxu0 0
        %1064 = vmatprep.subr.bf16.mxu0 0
        %1065 = vmatpush1.bf16.msra.mxu0 0
        %1066 = vmatprep.subr.bf16.mxu0 0
        %1067 = vmatpush1.bf16.msra.mxu0 0
        %1068 = vmatprep.subr.bf16.mxu0 0
        %1069 = vmatpush1.bf16.msra.mxu0 0
        %1070 = vmatprep.subr.bf16.mxu0 0
        %1071 = vmatpush1.bf16.msra.mxu0 0
        %1072 = vmatprep.subr.bf16.mxu0 0
        %1073 = vmatpush1.bf16.msra.mxu0 0
        %1074 = vmatprep.subr.bf16.mxu0 0
        %1075 = vmatpush1.bf16.msra.mxu0 0
        %1076 = vmatprep.mubr.bf16.mxu0 0
        %1077 = vmatmul.mubr.bf16.gmra.mrb[0].mxu0 %v1039
        %v1078 = vpop.f32.mrb[0].mxu0
        %v1079 = vadd.f32 %v1026, %v1078
        %v1080 = vpop.f32.mrb[0].mxu0
        %v1081 = vpop.f32.mrb[0].mxu0
        %v1082 = vadd.f32 %v1031, %v1081
        %v1083 = vpop.f32.mrb[0].mxu0
        %1084 = vdwg.mxu0
        %v1085 = vadd.f32 %v1079, %v940
        %v1086 = vadd.f32 %v1082, %v943
        %v1087 = vxor.u32 %v1085, 2147483648
        %v1088 = vxor.u32 %v1086, 2147483648
        %v1089 = vmul.f32 %v1087, 1.442695
        %v1090 = vpow.pop %v1089
        %v1091 = vmul.f32 %v1088, 1.442695
        %v1092 = vpow.pop %v1091
        %v1093 = vadd.f32 %v1090, 1.0
        %v1094 = vadd.f32 %v1092, 1.0
        %v1095 = vrcp.pop %v1093
        %v1096 = vmul.f32 1.0, %v1095
        %v1097 = vrcp.pop %v1094
        %v1098 = vmul.f32 1.0, %v1097
        %v1099 = vmul.f32 %v1085, %v1096
        %v1100 = vmul.f32 %v1086, %v1098
        %1103 = vrot.lane.b32.xlu0 %v1099, 1
        %v1104 = vpop.permute.xlu0 %1103
        %1105 = vrot.lane.b32.xlu0 %v1100, 1
        %v1106 = vpop.permute.xlu0 %1105
        %v1109 = vsel %vm470, 0.0, %v1104
        %v1110 = vsel %vm470, 0.0, %v1106
        %v1111 = vsel %vm1008, %v1109, 0.0
        %v1112 = vsel %vm1008, %v1110, 0.0
        %1115 = vrot.lane.b32.xlu0 %v1111, 127
        %v1116 = vpop.permute.xlu0 %1115
        %1117 = vrot.lane.b32.xlu0 %v1112, 127
        %v1118 = vpop.permute.xlu0 %1117
        %1119 = vrot.lane.b32.xlu0 %v1111, 126
        %v1120 = vpop.permute.xlu0 %1119
        %1121 = vrot.lane.b32.xlu0 %v1112, 126
        %v1122 = vpop.permute.xlu0 %1121
        %v1123 = vld [vmem:[#allocation2] sm:$0xff]
        %v1124 = vld [vmem:[#allocation2 + $0x8] sm:$0xff]
        %v1125 = vld [vmem:[#allocation2 + $0x10] sm:$0xff]
        %v1126 = vld [vmem:[#allocation2 + $0x18] sm:$0xff]
        %vm1127 = vcmask 261120
        %v1128 = vsel %vm1127, %v1111, 0
        %v1130 = vsel %vm1127, %v1112, 0
        %v1132 = vsel %vm1127, %v1116, 0
        %v1134 = vsel %vm1127, %v1118, 0
        %v1136 = vsel %vm1127, %v1120, 0
        %v1138 = vsel %vm1127, %v1122, 0
        %1140 = vmatprep.subr.mxu0 0.0
        %1141 = vmatpush1.msra.mxu0 %v1123
        %1142 = vmatprep.subr.mxu0 0.0
        %1143 = vmatpush1.msra.mxu0 %v1124
        %1144 = vmatprep.subr.mxu0 0.0
        %1145 = vmatpush1.msra.mxu0 %v1125
        %1146 = vmatprep.subr.mxu0 0.0
        %1147 = vmatpush1.msra.mxu0 %v1126
        %1148 = vmatprep.subr.mxu0 0.0
        %1149 = vmatpush1.msra.mxu0 0.0
        %1150 = vmatprep.subr.mxu0 0.0
        %1151 = vmatpush1.msra.mxu0 0.0
        %1152 = vmatprep.subr.mxu0 0.0
        %1153 = vmatpush1.msra.mxu0 0.0
        %1154 = vmatprep.subr.mxu0 0.0
        %1155 = vmatpush1.msra.mxu0 0.0
        %1156 = vmatprep.subr.mxu0 0.0
        %1157 = vmatpush1.msra.mxu0 0.0
        %1158 = vmatprep.subr.mxu0 0.0
        %1159 = vmatpush1.msra.mxu0 0.0
        %1160 = vmatprep.subr.mxu0 0.0
        %1161 = vmatpush1.msra.mxu0 0.0
        %1162 = vmatprep.subr.mxu0 0.0
        %1163 = vmatpush1.msra.mxu0 0.0
        %1164 = vmatprep.subr.mxu0 0.0
        %1165 = vmatpush1.msra.mxu0 0.0
        %1166 = vmatprep.subr.mxu0 0.0
        %1167 = vmatpush1.msra.mxu0 0.0
        %1168 = vmatprep.subr.mxu0 0.0
        %1169 = vmatpush1.msra.mxu0 0.0
        %1170 = vmatprep.subr.mxu0 0.0
        %1171 = vmatpush1.msra.mxu0 0.0
        %1172 = vmatprep.subr.mxu0 0.0
        %1173 = vmatpush1.msra.mxu0 0.0
        %1174 = vmatprep.subr.mxu0 0.0
        %1175 = vmatpush1.msra.mxu0 0.0
        %1176 = vmatprep.subr.mxu0 0.0
        %1177 = vmatpush1.msra.mxu0 0.0
        %1178 = vmatprep.subr.mxu0 0.0
        %1179 = vmatpush1.msra.mxu0 0.0
        %1180 = vmatprep.subr.mxu0 0.0
        %1181 = vmatpush1.msra.mxu0 0.0
        %1182 = vmatprep.subr.mxu0 0.0
        %1183 = vmatpush1.msra.mxu0 0.0
        %1184 = vmatprep.subr.mxu0 0.0
        %1185 = vmatpush1.msra.mxu0 0.0
        %1186 = vmatprep.subr.mxu0 0.0
        %1187 = vmatpush1.msra.mxu0 0.0
        %1188 = vmatprep.subr.mxu0 0.0
        %1189 = vmatpush1.msra.mxu0 0.0
        %1190 = vmatprep.subr.mxu0 0.0
        %1191 = vmatpush1.msra.mxu0 0.0
        %1192 = vmatprep.subr.mxu0 0.0
        %1193 = vmatpush1.msra.mxu0 0.0
        %1194 = vmatprep.subr.mxu0 0.0
        %1195 = vmatpush1.msra.mxu0 0.0
        %1196 = vmatprep.subr.mxu0 0.0
        %1197 = vmatpush1.msra.mxu0 0.0
        %1198 = vmatprep.subr.mxu0 0.0
        %1199 = vmatpush1.msra.mxu0 0.0
        %1200 = vmatprep.subr.mxu0 0.0
        %1201 = vmatpush1.msra.mxu0 0.0
        %1202 = vmatprep.subr.mxu0 0.0
        %1203 = vmatpush1.msra.mxu0 0.0
        %1204 = vmatprep.mubr.f32.mxu0 0.0
        %1205 = vmatmul.mubr.f32.gmra.mrb[0].mxu0 %v1128
        %v1206 = vpop.f32.mrb[0].mxu0
        %v1207 = vadd.f32 0.0, %v1206
        %v1208 = vpop.f32.mrb[0].mxu0
        %1209 = vmatprep.mubr.f32.mxu0 0.0
        %1210 = vmatmul.mubr.f32.gmra.mrb[0].mxu0 %v1130
        %v1211 = vpop.f32.mrb[0].mxu0
        %v1212 = vadd.f32 0.0, %v1211
        %v1213 = vpop.f32.mrb[0].mxu0
        %1214 = vmatprep.mubr.f32.mxu0 0.0
        %1215 = vmatmul.mubr.f32.gmra.mrb[0].mxu0 %v1132
        %v1216 = vpop.f32.mrb[0].mxu0
        %v1217 = vadd.f32 0.0, %v1216
        %v1218 = vpop.f32.mrb[0].mxu0
        %1219 = vmatprep.mubr.f32.mxu0 0.0
        %1220 = vmatmul.mubr.f32.gmra.mrb[0].mxu0 %v1134
        %v1221 = vpop.f32.mrb[0].mxu0
        %v1222 = vadd.f32 0.0, %v1221
        %v1223 = vpop.f32.mrb[0].mxu0
        %1224 = vmatprep.mubr.f32.mxu0 0.0
        %1225 = vmatmul.mubr.f32.gmra.mrb[0].mxu0 %v1136
        %v1226 = vpop.f32.mrb[0].mxu0
        %v1227 = vadd.f32 0.0, %v1226
        %v1228 = vpop.f32.mrb[0].mxu0
        %1229 = vmatprep.mubr.f32.mxu0 0.0
        %1230 = vmatmul.mubr.f32.gmra.mrb[0].mxu0 %v1138
        %v1231 = vpop.f32.mrb[0].mxu0
        %v1232 = vadd.f32 0.0, %v1231
        %v1233 = vpop.f32.mrb[0].mxu0
        %1234 = vdwg.mxu0
        %v1235 = vld [vmem:[%s1 + $0x78] sm:$0xf]
        %v1236 = vld [vmem:[%s1 + $0x80] sm:$0xf]
        %v1237 = vld [vmem:[%s1 + $0x88] sm:$0xf]
        %v1238 = vld [vmem:[%s1 + $0x90] sm:$0xf]
        %v1239 = vld [vmem:[%s2 + $0x78] sm:$0xff]
        %v1240 = vld [vmem:[%s2 + $0x80] sm:$0xff]
        %v1241 = vld [vmem:[%s2 + $0x88] sm:$0xff]
        %v1242 = vld [vmem:[%s2 + $0x90] sm:$0xff]
        %v1243 = vpack.c.bf16 %v1212, %v1207
        %v1244 = vpack.c.bf16 %v1222, %v1217
        %v1245 = vpack.c.bf16 %v1232, %v1227
        %1247 = vset.pattern.permute.xlu0 0
        %1248 = vperm.xlu0 %1247, %v1239
        %v1249 = vpop.permute.xlu0 %1248
        %1252 = vset.pattern.permute.xlu0 0
        %1253 = vperm.xlu0 %1252, %v1240
        %v1254 = vpop.permute.xlu0 %1253
        %1257 = vset.pattern.permute.xlu0 0
        %1258 = vperm.xlu0 %1257, %v1241
        %v1259 = vpop.permute.xlu0 %1258
        %1262 = vset.pattern.permute.xlu0 0
        %1263 = vperm.xlu0 %1262, %v1242
        %v1264 = vpop.permute.xlu0 %1263
        %v1270 = vunpack.c.l.b16 %v1235
        %v1271 = vunpack.c.l.b16 %v1236
        %v1272 = vunpack.c.l.b16 %v1237
        %v1273 = vunpack.c.l.b16 %v1238
        %v1274 = vpack.c.b16 %v1271, %v1270
        %v1275 = vpack.c.b16 %v1273, %v1272
        %vm1276 = vcmask 392192
        %v1278 = vsel %vm1276, %v1274, 0
        %v1281 = vsel %vm1276, %v1275, 0
        %1283 = vmatprep.subr.bf16.mxu0 0
        %1284 = vmatpush1.bf16.msra.mxu0 %v1243
        %1285 = vmatprep.subr.bf16.mxu0 0
        %1286 = vmatpush1.bf16.msra.mxu0 %v1244
        %1287 = vmatprep.subr.bf16.mxu0 0
        %1288 = vmatpush1.bf16.msra.mxu0 %v1245
        %1289 = vmatprep.subr.bf16.mxu0 0
        %1290 = vmatpush1.bf16.msra.mxu0 0
        %1291 = vmatprep.subr.bf16.mxu0 0
        %1292 = vmatpush1.bf16.msra.mxu0 0
        %1293 = vmatprep.subr.bf16.mxu0 0
        %1294 = vmatpush1.bf16.msra.mxu0 0
        %1295 = vmatprep.subr.bf16.mxu0 0
        %1296 = vmatpush1.bf16.msra.mxu0 0
        %1297 = vmatprep.subr.bf16.mxu0 0
        %1298 = vmatpush1.bf16.msra.mxu0 0
        %1299 = vmatprep.subr.bf16.mxu0 0
        %1300 = vmatpush1.bf16.msra.mxu0 0
        %1301 = vmatprep.subr.bf16.mxu0 0
        %1302 = vmatpush1.bf16.msra.mxu0 0
        %1303 = vmatprep.subr.bf16.mxu0 0
        %1304 = vmatpush1.bf16.msra.mxu0 0
        %1305 = vmatprep.subr.bf16.mxu0 0
        %1306 = vmatpush1.bf16.msra.mxu0 0
        %1307 = vmatprep.subr.bf16.mxu0 0
        %1308 = vmatpush1.bf16.msra.mxu0 0
        %1309 = vmatprep.subr.bf16.mxu0 0
        %1310 = vmatpush1.bf16.msra.mxu0 0
        %1311 = vmatprep.subr.bf16.mxu0 0
        %1312 = vmatpush1.bf16.msra.mxu0 0
        %1313 = vmatprep.subr.bf16.mxu0 0
        %1314 = vmatpush1.bf16.msra.mxu0 0
        %1315 = vmatprep.mubr.bf16.mxu0 0
        %1316 = vmatmul.mubr.bf16.gmra.mrb[0].mxu0 %v1278
        %v1317 = vpop.f32.mrb[0].mxu0
        %v1318 = vadd.f32 %v1249, %v1317
        %v1319 = vpop.f32.mrb[0].mxu0
        %v1320 = vpop.f32.mrb[0].mxu0
        %v1321 = vadd.f32 %v1254, %v1320
        %v1322 = vpop.f32.mrb[0].mxu0
        %1323 = vmatprep.mubr.bf16.mxu0 0
        %1324 = vmatmul.mubr.bf16.gmra.mrb[0].mxu0 %v1281
        %v1325 = vpop.f32.mrb[0].mxu0
        %v1326 = vadd.f32 %v1259, %v1325
        %v1327 = vpop.f32.mrb[0].mxu0
        %v1328 = vpop.f32.mrb[0].mxu0
        %v1329 = vadd.f32 %v1264, %v1328
        %v1330 = vpop.f32.mrb[0].mxu0
        %1331 = vdwg.mxu0
        %v1332 = vld [vmem:[%s1 + $0x48] sm:$0xf]
        %v1333 = vld [vmem:[%s1 + $0x50] sm:$0xf]
        %v1334 = vld [vmem:[%s2 + $0x48] sm:$0xff]
        %v1335 = vld [vmem:[%s2 + $0x50] sm:$0xff]
        %1337 = vset.pattern.permute.xlu0 0
        %1338 = vperm.xlu0 %1337, %v1334
        %v1339 = vpop.permute.xlu0 %1338
        %1342 = vset.pattern.permute.xlu0 0
        %1343 = vperm.xlu0 %1342, %v1335
        %v1344 = vpop.permute.xlu0 %1343
        %v1348 = vunpack.c.l.b16 %v1332
        %v1349 = vunpack.c.l.b16 %v1333
        %v1350 = vpack.c.b16 %v1349, %v1348
        %v1352 = vsel %vm1276, %v1350, 0
        %1354 = vmatprep.subr.bf16.mxu0 0
        %1355 = vmatpush1.bf16.msra.mxu0 %v1243
        %1356 = vmatprep.subr.bf16.mxu0 0
        %1357 = vmatpush1.bf16.msra.mxu0 %v1244
        %1358 = vmatprep.subr.bf16.mxu0 0
        %1359 = vmatpush1.bf16.msra.mxu0 %v1245
        %1360 = vmatprep.subr.bf16.mxu0 0
        %1361 = vmatpush1.bf16.msra.mxu0 0
        %1362 = vmatprep.subr.bf16.mxu0 0
        %1363 = vmatpush1.bf16.msra.mxu0 0
        %1364 = vmatprep.subr.bf16.mxu0 0
        %1365 = vmatpush1.bf16.msra.mxu0 0
        %1366 = vmatprep.subr.bf16.mxu0 0
        %1367 = vmatpush1.bf16.msra.mxu0 0
        %1368 = vmatprep.subr.bf16.mxu0 0
        %1369 = vmatpush1.bf16.msra.mxu0 0
        %1370 = vmatprep.subr.bf16.mxu0 0
        %1371 = vmatpush1.bf16.msra.mxu0 0
        %1372 = vmatprep.subr.bf16.mxu0 0
        %1373 = vmatpush1.bf16.msra.mxu0 0
        %1374 = vmatprep.subr.bf16.mxu0 0
        %1375 = vmatpush1.bf16.msra.mxu0 0
        %1376 = vmatprep.subr.bf16.mxu0 0
        %1377 = vmatpush1.bf16.msra.mxu0 0
        %1378 = vmatprep.subr.bf16.mxu0 0
        %1379 = vmatpush1.bf16.msra.mxu0 0
        %1380 = vmatprep.subr.bf16.mxu0 0
        %1381 = vmatpush1.bf16.msra.mxu0 0
        %1382 = vmatprep.subr.bf16.mxu0 0
        %1383 = vmatpush1.bf16.msra.mxu0 0
        %1384 = vmatprep.subr.bf16.mxu0 0
        %1385 = vmatpush1.bf16.msra.mxu0 0
        %1386 = vmatprep.mubr.bf16.mxu0 0
        %1387 = vmatmul.mubr.bf16.gmra.mrb[0].mxu0 %v1352
        %v1388 = vpop.f32.mrb[0].mxu0
        %v1389 = vadd.f32 %v1339, %v1388
        %v1390 = vpop.f32.mrb[0].mxu0
        %v1391 = vpop.f32.mrb[0].mxu0
        %v1392 = vadd.f32 %v1344, %v1391
        %v1393 = vpop.f32.mrb[0].mxu0
        %1394 = vdwg.mxu0
        %v1395 = vxor.u32 %v1389, 2147483648
        %v1396 = vxor.u32 %v1392, 2147483648
        %v1397 = vmul.f32 %v1395, 1.442695
        %v1398 = vpow.pop %v1397
        %v1399 = vmul.f32 %v1396, 1.442695
        %v1400 = vpow.pop %v1399
        %v1401 = vadd.f32 %v1398, 1.0
        %v1402 = vadd.f32 %v1400, 1.0
        %v1403 = vrcp.pop %v1401
        %v1404 = vmul.f32 1.0, %v1403
        %v1405 = vrcp.pop %v1402
        %v1406 = vmul.f32 1.0, %v1405
        %v1407 = vmul.f32 %v1389, %v1404
        %v1408 = vmul.f32 %v1392, %v1406
        %1411 = vrot.lane.b32.xlu0 %v1407, 1
        %v1412 = vpop.permute.xlu0 %1411
        %1413 = vrot.lane.b32.xlu0 %v1408, 1
        %v1414 = vpop.permute.xlu0 %1413
        %v1417 = vsel %vm470, 0.0, %v1412
        %v1418 = vsel %vm470, 0.0, %v1414
        %vm1419 = vcmask 138240
        %v1420 = vsel %vm1419, %v1417, 0.0
        %v1421 = vsel %vm1419, %v1418, 0.0
        %1424 = vrot.lane.b32.xlu0 %v1420, 127
        %v1425 = vpop.permute.xlu0 %1424
        %1426 = vrot.lane.b32.xlu0 %v1421, 127
        %v1427 = vpop.permute.xlu0 %1426
        %1430 = vrot.lane.b32.xlu0 %v1420, 126
        %v1431 = vpop.permute.xlu0 %1430
        %1432 = vrot.lane.b32.xlu0 %v1421, 126
        %v1433 = vpop.permute.xlu0 %1432
        %v1436 = vld [vmem:[%s1 + $0x58] sm:$0xf]
        %v1437 = vld [vmem:[%s1 + $0x60] sm:$0xf]
        %v1438 = vld [vmem:[%s1 + $0x68] sm:$0xf]
        %v1439 = vld [vmem:[%s1 + $0x70] sm:$0xf]
        %v1440 = vld [vmem:[%s2 + $0x58] sm:$0xff]
        %v1441 = vld [vmem:[%s2 + $0x60] sm:$0xff]
        %v1442 = vld [vmem:[%s2 + $0x68] sm:$0xff]
        %v1443 = vld [vmem:[%s2 + $0x70] sm:$0xff]
        %v1444 = vpack.c.bf16 %v1421, %v1420
        %v1445 = vpack.c.bf16 %v1427, %v1425
        %v1446 = vpack.c.bf16 %v1433, %v1431
        %1448 = vset.pattern.permute.xlu0 0
        %1449 = vperm.xlu0 %1448, %v1440
        %v1450 = vpop.permute.xlu0 %1449
        %1453 = vset.pattern.permute.xlu0 0
        %1454 = vperm.xlu0 %1453, %v1441
        %v1455 = vpop.permute.xlu0 %1454
        %1458 = vset.pattern.permute.xlu0 0
        %1459 = vperm.xlu0 %1458, %v1442
        %v1460 = vpop.permute.xlu0 %1459
        %1463 = vset.pattern.permute.xlu0 0
        %1464 = vperm.xlu0 %1463, %v1443
        %v1465 = vpop.permute.xlu0 %1464
        %v1471 = vunpack.c.l.b16 %v1436
        %v1472 = vunpack.c.l.b16 %v1437
        %v1473 = vunpack.c.l.b16 %v1438
        %v1474 = vunpack.c.l.b16 %v1439
        %v1475 = vpack.c.b16 %v1472, %v1471
        %v1476 = vpack.c.b16 %v1474, %v1473
        %v1478 = vsel %vm1276, %v1475, 0
        %v1481 = vsel %vm1276, %v1476, 0
        %1483 = vmatprep.subr.bf16.mxu0 0
        %1484 = vmatpush1.bf16.msra.mxu0 %v1444
        %1485 = vmatprep.subr.bf16.mxu0 0
        %1486 = vmatpush1.bf16.msra.mxu0 %v1445
        %1487 = vmatprep.subr.bf16.mxu0 0
        %1488 = vmatpush1.bf16.msra.mxu0 %v1446
        %1489 = vmatprep.subr.bf16.mxu0 0
        %1490 = vmatpush1.bf16.msra.mxu0 0
        %1491 = vmatprep.subr.bf16.mxu0 0
        %1492 = vmatpush1.bf16.msra.mxu0 0
        %1493 = vmatprep.subr.bf16.mxu0 0
        %1494 = vmatpush1.bf16.msra.mxu0 0
        %1495 = vmatprep.subr.bf16.mxu0 0
        %1496 = vmatpush1.bf16.msra.mxu0 0
        %1497 = vmatprep.subr.bf16.mxu0 0
        %1498 = vmatpush1.bf16.msra.mxu0 0
        %1499 = vmatprep.subr.bf16.mxu0 0
        %1500 = vmatpush1.bf16.msra.mxu0 0
        %1501 = vmatprep.subr.bf16.mxu0 0
        %1502 = vmatpush1.bf16.msra.mxu0 0
        %1503 = vmatprep.subr.bf16.mxu0 0
        %1504 = vmatpush1.bf16.msra.mxu0 0
        %1505 = vmatprep.subr.bf16.mxu0 0
        %1506 = vmatpush1.bf16.msra.mxu0 0
        %1507 = vmatprep.subr.bf16.mxu0 0
        %1508 = vmatpush1.bf16.msra.mxu0 0
        %1509 = vmatprep.subr.bf16.mxu0 0
        %1510 = vmatpush1.bf16.msra.mxu0 0
        %1511 = vmatprep.subr.bf16.mxu0 0
        %1512 = vmatpush1.bf16.msra.mxu0 0
        %1513 = vmatprep.subr.bf16.mxu0 0
        %1514 = vmatpush1.bf16.msra.mxu0 0
        %1515 = vmatprep.mubr.bf16.mxu0 0
        %1516 = vmatmul.mubr.bf16.gmra.mrb[0].mxu0 %v1478
        %v1517 = vpop.f32.mrb[0].mxu0
        %v1518 = vadd.f32 %v1450, %v1517
        %v1519 = vpop.f32.mrb[0].mxu0
        %v1520 = vpop.f32.mrb[0].mxu0
        %v1521 = vadd.f32 %v1455, %v1520
        %v1522 = vpop.f32.mrb[0].mxu0
        %1523 = vmatprep.mubr.bf16.mxu0 0
        %1524 = vmatmul.mubr.bf16.gmra.mrb[0].mxu0 %v1481
        %v1525 = vpop.f32.mrb[0].mxu0
        %v1526 = vadd.f32 %v1460, %v1525
        %v1527 = vpop.f32.mrb[0].mxu0
        %v1528 = vpop.f32.mrb[0].mxu0
        %v1529 = vadd.f32 %v1465, %v1528
        %v1530 = vpop.f32.mrb[0].mxu0
        %1531 = vdwg.mxu0
        %v1532 = vadd.f32 %v1518, %v1318
        %v1533 = vadd.f32 %v1521, %v1321
        %v1534 = vadd.f32 %v1526, %v1326
        %v1535 = vadd.f32 %v1529, %v1329
        %v1536 = vxor.u32 %v1532, 2147483648
        %v1537 = vxor.u32 %v1533, 2147483648
        %v1538 = vxor.u32 %v1534, 2147483648
        %v1539 = vxor.u32 %v1535, 2147483648
        %v1540 = vmul.f32 %v1536, 1.442695
        %v1541 = vpow.pop %v1540
        %v1542 = vmul.f32 %v1537, 1.442695
        %v1543 = vpow.pop %v1542
        %v1544 = vmul.f32 %v1538, 1.442695
        %v1545 = vpow.pop %v1544
        %v1546 = vmul.f32 %v1539, 1.442695
        %v1547 = vpow.pop %v1546
        %v1548 = vadd.f32 %v1541, 1.0
        %v1549 = vadd.f32 %v1543, 1.0
        %v1550 = vadd.f32 %v1545, 1.0
        %v1551 = vadd.f32 %v1547, 1.0
        %v1552 = vrcp.pop %v1548
        %v1553 = vmul.f32 1.0, %v1552
        %v1554 = vrcp.pop %v1549
        %v1555 = vmul.f32 1.0, %v1554
        %v1556 = vrcp.pop %v1550
        %v1557 = vmul.f32 1.0, %v1556
        %v1558 = vrcp.pop %v1551
        %v1559 = vmul.f32 1.0, %v1558
        %v1560 = vmul.f32 %v1532, %v1553
        %v1561 = vmul.f32 %v1533, %v1555
        %v1562 = vmul.f32 %v1534, %v1557
        %v1563 = vmul.f32 %v1535, %v1559
        %1568 = vrot.lane.b32.xlu0 %v1560, 1
        %v1569 = vpop.permute.xlu0 %1568
        %1570 = vrot.lane.b32.xlu0 %v1561, 1
        %v1571 = vpop.permute.xlu0 %1570
        %1572 = vrot.lane.b32.xlu0 %v1562, 1
        %v1573 = vpop.permute.xlu0 %1572
        %1574 = vrot.lane.b32.xlu0 %v1563, 1
        %v1575 = vpop.permute.xlu0 %1574
        %v1580 = vsel %vm470, 0.0, %v1569
        %v1581 = vsel %vm470, 0.0, %v1571
        %v1582 = vsel %vm470, 0.0, %v1573
        %v1583 = vsel %vm470, 0.0, %v1575
        %v1584 = vsel %vm1419, %v1580, 0.0
        %v1585 = vsel %vm1419, %v1581, 0.0
        %v1586 = vsel %vm1419, %v1582, 0.0
        %v1587 = vsel %vm1419, %v1583, 0.0
        %1592 = vrot.lane.b32.xlu0 %v1584, 127
        %v1593 = vpop.permute.xlu0 %1592
        %1594 = vrot.lane.b32.xlu0 %v1585, 127
        %v1595 = vpop.permute.xlu0 %1594
        %1596 = vrot.lane.b32.xlu0 %v1586, 127
        %v1597 = vpop.permute.xlu0 %1596
        %1598 = vrot.lane.b32.xlu0 %v1587, 127
        %v1599 = vpop.permute.xlu0 %1598
        %1600 = vrot.lane.b32.xlu0 %v1584, 126
        %v1601 = vpop.permute.xlu0 %1600
        %1602 = vrot.lane.b32.xlu0 %v1585, 126
        %v1603 = vpop.permute.xlu0 %1602
        %1604 = vrot.lane.b32.xlu0 %v1586, 126
        %v1605 = vpop.permute.xlu0 %1604
        %1606 = vrot.lane.b32.xlu0 %v1587, 126
        %v1607 = vpop.permute.xlu0 %1606
        %v1608 = vld [vmem:[#allocation2] sm:$0xff]
        %v1609 = vld [vmem:[#allocation2 + $0x8] sm:$0xff]
        %vm1610 = vcmask 130048
        %v1611 = vsel %vm1610, %v1584, 0
        %v1613 = vsel %vm1610, %v1585, 0
        %v1615 = vsel %vm1610, %v1586, 0
        %v1617 = vsel %vm1610, %v1587, 0
        %v1619 = vsel %vm1610, %v1593, 0
        %v1621 = vsel %vm1610, %v1595, 0
        %v1623 = vsel %vm1610, %v1597, 0
        %v1625 = vsel %vm1610, %v1599, 0
        %v1627 = vsel %vm1610, %v1601, 0
        %v1629 = vsel %vm1610, %v1603, 0
        %v1631 = vsel %vm1610, %v1605, 0
        %v1633 = vsel %vm1610, %v1607, 0
        %1635 = vmatprep.subr.mxu0 0.0
        %1636 = vmatpush1.msra.mxu0 %v1608
        %1637 = vmatprep.subr.mxu0 0.0
        %1638 = vmatpush1.msra.mxu0 %v1609
        %1639 = vmatprep.subr.mxu0 0.0
        %1640 = vmatpush1.msra.mxu0 0.0
        %1641 = vmatprep.subr.mxu0 0.0
        %1642 = vmatpush1.msra.mxu0 0.0
        %1643 = vmatprep.subr.mxu0 0.0
        %1644 = vmatpush1.msra.mxu0 0.0
        %1645 = vmatprep.subr.mxu0 0.0
        %1646 = vmatpush1.msra.mxu0 0.0
        %1647 = vmatprep.subr.mxu0 0.0
        %1648 = vmatpush1.msra.mxu0 0.0
        %1649 = vmatprep.subr.mxu0 0.0
        %1650 = vmatpush1.msra.mxu0 0.0
        %1651 = vmatprep.subr.mxu0 0.0
        %1652 = vmatpush1.msra.mxu0 0.0
        %1653 = vmatprep.subr.mxu0 0.0
        %1654 = vmatpush1.msra.mxu0 0.0
        %1655 = vmatprep.subr.mxu0 0.0
        %1656 = vmatpush1.msra.mxu0 0.0
        %1657 = vmatprep.subr.mxu0 0.0
        %1658 = vmatpush1.msra.mxu0 0.0
        %1659 = vmatprep.subr.mxu0 0.0
        %1660 = vmatpush1.msra.mxu0 0.0
        %1661 = vmatprep.subr.mxu0 0.0
        %1662 = vmatpush1.msra.mxu0 0.0
        %1663 = vmatprep.subr.mxu0 0.0
        %1664 = vmatpush1.msra.mxu0 0.0
        %1665 = vmatprep.subr.mxu0 0.0
        %1666 = vmatpush1.msra.mxu0 0.0
        %1667 = vmatprep.subr.mxu0 0.0
        %1668 = vmatpush1.msra.mxu0 0.0
        %1669 = vmatprep.subr.mxu0 0.0
        %1670 = vmatpush1.msra.mxu0 0.0
        %1671 = vmatprep.subr.mxu0 0.0
        %1672 = vmatpush1.msra.mxu0 0.0
        %1673 = vmatprep.subr.mxu0 0.0
        %1674 = vmatpush1.msra.mxu0 0.0
        %1675 = vmatprep.subr.mxu0 0.0
        %1676 = vmatpush1.msra.mxu0 0.0
        %1677 = vmatprep.subr.mxu0 0.0
        %1678 = vmatpush1.msra.mxu0 0.0
        %1679 = vmatprep.subr.mxu0 0.0
        %1680 = vmatpush1.msra.mxu0 0.0
        %1681 = vmatprep.subr.mxu0 0.0
        %1682 = vmatpush1.msra.mxu0 0.0
        %1683 = vmatprep.subr.mxu0 0.0
        %1684 = vmatpush1.msra.mxu0 0.0
        %1685 = vmatprep.subr.mxu0 0.0
        %1686 = vmatpush1.msra.mxu0 0.0
        %1687 = vmatprep.subr.mxu0 0.0
        %1688 = vmatpush1.msra.mxu0 0.0
        %1689 = vmatprep.subr.mxu0 0.0
        %1690 = vmatpush1.msra.mxu0 0.0
        %1691 = vmatprep.subr.mxu0 0.0
        %1692 = vmatpush1.msra.mxu0 0.0
        %1693 = vmatprep.subr.mxu0 0.0
        %1694 = vmatpush1.msra.mxu0 0.0
        %1695 = vmatprep.subr.mxu0 0.0
        %1696 = vmatpush1.msra.mxu0 0.0
        %1697 = vmatprep.subr.mxu0 0.0
        %1698 = vmatpush1.msra.mxu0 0.0
        %1699 = vmatprep.mubr.f32.mxu0 0.0
        %1700 = vmatmul.mubr.f32.gmra.mrb[0].mxu0 %v1611
        %v1701 = vpop.f32.mrb[0].mxu0
        %v1702 = vadd.f32 0.0, %v1701
        %v1703 = vpop.f32.mrb[0].mxu0
        %1704 = vmatprep.mubr.f32.mxu0 0.0
        %1705 = vmatmul.mubr.f32.gmra.mrb[0].mxu0 %v1613
        %v1706 = vpop.f32.mrb[0].mxu0
        %v1707 = vadd.f32 0.0, %v1706
        %v1708 = vpop.f32.mrb[0].mxu0
        %1709 = vmatprep.mubr.f32.mxu0 0.0
        %1710 = vmatmul.mubr.f32.gmra.mrb[0].mxu0 %v1615
        %v1711 = vpop.f32.mrb[0].mxu0
        %v1712 = vadd.f32 0.0, %v1711
        %v1713 = vpop.f32.mrb[0].mxu0
        %1714 = vmatprep.mubr.f32.mxu0 0.0
        %1715 = vmatmul.mubr.f32.gmra.mrb[0].mxu0 %v1617
        %v1716 = vpop.f32.mrb[0].mxu0
        %v1717 = vadd.f32 0.0, %v1716
        %v1718 = vpop.f32.mrb[0].mxu0
        %1719 = vmatprep.mubr.f32.mxu0 0.0
        %1720 = vmatmul.mubr.f32.gmra.mrb[0].mxu0 %v1619
        %v1721 = vpop.f32.mrb[0].mxu0
        %v1722 = vadd.f32 0.0, %v1721
        %v1723 = vpop.f32.mrb[0].mxu0
        %1724 = vmatprep.mubr.f32.mxu0 0.0
        %1725 = vmatmul.mubr.f32.gmra.mrb[0].mxu0 %v1621
        %v1726 = vpop.f32.mrb[0].mxu0
        %v1727 = vadd.f32 0.0, %v1726
        %v1728 = vpop.f32.mrb[0].mxu0
        %1729 = vmatprep.mubr.f32.mxu0 0.0
        %1730 = vmatmul.mubr.f32.gmra.mrb[0].mxu0 %v1623
        %v1731 = vpop.f32.mrb[0].mxu0
        %v1732 = vadd.f32 0.0, %v1731
        %v1733 = vpop.f32.mrb[0].mxu0
        %1734 = vmatprep.mubr.f32.mxu0 0.0
        %1735 = vmatmul.mubr.f32.gmra.mrb[0].mxu0 %v1625
        %v1736 = vpop.f32.mrb[0].mxu0
        %v1737 = vadd.f32 0.0, %v1736
        %v1738 = vpop.f32.mrb[0].mxu0
        %1739 = vmatprep.mubr.f32.mxu0 0.0
        %1740 = vmatmul.mubr.f32.gmra.mrb[0].mxu0 %v1627
        %v1741 = vpop.f32.mrb[0].mxu0
        %v1742 = vadd.f32 0.0, %v1741
        %v1743 = vpop.f32.mrb[0].mxu0
        %1744 = vmatprep.mubr.f32.mxu0 0.0
        %1745 = vmatmul.mubr.f32.gmra.mrb[0].mxu0 %v1629
        %v1746 = vpop.f32.mrb[0].mxu0
        %v1747 = vadd.f32 0.0, %v1746
        %v1748 = vpop.f32.mrb[0].mxu0
        %1749 = vmatprep.mubr.f32.mxu0 0.0
        %1750 = vmatmul.mubr.f32.gmra.mrb[0].mxu0 %v1631
        %v1751 = vpop.f32.mrb[0].mxu0
        %v1752 = vadd.f32 0.0, %v1751
        %v1753 = vpop.f32.mrb[0].mxu0
        %1754 = vmatprep.mubr.f32.mxu0 0.0
        %1755 = vmatmul.mubr.f32.gmra.mrb[0].mxu0 %v1633
        %v1756 = vpop.f32.mrb[0].mxu0
        %v1757 = vadd.f32 0.0, %v1756
        %v1758 = vpop.f32.mrb[0].mxu0
        %1759 = vdwg.mxu0
        %v1760 = vld [vmem:[%s1 + $0xf8] sm:$0xf]
        %v1761 = vld [vmem:[%s1 + $0x100] sm:$0xf]
        %v1762 = vld [vmem:[%s1 + $0x108] sm:$0xf]
        %v1763 = vld [vmem:[%s1 + $0x110] sm:$0xf]
        %v1764 = vld [vmem:[%s1 + $0x118] sm:$0xf]
        %v1765 = vld [vmem:[%s1 + $0x120] sm:$0xf]
        %v1766 = vld [vmem:[%s1 + $0x128] sm:$0xf]
        %v1767 = vld [vmem:[%s1 + $0x130] sm:$0xf]
        %v1768 = vld [vmem:[%s2 + $0xf8] sm:$0xff]
        %v1769 = vld [vmem:[%s2 + $0x100] sm:$0xff]
        %v1770 = vld [vmem:[%s2 + $0x108] sm:$0xff]
        %v1771 = vld [vmem:[%s2 + $0x110] sm:$0xff]
        %v1772 = vld [vmem:[%s2 + $0x118] sm:$0xff]
        %v1773 = vld [vmem:[%s2 + $0x120] sm:$0xff]
        %v1774 = vld [vmem:[%s2 + $0x128] sm:$0xff]
        %v1775 = vld [vmem:[%s2 + $0x130] sm:$0xff]
        %v1776 = vpack.c.bf16 %v1707, %v1702
        %v1777 = vpack.c.bf16 %v1717, %v1712
        %v1778 = vpack.c.bf16 %v1727, %v1722
        %v1779 = vpack.c.bf16 %v1737, %v1732
        %v1780 = vpack.c.bf16 %v1747, %v1742
        %v1781 = vpack.c.bf16 %v1757, %v1752
        %1783 = vset.pattern.permute.xlu0 0
        %1784 = vperm.xlu0 %1783, %v1768
        %v1785 = vpop.permute.xlu0 %1784
        %1788 = vset.pattern.permute.xlu0 0
        %1789 = vperm.xlu0 %1788, %v1769
        %v1790 = vpop.permute.xlu0 %1789
        %1793 = vset.pattern.permute.xlu0 0
        %1794 = vperm.xlu0 %1793, %v1770
        %v1795 = vpop.permute.xlu0 %1794
        %1798 = vset.pattern.permute.xlu0 0
        %1799 = vperm.xlu0 %1798, %v1771
        %v1800 = vpop.permute.xlu0 %1799
        %1803 = vset.pattern.permute.xlu0 0
        %1804 = vperm.xlu0 %1803, %v1772
        %v1805 = vpop.permute.xlu0 %1804
        %1808 = vset.pattern.permute.xlu0 0
        %1809 = vperm.xlu0 %1808, %v1773
        %v1810 = vpop.permute.xlu0 %1809
        %1813 = vset.pattern.permute.xlu0 0
        %1814 = vperm.xlu0 %1813, %v1774
        %v1815 = vpop.permute.xlu0 %1814
        %1818 = vset.pattern.permute.xlu0 0
        %1819 = vperm.xlu0 %1818, %v1775
        %v1820 = vpop.permute.xlu0 %1819
        %v1830 = vunpack.c.l.b16 %v1760
        %v1831 = vunpack.c.l.b16 %v1761
        %v1832 = vunpack.c.l.b16 %v1762
        %v1833 = vunpack.c.l.b16 %v1763
        %v1834 = vunpack.c.l.b16 %v1764
        %v1835 = vunpack.c.l.b16 %v1765
        %v1836 = vunpack.c.l.b16 %v1766
        %v1837 = vunpack.c.l.b16 %v1767
        %v1838 = vpack.c.b16 %v1831, %v1830
        %v1839 = vpack.c.b16 %v1833, %v1832
        %v1840 = vpack.c.b16 %v1835, %v1834
        %v1841 = vpack.c.b16 %v1837, %v1836
        %vm1842 = vcmask 785408
        %v1844 = vsel %vm1842, %v1838, 0
        %v1847 = vsel %vm1842, %v1839, 0
        %v1850 = vsel %vm1842, %v1840, 0
        %v1853 = vsel %vm1842, %v1841, 0
        %1855 = vmatprep.subr.bf16.mxu0 0
        %1856 = vmatpush1.bf16.msra.mxu0 %v1776
        %1857 = vmatprep.subr.bf16.mxu0 0
        %1858 = vmatpush1.bf16.msra.mxu0 %v1777
        %1859 = vmatprep.subr.bf16.mxu0 0
        %1860 = vmatpush1.bf16.msra.mxu0 %v1778
        %1861 = vmatprep.subr.bf16.mxu0 0
        %1862 = vmatpush1.bf16.msra.mxu0 %v1779
        %1863 = vmatprep.subr.bf16.mxu0 0
        %1864 = vmatpush1.bf16.msra.mxu0 %v1780
        %1865 = vmatprep.subr.bf16.mxu0 0
        %1866 = vmatpush1.bf16.msra.mxu0 %v1781
        %1867 = vmatprep.subr.bf16.mxu0 0
        %1868 = vmatpush1.bf16.msra.mxu0 0
        %1869 = vmatprep.subr.bf16.mxu0 0
        %1870 = vmatpush1.bf16.msra.mxu0 0
        %1871 = vmatprep.subr.bf16.mxu0 0
        %1872 = vmatpush1.bf16.msra.mxu0 0
        %1873 = vmatprep.subr.bf16.mxu0 0
        %1874 = vmatpush1.bf16.msra.mxu0 0
        %1875 = vmatprep.subr.bf16.mxu0 0
        %1876 = vmatpush1.bf16.msra.mxu0 0
        %1877 = vmatprep.subr.bf16.mxu0 0
        %1878 = vmatpush1.bf16.msra.mxu0 0
        %1879 = vmatprep.subr.bf16.mxu0 0
        %1880 = vmatpush1.bf16.msra.mxu0 0
        %1881 = vmatprep.subr.bf16.mxu0 0
        %1882 = vmatpush1.bf16.msra.mxu0 0
        %1883 = vmatprep.subr.bf16.mxu0 0
        %1884 = vmatpush1.bf16.msra.mxu0 0
        %1885 = vmatprep.subr.bf16.mxu0 0
        %1886 = vmatpush1.bf16.msra.mxu0 0
        %1887 = vmatprep.mubr.bf16.mxu0 0
        %1888 = vmatmul.mubr.bf16.gmra.mrb[0].mxu0 %v1844
        %v1889 = vpop.f32.mrb[0].mxu0
        %v1890 = vadd.f32 %v1785, %v1889
        %v1891 = vpop.f32.mrb[0].mxu0
        %v1892 = vpop.f32.mrb[0].mxu0
        %v1893 = vadd.f32 %v1790, %v1892
        %v1894 = vpop.f32.mrb[0].mxu0
        %1895 = vmatprep.mubr.bf16.mxu0 0
        %1896 = vmatmul.mubr.bf16.gmra.mrb[0].mxu0 %v1847
        %v1897 = vpop.f32.mrb[0].mxu0
        %v1898 = vadd.f32 %v1795, %v1897
        %v1899 = vpop.f32.mrb[0].mxu0
        %v1900 = vpop.f32.mrb[0].mxu0
        %v1901 = vadd.f32 %v1800, %v1900
        %v1902 = vpop.f32.mrb[0].mxu0
        %1903 = vmatprep.mubr.bf16.mxu0 0
        %1904 = vmatmul.mubr.bf16.gmra.mrb[0].mxu0 %v1850
        %v1905 = vpop.f32.mrb[0].mxu0
        %v1906 = vadd.f32 %v1805, %v1905
        %v1907 = vpop.f32.mrb[0].mxu0
        %v1908 = vpop.f32.mrb[0].mxu0
        %v1909 = vadd.f32 %v1810, %v1908
        %v1910 = vpop.f32.mrb[0].mxu0
        %1911 = vmatprep.mubr.bf16.mxu0 0
        %1912 = vmatmul.mubr.bf16.gmra.mrb[0].mxu0 %v1853
        %v1913 = vpop.f32.mrb[0].mxu0
        %v1914 = vadd.f32 %v1815, %v1913
        %v1915 = vpop.f32.mrb[0].mxu0
        %v1916 = vpop.f32.mrb[0].mxu0
        %v1917 = vadd.f32 %v1820, %v1916
        %v1918 = vpop.f32.mrb[0].mxu0
        %1919 = vdwg.mxu0
        %v1920 = vld [vmem:[%s1 + $0x98] sm:$0xf]
        %v1921 = vld [vmem:[%s1 + $0xa0] sm:$0xf]
        %v1922 = vld [vmem:[%s1 + $0xa8] sm:$0xf]
        %v1923 = vld [vmem:[%s1 + $0xb0] sm:$0xf]
        %v1924 = vld [vmem:[%s2 + $0x98] sm:$0xff]
        %v1925 = vld [vmem:[%s2 + $0xa0] sm:$0xff]
        %v1926 = vld [vmem:[%s2 + $0xa8] sm:$0xff]
        %v1927 = vld [vmem:[%s2 + $0xb0] sm:$0xff]
        %1929 = vset.pattern.permute.xlu0 0
        %1930 = vperm.xlu0 %1929, %v1924
        %v1931 = vpop.permute.xlu0 %1930
        %1934 = vset.pattern.permute.xlu0 0
        %1935 = vperm.xlu0 %1934, %v1925
        %v1936 = vpop.permute.xlu0 %1935
        %1939 = vset.pattern.permute.xlu0 0
        %1940 = vperm.xlu0 %1939, %v1926
        %v1941 = vpop.permute.xlu0 %1940
        %1944 = vset.pattern.permute.xlu0 0
        %1945 = vperm.xlu0 %1944, %v1927
        %v1946 = vpop.permute.xlu0 %1945
        %v1952 = vunpack.c.l.b16 %v1920
        %v1953 = vunpack.c.l.b16 %v1921
        %v1954 = vunpack.c.l.b16 %v1922
        %v1955 = vunpack.c.l.b16 %v1923
        %v1956 = vpack.c.b16 %v1953, %v1952
        %v1957 = vpack.c.b16 %v1955, %v1954
        %v1959 = vsel %vm1842, %v1956, 0
        %v1962 = vsel %vm1842, %v1957, 0
        %1964 = vmatprep.subr.bf16.mxu0 0
        %1965 = vmatpush1.bf16.msra.mxu0 %v1776
        %1966 = vmatprep.subr.bf16.mxu0 0
        %1967 = vmatpush1.bf16.msra.mxu0 %v1777
        %1968 = vmatprep.subr.bf16.mxu0 0
        %1969 = vmatpush1.bf16.msra.mxu0 %v1778
        %1970 = vmatprep.subr.bf16.mxu0 0
        %1971 = vmatpush1.bf16.msra.mxu0 %v1779
        %1972 = vmatprep.subr.bf16.mxu0 0
        %1973 = vmatpush1.bf16.msra.mxu0 %v1780
        %1974 = vmatprep.subr.bf16.mxu0 0
        %1975 = vmatpush1.bf16.msra.mxu0 %v1781
        %1976 = vmatprep.subr.bf16.mxu0 0
        %1977 = vmatpush1.bf16.msra.mxu0 0
        %1978 = vmatprep.subr.bf16.mxu0 0
        %1979 = vmatpush1.bf16.msra.mxu0 0
        %1980 = vmatprep.subr.bf16.mxu0 0
        %1981 = vmatpush1.bf16.msra.mxu0 0
        %1982 = vmatprep.subr.bf16.mxu0 0
        %1983 = vmatpush1.bf16.msra.mxu0 0
        %1984 = vmatprep.subr.bf16.mxu0 0
        %1985 = vmatpush1.bf16.msra.mxu0 0
        %1986 = vmatprep.subr.bf16.mxu0 0
        %1987 = vmatpush1.bf16.msra.mxu0 0
        %1988 = vmatprep.subr.bf16.mxu0 0
        %1989 = vmatpush1.bf16.msra.mxu0 0
        %1990 = vmatprep.subr.bf16.mxu0 0
        %1991 = vmatpush1.bf16.msra.mxu0 0
        %1992 = vmatprep.subr.bf16.mxu0 0
        %1993 = vmatpush1.bf16.msra.mxu0 0
        %1994 = vmatprep.subr.bf16.mxu0 0
        %1995 = vmatpush1.bf16.msra.mxu0 0
        %1996 = vmatprep.mubr.bf16.mxu0 0
        %1997 = vmatmul.mubr.bf16.gmra.mrb[0].mxu0 %v1959
        %v1998 = vpop.f32.mrb[0].mxu0
        %v1999 = vadd.f32 %v1931, %v1998
        %v2000 = vpop.f32.mrb[0].mxu0
        %v2001 = vpop.f32.mrb[0].mxu0
        %v2002 = vadd.f32 %v1936, %v2001
        %v2003 = vpop.f32.mrb[0].mxu0
        %2004 = vmatprep.mubr.bf16.mxu0 0
        %2005 = vmatmul.mubr.bf16.gmra.mrb[0].mxu0 %v1962
        %v2006 = vpop.f32.mrb[0].mxu0
        %v2007 = vadd.f32 %v1941, %v2006
        %v2008 = vpop.f32.mrb[0].mxu0
        %v2009 = vpop.f32.mrb[0].mxu0
        %v2010 = vadd.f32 %v1946, %v2009
        %v2011 = vpop.f32.mrb[0].mxu0
        %2012 = vdwg.mxu0
        %v2013 = vxor.u32 %v1999, 2147483648
        %v2014 = vxor.u32 %v2002, 2147483648
        %v2015 = vxor.u32 %v2007, 2147483648
        %v2016 = vxor.u32 %v2010, 2147483648
        %v2017 = vmul.f32 %v2013, 1.442695
        %v2018 = vpow.pop %v2017
        %v2019 = vmul.f32 %v2014, 1.442695
        %v2020 = vpow.pop %v2019
        %v2021 = vmul.f32 %v2015, 1.442695
        %v2022 = vpow.pop %v2021
        %v2023 = vmul.f32 %v2016, 1.442695
        %v2024 = vpow.pop %v2023
        %v2025 = vadd.f32 %v2018, 1.0
        %v2026 = vadd.f32 %v2020, 1.0
        %v2027 = vadd.f32 %v2022, 1.0
        %v2028 = vadd.f32 %v2024, 1.0
        %v2029 = vrcp.pop %v2025
        %v2030 = vmul.f32 1.0, %v2029
        %v2031 = vrcp.pop %v2026
        %v2032 = vmul.f32 1.0, %v2031
        %v2033 = vrcp.pop %v2027
        %v2034 = vmul.f32 1.0, %v2033
        %v2035 = vrcp.pop %v2028
        %v2036 = vmul.f32 1.0, %v2035
        %v2037 = vmul.f32 %v1999, %v2030
        %v2038 = vmul.f32 %v2002, %v2032
        %v2039 = vmul.f32 %v2007, %v2034
        %v2040 = vmul.f32 %v2010, %v2036
        %2045 = vrot.lane.b32.xlu0 %v2037, 1
        %v2046 = vpop.permute.xlu0 %2045
        %2047 = vrot.lane.b32.xlu0 %v2038, 1
        %v2048 = vpop.permute.xlu0 %2047
        %2049 = vrot.lane.b32.xlu0 %v2039, 1
        %v2050 = vpop.permute.xlu0 %2049
        %2051 = vrot.lane.b32.xlu0 %v2040, 1
        %v2052 = vpop.permute.xlu0 %2051
        %v2057 = vsel %vm470, 0.0, %v2046
        %v2058 = vsel %vm470, 0.0, %v2048
        %v2059 = vsel %vm470, 0.0, %v2050
        %v2060 = vsel %vm470, 0.0, %v2052
        %vm2061 = vcmask 72704
        %v2062 = vsel %vm2061, %v2057, 0.0
        %v2063 = vsel %vm2061, %v2058, 0.0
        %v2064 = vsel %vm2061, %v2059, 0.0
        %v2065 = vsel %vm2061, %v2060, 0.0
        %2070 = vrot.lane.b32.xlu0 %v2062, 127
        %v2071 = vpop.permute.xlu0 %2070
        %2072 = vrot.lane.b32.xlu0 %v2063, 127
        %v2073 = vpop.permute.xlu0 %2072
        %2074 = vrot.lane.b32.xlu0 %v2064, 127
        %v2075 = vpop.permute.xlu0 %2074
        %2076 = vrot.lane.b32.xlu0 %v2065, 127
        %v2077 = vpop.permute.xlu0 %2076
        %2082 = vrot.lane.b32.xlu0 %v2062, 126
        %v2083 = vpop.permute.xlu0 %2082
        %2084 = vrot.lane.b32.xlu0 %v2063, 126
        %v2085 = vpop.permute.xlu0 %2084
        %2086 = vrot.lane.b32.xlu0 %v2064, 126
        %v2087 = vpop.permute.xlu0 %2086
        %2088 = vrot.lane.b32.xlu0 %v2065, 126
        %v2089 = vpop.permute.xlu0 %2088
        %v2094 = vld [vmem:[%s1 + $0xb8] sm:$0xf]
        %v2095 = vld [vmem:[%s1 + $0xc0] sm:$0xf]
        %v2096 = vld [vmem:[%s1 + $0xc8] sm:$0xf]
        %v2097 = vld [vmem:[%s1 + $0xd0] sm:$0xf]
        %v2098 = vld [vmem:[%s1 + $0xd8] sm:$0xf]
        %v2099 = vld [vmem:[%s1 + $0xe0] sm:$0xf]
        %v2100 = vld [vmem:[%s1 + $0xe8] sm:$0xf]
        %v2101 = vld [vmem:[%s1 + $0xf0] sm:$0xf]
        %v2102 = vld [vmem:[%s2 + $0xb8] sm:$0xff]
        %v2103 = vld [vmem:[%s2 + $0xc0] sm:$0xff]
        %v2104 = vld [vmem:[%s2 + $0xc8] sm:$0xff]
        %v2105 = vld [vmem:[%s2 + $0xd0] sm:$0xff]
        %v2106 = vld [vmem:[%s2 + $0xd8] sm:$0xff]
        %v2107 = vld [vmem:[%s2 + $0xe0] sm:$0xff]
        %v2108 = vld [vmem:[%s2 + $0xe8] sm:$0xff]
        %v2109 = vld [vmem:[%s2 + $0xf0] sm:$0xff]
        %v2110 = vpack.c.bf16 %v2063, %v2062
        %v2111 = vpack.c.bf16 %v2065, %v2064
        %v2112 = vpack.c.bf16 %v2073, %v2071
        %v2113 = vpack.c.bf16 %v2077, %v2075
        %v2114 = vpack.c.bf16 %v2085, %v2083
        %v2115 = vpack.c.bf16 %v2089, %v2087
        %2117 = vset.pattern.permute.xlu0 0
        %2118 = vperm.xlu0 %2117, %v2102
        %v2119 = vpop.permute.xlu0 %2118
        %2122 = vset.pattern.permute.xlu0 0
        %2123 = vperm.xlu0 %2122, %v2103
        %v2124 = vpop.permute.xlu0 %2123
        %2127 = vset.pattern.permute.xlu0 0
        %2128 = vperm.xlu0 %2127, %v2104
        %v2129 = vpop.permute.xlu0 %2128
        %2132 = vset.pattern.permute.xlu0 0
        %2133 = vperm.xlu0 %2132, %v2105
        %v2134 = vpop.permute.xlu0 %2133
        %2137 = vset.pattern.permute.xlu0 0
        %2138 = vperm.xlu0 %2137, %v2106
        %v2139 = vpop.permute.xlu0 %2138
        %2142 = vset.pattern.permute.xlu0 0
        %2143 = vperm.xlu0 %2142, %v2107
        %v2144 = vpop.permute.xlu0 %2143
        %2147 = vset.pattern.permute.xlu0 0
        %2148 = vperm.xlu0 %2147, %v2108
        %v2149 = vpop.permute.xlu0 %2148
        %2152 = vset.pattern.permute.xlu0 0
        %2153 = vperm.xlu0 %2152, %v2109
        %v2154 = vpop.permute.xlu0 %2153
        %v2164 = vunpack.c.l.b16 %v2094
        %v2165 = vunpack.c.l.b16 %v2095
        %v2166 = vunpack.c.l.b16 %v2096
        %v2167 = vunpack.c.l.b16 %v2097
        %v2168 = vunpack.c.l.b16 %v2098
        %v2169 = vunpack.c.l.b16 %v2099
        %v2170 = vunpack.c.l.b16 %v2100
        %v2171 = vunpack.c.l.b16 %v2101
        %v2172 = vpack.c.b16 %v2165, %v2164
        %v2173 = vpack.c.b16 %v2167, %v2166
        %v2174 = vpack.c.b16 %v2169, %v2168
        %v2175 = vpack.c.b16 %v2171, %v2170
        %v2177 = vsel %vm1842, %v2172, 0
        %v2180 = vsel %vm1842, %v2173, 0
        %v2183 = vsel %vm1842, %v2174, 0
        %v2186 = vsel %vm1842, %v2175, 0
        %2188 = vmatprep.subr.bf16.mxu0 0
        %2189 = vmatpush1.bf16.msra.mxu0 %v2110
        %2190 = vmatprep.subr.bf16.mxu0 0
        %2191 = vmatpush1.bf16.msra.mxu0 %v2111
        %2192 = vmatprep.subr.bf16.mxu0 0
        %2193 = vmatpush1.bf16.msra.mxu0 %v2112
        %2194 = vmatprep.subr.bf16.mxu0 0
        %2195 = vmatpush1.bf16.msra.mxu0 %v2113
        %2196 = vmatprep.subr.bf16.mxu0 0
        %2197 = vmatpush1.bf16.msra.mxu0 %v2114
        %2198 = vmatprep.subr.bf16.mxu0 0
        %2199 = vmatpush1.bf16.msra.mxu0 %v2115
        %2200 = vmatprep.subr.bf16.mxu0 0
        %2201 = vmatpush1.bf16.msra.mxu0 0
        %2202 = vmatprep.subr.bf16.mxu0 0
        %2203 = vmatpush1.bf16.msra.mxu0 0
        %2204 = vmatprep.subr.bf16.mxu0 0
        %2205 = vmatpush1.bf16.msra.mxu0 0
        %2206 = vmatprep.subr.bf16.mxu0 0
        %2207 = vmatpush1.bf16.msra.mxu0 0
        %2208 = vmatprep.subr.bf16.mxu0 0
        %2209 = vmatpush1.bf16.msra.mxu0 0
        %2210 = vmatprep.subr.bf16.mxu0 0
        %2211 = vmatpush1.bf16.msra.mxu0 0
        %2212 = vmatprep.subr.bf16.mxu0 0
        %2213 = vmatpush1.bf16.msra.mxu0 0
        %2214 = vmatprep.subr.bf16.mxu0 0
        %2215 = vmatpush1.bf16.msra.mxu0 0
        %2216 = vmatprep.subr.bf16.mxu0 0
        %2217 = vmatpush1.bf16.msra.mxu0 0
        %2218 = vmatprep.subr.bf16.mxu0 0
        %2219 = vmatpush1.bf16.msra.mxu0 0
        %2220 = vmatprep.mubr.bf16.mxu0 0
        %2221 = vmatmul.mubr.bf16.gmra.mrb[0].mxu0 %v2177
        %v2222 = vpop.f32.mrb[0].mxu0
        %v2223 = vadd.f32 %v2119, %v2222
        %v2224 = vpop.f32.mrb[0].mxu0
        %v2225 = vpop.f32.mrb[0].mxu0
        %v2226 = vadd.f32 %v2124, %v2225
        %v2227 = vpop.f32.mrb[0].mxu0
        %2228 = vmatprep.mubr.bf16.mxu0 0
        %2229 = vmatmul.mubr.bf16.gmra.mrb[0].mxu0 %v2180
        %v2230 = vpop.f32.mrb[0].mxu0
        %v2231 = vadd.f32 %v2129, %v2230
        %v2232 = vpop.f32.mrb[0].mxu0
        %v2233 = vpop.f32.mrb[0].mxu0
        %v2234 = vadd.f32 %v2134, %v2233
        %v2235 = vpop.f32.mrb[0].mxu0
        %2236 = vmatprep.mubr.bf16.mxu0 0
        %2237 = vmatmul.mubr.bf16.gmra.mrb[0].mxu0 %v2183
        %v2238 = vpop.f32.mrb[0].mxu0
        %v2239 = vadd.f32 %v2139, %v2238
        %v2240 = vpop.f32.mrb[0].mxu0
        %v2241 = vpop.f32.mrb[0].mxu0
        %v2242 = vadd.f32 %v2144, %v2241
        %v2243 = vpop.f32.mrb[0].mxu0
        %2244 = vmatprep.mubr.bf16.mxu0 0
        %2245 = vmatmul.mubr.bf16.gmra.mrb[0].mxu0 %v2186
        %v2246 = vpop.f32.mrb[0].mxu0
        %v2247 = vadd.f32 %v2149, %v2246
        %v2248 = vpop.f32.mrb[0].mxu0
        %v2249 = vpop.f32.mrb[0].mxu0
        %v2250 = vadd.f32 %v2154, %v2249
        %v2251 = vpop.f32.mrb[0].mxu0
        %2252 = vdwg.mxu0
        %v2253 = vadd.f32 %v2223, %v1890
        %v2254 = vadd.f32 %v2226, %v1893
        %v2255 = vadd.f32 %v2231, %v1898
        %v2256 = vadd.f32 %v2234, %v1901
        %v2257 = vadd.f32 %v2239, %v1906
        %v2258 = vadd.f32 %v2242, %v1909
        %v2259 = vadd.f32 %v2247, %v1914
        %v2260 = vadd.f32 %v2250, %v1917
        %v2261 = vxor.u32 %v2253, 2147483648
        %v2262 = vxor.u32 %v2254, 2147483648
        %v2263 = vxor.u32 %v2255, 2147483648
        %v2264 = vxor.u32 %v2256, 2147483648
        %v2265 = vxor.u32 %v2257, 2147483648
        %v2266 = vxor.u32 %v2258, 2147483648
        %v2267 = vxor.u32 %v2259, 2147483648
        %v2268 = vxor.u32 %v2260, 2147483648
        %v2269 = vmul.f32 %v2261, 1.442695
        %v2270 = vpow.pop %v2269
        %v2271 = vmul.f32 %v2262, 1.442695
        %v2272 = vpow.pop %v2271
        %v2273 = vmul.f32 %v2263, 1.442695
        %v2274 = vpow.pop %v2273
        %v2275 = vmul.f32 %v2264, 1.442695
        %v2276 = vpow.pop %v2275
        %v2277 = vmul.f32 %v2265, 1.442695
        %v2278 = vpow.pop %v2277
        %v2279 = vmul.f32 %v2266, 1.442695
        %v2280 = vpow.pop %v2279
        %v2281 = vmul.f32 %v2267, 1.442695
        %v2282 = vpow.pop %v2281
        %v2283 = vmul.f32 %v2268, 1.442695
        %v2284 = vpow.pop %v2283
        %v2285 = vadd.f32 %v2270, 1.0
        %v2286 = vadd.f32 %v2272, 1.0
        %v2287 = vadd.f32 %v2274, 1.0
        %v2288 = vadd.f32 %v2276, 1.0
        %v2289 = vadd.f32 %v2278, 1.0
        %v2290 = vadd.f32 %v2280, 1.0
        %v2291 = vadd.f32 %v2282, 1.0
        %v2292 = vadd.f32 %v2284, 1.0
        %v2293 = vrcp.pop %v2285
        %v2294 = vmul.f32 1.0, %v2293
        %v2295 = vrcp.pop %v2286
        %v2296 = vmul.f32 1.0, %v2295
        %v2297 = vrcp.pop %v2287
        %v2298 = vmul.f32 1.0, %v2297
        %v2299 = vrcp.pop %v2288
        %v2300 = vmul.f32 1.0, %v2299
        %v2301 = vrcp.pop %v2289
        %v2302 = vmul.f32 1.0, %v2301
        %v2303 = vrcp.pop %v2290
        %v2304 = vmul.f32 1.0, %v2303
        %v2305 = vrcp.pop %v2291
        %v2306 = vmul.f32 1.0, %v2305
        %v2307 = vrcp.pop %v2292
        %v2308 = vmul.f32 1.0, %v2307
        %v2309 = vmul.f32 %v2253, %v2294
        %v2310 = vmul.f32 %v2254, %v2296
        %v2311 = vmul.f32 %v2255, %v2298
        %v2312 = vmul.f32 %v2256, %v2300
        %v2313 = vmul.f32 %v2257, %v2302
        %v2314 = vmul.f32 %v2258, %v2304
        %v2315 = vmul.f32 %v2259, %v2306
        %v2316 = vmul.f32 %v2260, %v2308
        %2325 = vrot.lane.b32.xlu0 %v2309, 127
        %v2326 = vpop.permute.xlu0 %2325
        %2327 = vrot.lane.b32.xlu0 %v2310, 127
        %v2328 = vpop.permute.xlu0 %2327
        %2329 = vrot.lane.b32.xlu0 %v2311, 127
        %v2330 = vpop.permute.xlu0 %2329
        %2331 = vrot.lane.b32.xlu0 %v2312, 127
        %v2332 = vpop.permute.xlu0 %2331
        %2333 = vrot.lane.b32.xlu0 %v2313, 127
        %v2334 = vpop.permute.xlu0 %2333
        %2335 = vrot.lane.b32.xlu0 %v2314, 127
        %v2336 = vpop.permute.xlu0 %2335
        %2337 = vrot.lane.b32.xlu0 %v2315, 127
        %v2338 = vpop.permute.xlu0 %2337
        %2339 = vrot.lane.b32.xlu0 %v2316, 127
        %v2340 = vpop.permute.xlu0 %2339
        %2349 = vrot.lane.b32.xlu0 %v2309, 126
        %v2350 = vpop.permute.xlu0 %2349
        %2351 = vrot.lane.b32.xlu0 %v2310, 126
        %v2352 = vpop.permute.xlu0 %2351
        %2353 = vrot.lane.b32.xlu0 %v2311, 126
        %v2354 = vpop.permute.xlu0 %2353
        %2355 = vrot.lane.b32.xlu0 %v2312, 126
        %v2356 = vpop.permute.xlu0 %2355
        %2357 = vrot.lane.b32.xlu0 %v2313, 126
        %v2358 = vpop.permute.xlu0 %2357
        %2359 = vrot.lane.b32.xlu0 %v2314, 126
        %v2360 = vpop.permute.xlu0 %2359
        %2361 = vrot.lane.b32.xlu0 %v2315, 126
        %v2362 = vpop.permute.xlu0 %2361
        %2363 = vrot.lane.b32.xlu0 %v2316, 126
        %v2364 = vpop.permute.xlu0 %2363
        %2373 = vrot.lane.b32.xlu0 %v2309, 125
        %v2374 = vpop.permute.xlu0 %2373
        %2375 = vrot.lane.b32.xlu0 %v2310, 125
        %v2376 = vpop.permute.xlu0 %2375
        %2377 = vrot.lane.b32.xlu0 %v2311, 125
        %v2378 = vpop.permute.xlu0 %2377
        %2379 = vrot.lane.b32.xlu0 %v2312, 125
        %v2380 = vpop.permute.xlu0 %2379
        %2381 = vrot.lane.b32.xlu0 %v2313, 125
        %v2382 = vpop.permute.xlu0 %2381
        %2383 = vrot.lane.b32.xlu0 %v2314, 125
        %v2384 = vpop.permute.xlu0 %2383
        %2385 = vrot.lane.b32.xlu0 %v2315, 125
        %v2386 = vpop.permute.xlu0 %2385
        %2387 = vrot.lane.b32.xlu0 %v2316, 125
        %v2388 = vpop.permute.xlu0 %2387
        %v2397 = vld [vmem:[%s1 + $0x138] sm:$0xff]
        %v2398 = vld [vmem:[%s1 + $0x140] sm:$0xff]
        %v2399 = vld [vmem:[%s2 + $0x138] sm:$0xff]
        %v2400 = vld [vmem:[%s2 + $0x140] sm:$0xff]
        %v2401 = vpack.c.bf16 %v2310, %v2309
        %v2402 = vpack.c.bf16 %v2312, %v2311
        %v2403 = vpack.c.bf16 %v2314, %v2313
        %v2404 = vpack.c.bf16 %v2316, %v2315
        %v2405 = vpack.c.bf16 %v2328, %v2326
        %v2406 = vpack.c.bf16 %v2332, %v2330
        %v2407 = vpack.c.bf16 %v2336, %v2334
        %v2408 = vpack.c.bf16 %v2340, %v2338
        %v2409 = vpack.c.bf16 %v2352, %v2350
        %v2410 = vpack.c.bf16 %v2356, %v2354
        %v2411 = vpack.c.bf16 %v2360, %v2358
        %v2412 = vpack.c.bf16 %v2364, %v2362
        %v2413 = vpack.c.bf16 %v2376, %v2374
        %v2414 = vpack.c.bf16 %v2380, %v2378
        %v2415 = vpack.c.bf16 %v2384, %v2382
        %v2416 = vpack.c.bf16 %v2388, %v2386
        %2418 = vset.pattern.permute.xlu0 0
        %2419 = vperm.xlu0 %2418, %v2399
        %v2420 = vpop.permute.xlu0 %2419
        %2423 = vset.pattern.permute.xlu0 0
        %2424 = vperm.xlu0 %2423, %v2400
        %v2425 = vpop.permute.xlu0 %2424
        %v2429 = vunpack.c.l.b16 %v2397
        %v2430 = vunpack.c.h.b16 %v2397
        %v2431 = vunpack.c.l.b16 %v2398
        %v2432 = vunpack.c.h.b16 %v2398
        %v2433 = vpack.c.b16 %v2431, %v2429
        %v2434 = vpack.c.b16 %v2432, %v2430
        %2437 = vmatprep.subr.bf16.mxu0 0
        %2438 = vmatpush1.bf16.msra.mxu0 %v2401
        %2439 = vmatprep.subr.bf16.mxu0 0
        %2440 = vmatpush1.bf16.msra.mxu0 %v2402
        %2441 = vmatprep.subr.bf16.mxu0 0
        %2442 = vmatpush1.bf16.msra.mxu0 %v2403
        %2443 = vmatprep.subr.bf16.mxu0 0
        %2444 = vmatpush1.bf16.msra.mxu0 %v2404
        %2445 = vmatprep.subr.bf16.mxu0 0
        %2446 = vmatpush1.bf16.msra.mxu0 %v2405
        %2447 = vmatprep.subr.bf16.mxu0 0
        %2448 = vmatpush1.bf16.msra.mxu0 %v2406
        %2449 = vmatprep.subr.bf16.mxu0 0
        %2450 = vmatpush1.bf16.msra.mxu0 %v2407
        %2451 = vmatprep.subr.bf16.mxu0 0
        %2452 = vmatpush1.bf16.msra.mxu0 %v2408
        %2453 = vmatprep.subr.bf16.mxu0 0
        %2454 = vmatpush1.bf16.msra.mxu0 %v2409
        %2455 = vmatprep.subr.bf16.mxu0 0
        %2456 = vmatpush1.bf16.msra.mxu0 %v2410
        %2457 = vmatprep.subr.bf16.mxu0 0
        %2458 = vmatpush1.bf16.msra.mxu0 %v2411
        %2459 = vmatprep.subr.bf16.mxu0 0
        %2460 = vmatpush1.bf16.msra.mxu0 %v2412
        %2461 = vmatprep.subr.bf16.mxu0 0
        %2462 = vmatpush1.bf16.msra.mxu0 %v2413
        %2463 = vmatprep.subr.bf16.mxu0 0
        %2464 = vmatpush1.bf16.msra.mxu0 %v2414
        %2465 = vmatprep.subr.bf16.mxu0 0
        %2466 = vmatpush1.bf16.msra.mxu0 %v2415
        %2467 = vmatprep.subr.bf16.mxu0 0
        %2468 = vmatpush1.bf16.msra.mxu0 %v2416
        %2469 = vmatprep.mubr.bf16.mxu0 %v2434
        %2470 = vmatmul.mubr.bf16.gmra.mrb[0].mxu0 %v2433
        %v2471 = vpop.f32.mrb[0].mxu0
        %v2472 = vadd.f32 %v2420, %v2471
        %v2473 = vpop.f32.mrb[0].mxu0
        %v2474 = vpop.f32.mrb[0].mxu0
        %v2475 = vadd.f32 %v2425, %v2474
        %v2476 = vpop.f32.mrb[0].mxu0
        %2477 = vdwg.mxu0
        %2479 = vrot.lane.b32.xlu0 %v2472, 3
        %v2480 = vpop.permute.xlu0 %2479
        %v2482 = vsel %vm331, 0.0, %v2480
        %vm2483 = vcmask 64512
        %v2484 = vsel %vm2483, %v2482, 0.0
        %2486 = vrot.lane.b32.xlu0 %v2484, 127
        %v2487 = vpop.permute.xlu0 %2486
        %2489 = vrot.lane.b32.xlu0 %v2484, 126
        %v2490 = vpop.permute.xlu0 %2489
        %2492 = vrot.lane.b32.xlu0 %v2484, 125
        %v2493 = vpop.permute.xlu0 %2492
        %v2495 = vld [vmem:[%s1 + $0x148] sm:$0xf]
        %v2496 = vld [vmem:[%s1 + $0x150] sm:$0xf]
        %v2497 = vld [vmem:[%s1 + $0x158] sm:$0xf]
        %v2498 = vld [vmem:[%s1 + $0x160] sm:$0xf]
        %v2499 = vld [vmem:[%s1 + $0x168] sm:$0xf]
        %v2500 = vld [vmem:[%s1 + $0x170] sm:$0xf]
        %v2501 = vld [vmem:[%s1 + $0x178] sm:$0xf]
        %v2502 = vld [vmem:[%s1 + $0x180] sm:$0xf]
        %v2503 = vld [vmem:[%s2 + $0x148] sm:$0xff]
        %v2504 = vld [vmem:[%s2 + $0x150] sm:$0xff]
        %v2505 = vld [vmem:[%s2 + $0x158] sm:$0xff]
        %v2506 = vld [vmem:[%s2 + $0x160] sm:$0xff]
        %v2507 = vld [vmem:[%s2 + $0x168] sm:$0xff]
        %v2508 = vld [vmem:[%s2 + $0x170] sm:$0xff]
        %v2509 = vld [vmem:[%s2 + $0x178] sm:$0xff]
        %v2510 = vld [vmem:[%s2 + $0x180] sm:$0xff]
        %v2511 = vpack.c.bf16 %v2487, %v2484
        %v2512 = vpack.c.bf16 %v2493, %v2490
        %2514 = vset.pattern.permute.xlu0 0
        %2515 = vperm.xlu0 %2514, %v2503
        %v2516 = vpop.permute.xlu0 %2515
        %2519 = vset.pattern.permute.xlu0 0
        %2520 = vperm.xlu0 %2519, %v2504
        %v2521 = vpop.permute.xlu0 %2520
        %2524 = vset.pattern.permute.xlu0 0
        %2525 = vperm.xlu0 %2524, %v2505
        %v2526 = vpop.permute.xlu0 %2525
        %2529 = vset.pattern.permute.xlu0 0
        %2530 = vperm.xlu0 %2529, %v2506
        %v2531 = vpop.permute.xlu0 %2530
        %2534 = vset.pattern.permute.xlu0 0
        %2535 = vperm.xlu0 %2534, %v2507
        %v2536 = vpop.permute.xlu0 %2535
        %2539 = vset.pattern.permute.xlu0 0
        %2540 = vperm.xlu0 %2539, %v2508
        %v2541 = vpop.permute.xlu0 %2540
        %2544 = vset.pattern.permute.xlu0 0
        %2545 = vperm.xlu0 %2544, %v2509
        %v2546 = vpop.permute.xlu0 %2545
        %2549 = vset.pattern.permute.xlu0 0
        %2550 = vperm.xlu0 %2549, %v2510
        %v2551 = vpop.permute.xlu0 %2550
        %v2561 = vunpack.c.l.b16 %v2495
        %v2562 = vunpack.c.l.b16 %v2496
        %v2563 = vunpack.c.l.b16 %v2497
        %v2564 = vunpack.c.l.b16 %v2498
        %v2565 = vunpack.c.l.b16 %v2499
        %v2566 = vunpack.c.l.b16 %v2500
        %v2567 = vunpack.c.l.b16 %v2501
        %v2568 = vunpack.c.l.b16 %v2502
        %v2569 = vpack.c.b16 %v2562, %v2561
        %v2570 = vpack.c.b16 %v2564, %v2563
        %v2571 = vpack.c.b16 %v2566, %v2565
        %v2572 = vpack.c.b16 %v2568, %v2567
        %v2574 = vsel %vm1127, %v2569, 0
        %v2577 = vsel %vm1127, %v2570, 0
        %v2580 = vsel %vm1127, %v2571, 0
        %v2583 = vsel %vm1127, %v2572, 0
        %2585 = vmatprep.subr.bf16.mxu0 0
        %2586 = vmatpush1.bf16.msra.mxu0 %v2511
        %2587 = vmatprep.subr.bf16.mxu0 0
        %2588 = vmatpush1.bf16.msra.mxu0 %v2512
        %2589 = vmatprep.subr.bf16.mxu0 0
        %2590 = vmatpush1.bf16.msra.mxu0 0
        %2591 = vmatprep.subr.bf16.mxu0 0
        %2592 = vmatpush1.bf16.msra.mxu0 0
        %2593 = vmatprep.subr.bf16.mxu0 0
        %2594 = vmatpush1.bf16.msra.mxu0 0
        %2595 = vmatprep.subr.bf16.mxu0 0
        %2596 = vmatpush1.bf16.msra.mxu0 0
        %2597 = vmatprep.subr.bf16.mxu0 0
        %2598 = vmatpush1.bf16.msra.mxu0 0
        %2599 = vmatprep.subr.bf16.mxu0 0
        %2600 = vmatpush1.bf16.msra.mxu0 0
        %2601 = vmatprep.subr.bf16.mxu0 0
        %2602 = vmatpush1.bf16.msra.mxu0 0
        %2603 = vmatprep.subr.bf16.mxu0 0
        %2604 = vmatpush1.bf16.msra.mxu0 0
        %2605 = vmatprep.subr.bf16.mxu0 0
        %2606 = vmatpush1.bf16.msra.mxu0 0
        %2607 = vmatprep.subr.bf16.mxu0 0
        %2608 = vmatpush1.bf16.msra.mxu0 0
        %2609 = vmatprep.subr.bf16.mxu0 0
        %2610 = vmatpush1.bf16.msra.mxu0 0
        %2611 = vmatprep.subr.bf16.mxu0 0
        %2612 = vmatpush1.bf16.msra.mxu0 0
        %2613 = vmatprep.subr.bf16.mxu0 0
        %2614 = vmatpush1.bf16.msra.mxu0 0
        %2615 = vmatprep.subr.bf16.mxu0 0
        %2616 = vmatpush1.bf16.msra.mxu0 0
        %2617 = vmatprep.mubr.bf16.mxu0 0
        %2618 = vmatmul.mubr.bf16.gmra.mrb[0].mxu0 %v2574
        %v2619 = vpop.f32.mrb[0].mxu0
        %v2620 = vadd.f32 %v2516, %v2619
        %v2621 = vpop.f32.mrb[0].mxu0
        %v2622 = vpop.f32.mrb[0].mxu0
        %v2623 = vadd.f32 %v2521, %v2622
        %v2624 = vpop.f32.mrb[0].mxu0
        %2625 = vmatprep.mubr.bf16.mxu0 0
        %2626 = vmatmul.mubr.bf16.gmra.mrb[0].mxu0 %v2577
        %v2627 = vpop.f32.mrb[0].mxu0
        %v2628 = vadd.f32 %v2526, %v2627
        %v2629 = vpop.f32.mrb[0].mxu0
        %v2630 = vpop.f32.mrb[0].mxu0
        %v2631 = vadd.f32 %v2531, %v2630
        %v2632 = vpop.f32.mrb[0].mxu0
        %2633 = vmatprep.mubr.bf16.mxu0 0
        %2634 = vmatmul.mubr.bf16.gmra.mrb[0].mxu0 %v2580
        %v2635 = vpop.f32.mrb[0].mxu0
        %v2636 = vadd.f32 %v2536, %v2635
        %v2637 = vpop.f32.mrb[0].mxu0
        %v2638 = vpop.f32.mrb[0].mxu0
        %v2639 = vadd.f32 %v2541, %v2638
        %v2640 = vpop.f32.mrb[0].mxu0
        %2641 = vmatprep.mubr.bf16.mxu0 0
        %2642 = vmatmul.mubr.bf16.gmra.mrb[0].mxu0 %v2583
        %v2643 = vpop.f32.mrb[0].mxu0
        %v2644 = vadd.f32 %v2546, %v2643
        %v2645 = vpop.f32.mrb[0].mxu0
        %v2646 = vpop.f32.mrb[0].mxu0
        %v2647 = vadd.f32 %v2551, %v2646
        %v2648 = vpop.f32.mrb[0].mxu0
        %2649 = vdwg.mxu0
        %v2650 = vxor.u32 %v2620, 2147483648
        %v2651 = vxor.u32 %v2623, 2147483648
        %v2652 = vxor.u32 %v2628, 2147483648
        %v2653 = vxor.u32 %v2631, 2147483648
        %v2654 = vxor.u32 %v2636, 2147483648
        %v2655 = vxor.u32 %v2639, 2147483648
        %v2656 = vxor.u32 %v2644, 2147483648
        %v2657 = vxor.u32 %v2647, 2147483648
        %v2658 = vmul.f32 %v2650, 1.442695
        %v2659 = vpow.pop %v2658
        %v2660 = vmul.f32 %v2651, 1.442695
        %v2661 = vpow.pop %v2660
        %v2662 = vmul.f32 %v2652, 1.442695
        %v2663 = vpow.pop %v2662
        %v2664 = vmul.f32 %v2653, 1.442695
        %v2665 = vpow.pop %v2664
        %v2666 = vmul.f32 %v2654, 1.442695
        %v2667 = vpow.pop %v2666
        %v2668 = vmul.f32 %v2655, 1.442695
        %v2669 = vpow.pop %v2668
        %v2670 = vmul.f32 %v2656, 1.442695
        %v2671 = vpow.pop %v2670
        %v2672 = vmul.f32 %v2657, 1.442695
        %v2673 = vpow.pop %v2672
        %v2674 = vadd.f32 %v2659, 1.0
        %v2675 = vadd.f32 %v2661, 1.0
        %v2676 = vadd.f32 %v2663, 1.0
        %v2677 = vadd.f32 %v2665, 1.0
        %v2678 = vadd.f32 %v2667, 1.0
        %v2679 = vadd.f32 %v2669, 1.0
        %v2680 = vadd.f32 %v2671, 1.0
        %v2681 = vadd.f32 %v2673, 1.0
        %v2682 = vrcp.pop %v2674
        %v2683 = vmul.f32 1.0, %v2682
        %v2684 = vrcp.pop %v2675
        %v2685 = vmul.f32 1.0, %v2684
        %v2686 = vrcp.pop %v2676
        %v2687 = vmul.f32 1.0, %v2686
        %v2688 = vrcp.pop %v2677
        %v2689 = vmul.f32 1.0, %v2688
        %v2690 = vrcp.pop %v2678
        %v2691 = vmul.f32 1.0, %v2690
        %v2692 = vrcp.pop %v2679
        %v2693 = vmul.f32 1.0, %v2692
        %v2694 = vrcp.pop %v2680
        %v2695 = vmul.f32 1.0, %v2694
        %v2696 = vrcp.pop %v2681
        %v2697 = vmul.f32 1.0, %v2696
        %v2698 = vmul.f32 %v2620, %v2683
        %v2699 = vmul.f32 %v2623, %v2685
        %v2700 = vmul.f32 %v2628, %v2687
        %v2701 = vmul.f32 %v2631, %v2689
        %v2702 = vmul.f32 %v2636, %v2691
        %v2703 = vmul.f32 %v2639, %v2693
        %v2704 = vmul.f32 %v2644, %v2695
        %v2705 = vmul.f32 %v2647, %v2697
        %v2706 = vld [vmem:[#allocation5] sm:$0xff]
        %v2708 = vsel %vm2483, %v2698, 0
        %v2711 = vsel %vm2483, %v2699, 0
        %v2714 = vsel %vm2483, %v2700, 0
        %v2717 = vsel %vm2483, %v2701, 0
        %v2720 = vsel %vm2483, %v2702, 0
        %v2723 = vsel %vm2483, %v2703, 0
        %v2726 = vsel %vm2483, %v2704, 0
        %v2729 = vsel %vm2483, %v2705, 0
        %2731 = vmatprep.subr.mxu0 0.0
        %2732 = vmatpush1.msra.mxu0 %v2706
        %2733 = vmatprep.subr.mxu0 0.0
        %2734 = vmatpush1.msra.mxu0 0.0
        %2735 = vmatprep.subr.mxu0 0.0
        %2736 = vmatpush1.msra.mxu0 0.0
        %2737 = vmatprep.subr.mxu0 0.0
        %2738 = vmatpush1.msra.mxu0 0.0
        %2739 = vmatprep.subr.mxu0 0.0
        %2740 = vmatpush1.msra.mxu0 0.0
        %2741 = vmatprep.subr.mxu0 0.0
        %2742 = vmatpush1.msra.mxu0 0.0
        %2743 = vmatprep.subr.mxu0 0.0
        %2744 = vmatpush1.msra.mxu0 0.0
        %2745 = vmatprep.subr.mxu0 0.0
        %2746 = vmatpush1.msra.mxu0 0.0
        %2747 = vmatprep.subr.mxu0 0.0
        %2748 = vmatpush1.msra.mxu0 0.0
        %2749 = vmatprep.subr.mxu0 0.0
        %2750 = vmatpush1.msra.mxu0 0.0
        %2751 = vmatprep.subr.mxu0 0.0
        %2752 = vmatpush1.msra.mxu0 0.0
        %2753 = vmatprep.subr.mxu0 0.0
        %2754 = vmatpush1.msra.mxu0 0.0
        %2755 = vmatprep.subr.mxu0 0.0
        %2756 = vmatpush1.msra.mxu0 0.0
        %2757 = vmatprep.subr.mxu0 0.0
        %2758 = vmatpush1.msra.mxu0 0.0
        %2759 = vmatprep.subr.mxu0 0.0
        %2760 = vmatpush1.msra.mxu0 0.0
        %2761 = vmatprep.subr.mxu0 0.0
        %2762 = vmatpush1.msra.mxu0 0.0
        %2763 = vmatprep.subr.mxu0 0.0
        %2764 = vmatpush1.msra.mxu0 0.0
        %2765 = vmatprep.subr.mxu0 0.0
        %2766 = vmatpush1.msra.mxu0 0.0
        %2767 = vmatprep.subr.mxu0 0.0
        %2768 = vmatpush1.msra.mxu0 0.0
        %2769 = vmatprep.subr.mxu0 0.0
        %2770 = vmatpush1.msra.mxu0 0.0
        %2771 = vmatprep.subr.mxu0 0.0
        %2772 = vmatpush1.msra.mxu0 0.0
        %2773 = vmatprep.subr.mxu0 0.0
        %2774 = vmatpush1.msra.mxu0 0.0
        %2775 = vmatprep.subr.mxu0 0.0
        %2776 = vmatpush1.msra.mxu0 0.0
        %2777 = vmatprep.subr.mxu0 0.0
        %2778 = vmatpush1.msra.mxu0 0.0
        %2779 = vmatprep.subr.mxu0 0.0
        %2780 = vmatpush1.msra.mxu0 0.0
        %2781 = vmatprep.subr.mxu0 0.0
        %2782 = vmatpush1.msra.mxu0 0.0
        %2783 = vmatprep.subr.mxu0 0.0
        %2784 = vmatpush1.msra.mxu0 0.0
        %2785 = vmatprep.subr.mxu0 0.0
        %2786 = vmatpush1.msra.mxu0 0.0
        %2787 = vmatprep.subr.mxu0 0.0
        %2788 = vmatpush1.msra.mxu0 0.0
        %2789 = vmatprep.subr.mxu0 0.0
        %2790 = vmatpush1.msra.mxu0 0.0
        %2791 = vmatprep.subr.mxu0 0.0
        %2792 = vmatpush1.msra.mxu0 0.0
        %2793 = vmatprep.subr.mxu0 0.0
        %2794 = vmatpush1.msra.mxu0 0.0
        %2795 = vmatprep.mubr.f32.mxu0 0.0
        %2796 = vmatmul.mubr.f32.gmra.mrb[0].mxu0 %v2708
        %v2797 = vpop.f32.mrb[0].mxu0
        %v2798 = vadd.f32 0.0, %v2797
        %v2799 = vpop.f32.mrb[0].mxu0
        %2800 = vmatprep.mubr.f32.mxu0 0.0
        %2801 = vmatmul.mubr.f32.gmra.mrb[0].mxu0 %v2711
        %v2802 = vpop.f32.mrb[0].mxu0
        %v2803 = vadd.f32 0.0, %v2802
        %v2804 = vpop.f32.mrb[0].mxu0
        %2805 = vmatprep.mubr.f32.mxu0 0.0
        %2806 = vmatmul.mubr.f32.gmra.mrb[0].mxu0 %v2714
        %v2807 = vpop.f32.mrb[0].mxu0
        %v2808 = vadd.f32 0.0, %v2807
        %v2809 = vpop.f32.mrb[0].mxu0
        %2810 = vmatprep.mubr.f32.mxu0 0.0
        %2811 = vmatmul.mubr.f32.gmra.mrb[0].mxu0 %v2717
        %v2812 = vpop.f32.mrb[0].mxu0
        %v2813 = vadd.f32 0.0, %v2812
        %v2814 = vpop.f32.mrb[0].mxu0
        %2815 = vmatprep.mubr.f32.mxu0 0.0
        %2816 = vmatmul.mubr.f32.gmra.mrb[0].mxu0 %v2720
        %v2817 = vpop.f32.mrb[0].mxu0
        %v2818 = vadd.f32 0.0, %v2817
        %v2819 = vpop.f32.mrb[0].mxu0
        %2820 = vmatprep.mubr.f32.mxu0 0.0
        %2821 = vmatmul.mubr.f32.gmra.mrb[0].mxu0 %v2723
        %v2822 = vpop.f32.mrb[0].mxu0
        %v2823 = vadd.f32 0.0, %v2822
        %v2824 = vpop.f32.mrb[0].mxu0
        %2825 = vmatprep.mubr.f32.mxu0 0.0
        %2826 = vmatmul.mubr.f32.gmra.mrb[0].mxu0 %v2726
        %v2827 = vpop.f32.mrb[0].mxu0
        %v2828 = vadd.f32 0.0, %v2827
        %v2829 = vpop.f32.mrb[0].mxu0
        %2830 = vmatprep.mubr.f32.mxu0 0.0
        %2831 = vmatmul.mubr.f32.gmra.mrb[0].mxu0 %v2729
        %v2832 = vpop.f32.mrb[0].mxu0
        %v2833 = vadd.f32 0.0, %v2832
        %v2834 = vpop.f32.mrb[0].mxu0
        %2835 = vdwg.mxu0
        %2844 = vrot.lane.b32.xlu0 %v2798, 1
        %v2845 = vpop.permute.xlu0 %2844
        %2846 = vrot.lane.b32.xlu0 %v2803, 1
        %v2847 = vpop.permute.xlu0 %2846
        %2848 = vrot.lane.b32.xlu0 %v2808, 1
        %v2849 = vpop.permute.xlu0 %2848
        %2850 = vrot.lane.b32.xlu0 %v2813, 1
        %v2851 = vpop.permute.xlu0 %2850
        %2852 = vrot.lane.b32.xlu0 %v2818, 1
        %v2853 = vpop.permute.xlu0 %2852
        %2854 = vrot.lane.b32.xlu0 %v2823, 1
        %v2855 = vpop.permute.xlu0 %2854
        %2856 = vrot.lane.b32.xlu0 %v2828, 1
        %v2857 = vpop.permute.xlu0 %2856
        %2858 = vrot.lane.b32.xlu0 %v2833, 1
        %v2859 = vpop.permute.xlu0 %2858
        %v2868 = vsel %vm470, 0.0, %v2845
        %v2869 = vsel %vm470, 0.0, %v2847
        %v2870 = vsel %vm470, 0.0, %v2849
        %v2871 = vsel %vm470, 0.0, %v2851
        %v2872 = vsel %vm470, 0.0, %v2853
        %v2873 = vsel %vm470, 0.0, %v2855
        %v2874 = vsel %vm470, 0.0, %v2857
        %v2875 = vsel %vm470, 0.0, %v2859
        %v2876 = vsel %vm1419, %v2868, 0.0
        %v2877 = vsel %vm1419, %v2869, 0.0
        %v2878 = vsel %vm1419, %v2870, 0.0
        %v2879 = vsel %vm1419, %v2871, 0.0
        %v2880 = vsel %vm1419, %v2872, 0.0
        %v2881 = vsel %vm1419, %v2873, 0.0
        %v2882 = vsel %vm1419, %v2874, 0.0
        %v2883 = vsel %vm1419, %v2875, 0.0
        %2892 = vrot.lane.b32.xlu0 %v2876, 127
        %v2893 = vpop.permute.xlu0 %2892
        %2894 = vrot.lane.b32.xlu0 %v2877, 127
        %v2895 = vpop.permute.xlu0 %2894
        %2896 = vrot.lane.b32.xlu0 %v2878, 127
        %v2897 = vpop.permute.xlu0 %2896
        %2898 = vrot.lane.b32.xlu0 %v2879, 127
        %v2899 = vpop.permute.xlu0 %2898
        %2900 = vrot.lane.b32.xlu0 %v2880, 127
        %v2901 = vpop.permute.xlu0 %2900
        %2902 = vrot.lane.b32.xlu0 %v2881, 127
        %v2903 = vpop.permute.xlu0 %2902
        %2904 = vrot.lane.b32.xlu0 %v2882, 127
        %v2905 = vpop.permute.xlu0 %2904
        %2906 = vrot.lane.b32.xlu0 %v2883, 127
        %v2907 = vpop.permute.xlu0 %2906
        %2916 = vrot.lane.b32.xlu0 %v2876, 126
        %v2917 = vpop.permute.xlu0 %2916
        %2918 = vrot.lane.b32.xlu0 %v2877, 126
        %v2919 = vpop.permute.xlu0 %2918
        %2920 = vrot.lane.b32.xlu0 %v2878, 126
        %v2921 = vpop.permute.xlu0 %2920
        %2922 = vrot.lane.b32.xlu0 %v2879, 126
        %v2923 = vpop.permute.xlu0 %2922
        %2924 = vrot.lane.b32.xlu0 %v2880, 126
        %v2925 = vpop.permute.xlu0 %2924
        %2926 = vrot.lane.b32.xlu0 %v2881, 126
        %v2927 = vpop.permute.xlu0 %2926
        %2928 = vrot.lane.b32.xlu0 %v2882, 126
        %v2929 = vpop.permute.xlu0 %2928
        %2930 = vrot.lane.b32.xlu0 %v2883, 126
        %v2931 = vpop.permute.xlu0 %2930
        %v2940 = vld [vmem:[%s1 + $0x1c8] sm:$0xff]
        %v2941 = vld [vmem:[%s1 + $0x1d0] sm:$0xff]
        %v2942 = vld [vmem:[%s1 + $0x1d8] sm:$0xff]
        %v2943 = vld [vmem:[%s1 + $0x1e0] sm:$0xff]
        %v2944 = vld [vmem:[%s2 + $0x1c8] sm:$0xff]
        %v2945 = vld [vmem:[%s2 + $0x1d0] sm:$0xff]
        %v2946 = vld [vmem:[%s2 + $0x1d8] sm:$0xff]
        %v2947 = vld [vmem:[%s2 + $0x1e0] sm:$0xff]
        %v2948 = vpack.c.bf16 %v2877, %v2876
        %v2949 = vpack.c.bf16 %v2879, %v2878
        %v2950 = vpack.c.bf16 %v2881, %v2880
        %v2951 = vpack.c.bf16 %v2883, %v2882
        %v2952 = vpack.c.bf16 %v2895, %v2893
        %v2953 = vpack.c.bf16 %v2899, %v2897
        %v2954 = vpack.c.bf16 %v2903, %v2901
        %v2955 = vpack.c.bf16 %v2907, %v2905
        %v2956 = vpack.c.bf16 %v2919, %v2917
        %v2957 = vpack.c.bf16 %v2923, %v2921
        %v2958 = vpack.c.bf16 %v2927, %v2925
        %v2959 = vpack.c.bf16 %v2931, %v2929
        %2961 = vset.pattern.permute.xlu0 0
        %2962 = vperm.xlu0 %2961, %v2944
        %v2963 = vpop.permute.xlu0 %2962
        %2966 = vset.pattern.permute.xlu0 0
        %2967 = vperm.xlu0 %2966, %v2945
        %v2968 = vpop.permute.xlu0 %2967
        %2971 = vset.pattern.permute.xlu0 0
        %2972 = vperm.xlu0 %2971, %v2946
        %v2973 = vpop.permute.xlu0 %2972
        %2976 = vset.pattern.permute.xlu0 0
        %2977 = vperm.xlu0 %2976, %v2947
        %v2978 = vpop.permute.xlu0 %2977
        %v2984 = vunpack.c.l.b16 %v2940
        %v2985 = vunpack.c.h.b16 %v2940
        %v2986 = vunpack.c.l.b16 %v2941
        %v2987 = vunpack.c.h.b16 %v2941
        %v2988 = vunpack.c.l.b16 %v2942
        %v2989 = vunpack.c.h.b16 %v2942
        %v2990 = vunpack.c.l.b16 %v2943
        %v2991 = vunpack.c.h.b16 %v2943
        %v2992 = vpack.c.b16 %v2986, %v2984
        %v2993 = vpack.c.b16 %v2987, %v2985
        %v2994 = vpack.c.b16 %v2990, %v2988
        %v2995 = vpack.c.b16 %v2991, %v2989
        %v2999 = vsel %vm790, %v2993, 0
        %v3002 = vsel %vm790, %v2995, 0
        %3004 = vmatprep.subr.bf16.mxu0 0
        %3005 = vmatpush1.bf16.msra.mxu0 %v2948
        %3006 = vmatprep.subr.bf16.mxu0 0
        %3007 = vmatpush1.bf16.msra.mxu0 %v2949
        %3008 = vmatprep.subr.bf16.mxu0 0
        %3009 = vmatpush1.bf16.msra.mxu0 %v2950
        %3010 = vmatprep.subr.bf16.mxu0 0
        %3011 = vmatpush1.bf16.msra.mxu0 %v2951
        %3012 = vmatprep.subr.bf16.mxu0 0
        %3013 = vmatpush1.bf16.msra.mxu0 %v2952
        %3014 = vmatprep.subr.bf16.mxu0 0
        %3015 = vmatpush1.bf16.msra.mxu0 %v2953
        %3016 = vmatprep.subr.bf16.mxu0 0
        %3017 = vmatpush1.bf16.msra.mxu0 %v2954
        %3018 = vmatprep.subr.bf16.mxu0 0
        %3019 = vmatpush1.bf16.msra.mxu0 %v2955
        %3020 = vmatprep.subr.bf16.mxu0 0
        %3021 = vmatpush1.bf16.msra.mxu0 %v2956
        %3022 = vmatprep.subr.bf16.mxu0 0
        %3023 = vmatpush1.bf16.msra.mxu0 %v2957
        %3024 = vmatprep.subr.bf16.mxu0 0
        %3025 = vmatpush1.bf16.msra.mxu0 %v2958
        %3026 = vmatprep.subr.bf16.mxu0 0
        %3027 = vmatpush1.bf16.msra.mxu0 %v2959
        %3028 = vmatprep.subr.bf16.mxu0 0
        %3029 = vmatpush1.bf16.msra.mxu0 0
        %3030 = vmatprep.subr.bf16.mxu0 0
        %3031 = vmatpush1.bf16.msra.mxu0 0
        %3032 = vmatprep.subr.bf16.mxu0 0
        %3033 = vmatpush1.bf16.msra.mxu0 0
        %3034 = vmatprep.subr.bf16.mxu0 0
        %3035 = vmatpush1.bf16.msra.mxu0 0
        %3036 = vmatprep.mubr.bf16.mxu0 %v2999
        %3037 = vmatmul.mubr.bf16.gmra.mrb[0].mxu0 %v2992
        %v3038 = vpop.f32.mrb[0].mxu0
        %v3039 = vadd.f32 %v2963, %v3038
        %v3040 = vpop.f32.mrb[0].mxu0
        %v3041 = vpop.f32.mrb[0].mxu0
        %v3042 = vadd.f32 %v2968, %v3041
        %v3043 = vpop.f32.mrb[0].mxu0
        %3044 = vmatprep.mubr.bf16.mxu0 %v3002
        %3045 = vmatmul.mubr.bf16.gmra.mrb[0].mxu0 %v2994
        %v3046 = vpop.f32.mrb[0].mxu0
        %v3047 = vadd.f32 %v2973, %v3046
        %v3048 = vpop.f32.mrb[0].mxu0
        %v3049 = vpop.f32.mrb[0].mxu0
        %v3050 = vadd.f32 %v2978, %v3049
        %v3051 = vpop.f32.mrb[0].mxu0
        %3052 = vdwg.mxu0
        %v3053 = vld [vmem:[%s1 + $0x188] sm:$0xff]
        %v3054 = vld [vmem:[%s1 + $0x190] sm:$0xff]
        %v3055 = vld [vmem:[%s1 + $0x198] sm:$0xff]
        %v3056 = vld [vmem:[%s1 + $0x1a0] sm:$0xff]
        %v3057 = vld [vmem:[%s2 + $0x188] sm:$0xff]
        %v3058 = vld [vmem:[%s2 + $0x190] sm:$0xff]
        %v3059 = vld [vmem:[%s2 + $0x198] sm:$0xff]
        %v3060 = vld [vmem:[%s2 + $0x1a0] sm:$0xff]
        %3062 = vset.pattern.permute.xlu0 0
        %3063 = vperm.xlu0 %3062, %v3057
        %v3064 = vpop.permute.xlu0 %3063
        %3067 = vset.pattern.permute.xlu0 0
        %3068 = vperm.xlu0 %3067, %v3058
        %v3069 = vpop.permute.xlu0 %3068
        %3072 = vset.pattern.permute.xlu0 0
        %3073 = vperm.xlu0 %3072, %v3059
        %v3074 = vpop.permute.xlu0 %3073
        %3077 = vset.pattern.permute.xlu0 0
        %3078 = vperm.xlu0 %3077, %v3060
        %v3079 = vpop.permute.xlu0 %3078
        %v3085 = vunpack.c.l.b16 %v3053
        %v3086 = vunpack.c.h.b16 %v3053
        %v3087 = vunpack.c.l.b16 %v3054
        %v3088 = vunpack.c.h.b16 %v3054
        %v3089 = vunpack.c.l.b16 %v3055
        %v3090 = vunpack.c.h.b16 %v3055
        %v3091 = vunpack.c.l.b16 %v3056
        %v3092 = vunpack.c.h.b16 %v3056
        %v3093 = vpack.c.b16 %v3087, %v3085
        %v3094 = vpack.c.b16 %v3088, %v3086
        %v3095 = vpack.c.b16 %v3091, %v3089
        %v3096 = vpack.c.b16 %v3092, %v3090
        %v3100 = vsel %vm790, %v3094, 0
        %v3103 = vsel %vm790, %v3096, 0
        %3105 = vmatprep.subr.bf16.mxu0 0
        %3106 = vmatpush1.bf16.msra.mxu0 %v2948
        %3107 = vmatprep.subr.bf16.mxu0 0
        %3108 = vmatpush1.bf16.msra.mxu0 %v2949
        %3109 = vmatprep.subr.bf16.mxu0 0
        %3110 = vmatpush1.bf16.msra.mxu0 %v2950
        %3111 = vmatprep.subr.bf16.mxu0 0
        %3112 = vmatpush1.bf16.msra.mxu0 %v2951
        %3113 = vmatprep.subr.bf16.mxu0 0
        %3114 = vmatpush1.bf16.msra.mxu0 %v2952
        %3115 = vmatprep.subr.bf16.mxu0 0
        %3116 = vmatpush1.bf16.msra.mxu0 %v2953
        %3117 = vmatprep.subr.bf16.mxu0 0
        %3118 = vmatpush1.bf16.msra.mxu0 %v2954
        %3119 = vmatprep.subr.bf16.mxu0 0
        %3120 = vmatpush1.bf16.msra.mxu0 %v2955
        %3121 = vmatprep.subr.bf16.mxu0 0
        %3122 = vmatpush1.bf16.msra.mxu0 %v2956
        %3123 = vmatprep.subr.bf16.mxu0 0
        %3124 = vmatpush1.bf16.msra.mxu0 %v2957
        %3125 = vmatprep.subr.bf16.mxu0 0
        %3126 = vmatpush1.bf16.msra.mxu0 %v2958
        %3127 = vmatprep.subr.bf16.mxu0 0
        %3128 = vmatpush1.bf16.msra.mxu0 %v2959
        %3129 = vmatprep.subr.bf16.mxu0 0
        %3130 = vmatpush1.bf16.msra.mxu0 0
        %3131 = vmatprep.subr.bf16.mxu0 0
        %3132 = vmatpush1.bf16.msra.mxu0 0
        %3133 = vmatprep.subr.bf16.mxu0 0
        %3134 = vmatpush1.bf16.msra.mxu0 0
        %3135 = vmatprep.subr.bf16.mxu0 0
        %3136 = vmatpush1.bf16.msra.mxu0 0
        %3137 = vmatprep.mubr.bf16.mxu0 %v3100
        %3138 = vmatmul.mubr.bf16.gmra.mrb[0].mxu0 %v3093
        %v3139 = vpop.f32.mrb[0].mxu0
        %v3140 = vadd.f32 %v3064, %v3139
        %v3141 = vpop.f32.mrb[0].mxu0
        %v3142 = vpop.f32.mrb[0].mxu0
        %v3143 = vadd.f32 %v3069, %v3142
        %v3144 = vpop.f32.mrb[0].mxu0
        %3145 = vmatprep.mubr.bf16.mxu0 %v3103
        %3146 = vmatmul.mubr.bf16.gmra.mrb[0].mxu0 %v3095
        %v3147 = vpop.f32.mrb[0].mxu0
        %v3148 = vadd.f32 %v3074, %v3147
        %v3149 = vpop.f32.mrb[0].mxu0
        %v3150 = vpop.f32.mrb[0].mxu0
        %v3151 = vadd.f32 %v3079, %v3150
        %v3152 = vpop.f32.mrb[0].mxu0
        %3153 = vdwg.mxu0
        %v3154 = vxor.u32 %v3140, 2147483648
        %v3155 = vxor.u32 %v3143, 2147483648
        %v3156 = vxor.u32 %v3148, 2147483648
        %v3157 = vxor.u32 %v3151, 2147483648
        %v3158 = vmul.f32 %v3154, 1.442695
        %v3159 = vpow.pop %v3158
        %v3160 = vmul.f32 %v3155, 1.442695
        %v3161 = vpow.pop %v3160
        %v3162 = vmul.f32 %v3156, 1.442695
        %v3163 = vpow.pop %v3162
        %v3164 = vmul.f32 %v3157, 1.442695
        %v3165 = vpow.pop %v3164
        %v3166 = vadd.f32 %v3159, 1.0
        %v3167 = vadd.f32 %v3161, 1.0
        %v3168 = vadd.f32 %v3163, 1.0
        %v3169 = vadd.f32 %v3165, 1.0
        %v3170 = vrcp.pop %v3166
        %v3171 = vmul.f32 1.0, %v3170
        %v3172 = vrcp.pop %v3167
        %v3173 = vmul.f32 1.0, %v3172
        %v3174 = vrcp.pop %v3168
        %v3175 = vmul.f32 1.0, %v3174
        %v3176 = vrcp.pop %v3169
        %v3177 = vmul.f32 1.0, %v3176
        %v3178 = vmul.f32 %v3140, %v3171
        %v3179 = vmul.f32 %v3143, %v3173
        %v3180 = vmul.f32 %v3148, %v3175
        %v3181 = vmul.f32 %v3151, %v3177
        %3186 = vrot.lane.b32.xlu0 %v3178, 1
        %v3187 = vpop.permute.xlu0 %3186
        %3188 = vrot.lane.b32.xlu0 %v3179, 1
        %v3189 = vpop.permute.xlu0 %3188
        %3190 = vrot.lane.b32.xlu0 %v3180, 1
        %v3191 = vpop.permute.xlu0 %3190
        %3192 = vrot.lane.b32.xlu0 %v3181, 1
        %v3193 = vpop.permute.xlu0 %3192
        %v3198 = vsel %vm470, 0.0, %v3187
        %v3199 = vsel %vm470, 0.0, %v3189
        %v3200 = vsel %vm470, 0.0, %v3191
        %v3201 = vsel %vm470, 0.0, %v3193
        %v3202 = vsel %vm1419, %v3198, 0.0
        %v3203 = vsel %vm1419, %v3199, 0.0
        %v3204 = vsel %vm1419, %v3200, 0.0
        %v3205 = vsel %vm1419, %v3201, 0.0
        %3210 = vrot.lane.b32.xlu0 %v3202, 127
        %v3211 = vpop.permute.xlu0 %3210
        %3212 = vrot.lane.b32.xlu0 %v3203, 127
        %v3213 = vpop.permute.xlu0 %3212
        %3214 = vrot.lane.b32.xlu0 %v3204, 127
        %v3215 = vpop.permute.xlu0 %3214
        %3216 = vrot.lane.b32.xlu0 %v3205, 127
        %v3217 = vpop.permute.xlu0 %3216
        %3222 = vrot.lane.b32.xlu0 %v3202, 126
        %v3223 = vpop.permute.xlu0 %3222
        %3224 = vrot.lane.b32.xlu0 %v3203, 126
        %v3225 = vpop.permute.xlu0 %3224
        %3226 = vrot.lane.b32.xlu0 %v3204, 126
        %v3227 = vpop.permute.xlu0 %3226
        %3228 = vrot.lane.b32.xlu0 %v3205, 126
        %v3229 = vpop.permute.xlu0 %3228
        %v3234 = vld [vmem:[%s1 + $0x1a8] sm:$0xf]
        %v3235 = vld [vmem:[%s1 + $0x1b0] sm:$0xf]
        %v3236 = vld [vmem:[%s1 + $0x1b8] sm:$0xf]
        %v3237 = vld [vmem:[%s1 + $0x1c0] sm:$0xf]
        %v3238 = vld [vmem:[%s2 + $0x1a8] sm:$0xff]
        %v3239 = vld [vmem:[%s2 + $0x1b0] sm:$0xff]
        %v3240 = vld [vmem:[%s2 + $0x1b8] sm:$0xff]
        %v3241 = vld [vmem:[%s2 + $0x1c0] sm:$0xff]
        %v3242 = vpack.c.bf16 %v3203, %v3202
        %v3243 = vpack.c.bf16 %v3205, %v3204
        %v3244 = vpack.c.bf16 %v3213, %v3211
        %v3245 = vpack.c.bf16 %v3217, %v3215
        %v3246 = vpack.c.bf16 %v3225, %v3223
        %v3247 = vpack.c.bf16 %v3229, %v3227
        %3249 = vset.pattern.permute.xlu0 0
        %3250 = vperm.xlu0 %3249, %v3238
        %v3251 = vpop.permute.xlu0 %3250
        %3254 = vset.pattern.permute.xlu0 0
        %3255 = vperm.xlu0 %3254, %v3239
        %v3256 = vpop.permute.xlu0 %3255
        %3259 = vset.pattern.permute.xlu0 0
        %3260 = vperm.xlu0 %3259, %v3240
        %v3261 = vpop.permute.xlu0 %3260
        %3264 = vset.pattern.permute.xlu0 0
        %3265 = vperm.xlu0 %3264, %v3241
        %v3266 = vpop.permute.xlu0 %3265
        %v3272 = vunpack.c.l.b16 %v3234
        %v3273 = vunpack.c.l.b16 %v3235
        %v3274 = vunpack.c.l.b16 %v3236
        %v3275 = vunpack.c.l.b16 %v3237
        %v3276 = vpack.c.b16 %v3273, %v3272
        %v3277 = vpack.c.b16 %v3275, %v3274
        %v3279 = vsel %vm1842, %v3276, 0
        %v3282 = vsel %vm1842, %v3277, 0
        %3284 = vmatprep.subr.bf16.mxu0 0
        %3285 = vmatpush1.bf16.msra.mxu0 %v3242
        %3286 = vmatprep.subr.bf16.mxu0 0
        %3287 = vmatpush1.bf16.msra.mxu0 %v3243
        %3288 = vmatprep.subr.bf16.mxu0 0
        %3289 = vmatpush1.bf16.msra.mxu0 %v3244
        %3290 = vmatprep.subr.bf16.mxu0 0
        %3291 = vmatpush1.bf16.msra.mxu0 %v3245
        %3292 = vmatprep.subr.bf16.mxu0 0
        %3293 = vmatpush1.bf16.msra.mxu0 %v3246
        %3294 = vmatprep.subr.bf16.mxu0 0
        %3295 = vmatpush1.bf16.msra.mxu0 %v3247
        %3296 = vmatprep.subr.bf16.mxu0 0
        %3297 = vmatpush1.bf16.msra.mxu0 0
        %3298 = vmatprep.subr.bf16.mxu0 0
        %3299 = vmatpush1.bf16.msra.mxu0 0
        %3300 = vmatprep.subr.bf16.mxu0 0
        %3301 = vmatpush1.bf16.msra.mxu0 0
        %3302 = vmatprep.subr.bf16.mxu0 0
        %3303 = vmatpush1.bf16.msra.mxu0 0
        %3304 = vmatprep.subr.bf16.mxu0 0
        %3305 = vmatpush1.bf16.msra.mxu0 0
        %3306 = vmatprep.subr.bf16.mxu0 0
        %3307 = vmatpush1.bf16.msra.mxu0 0
        %3308 = vmatprep.subr.bf16.mxu0 0
        %3309 = vmatpush1.bf16.msra.mxu0 0
        %3310 = vmatprep.subr.bf16.mxu0 0
        %3311 = vmatpush1.bf16.msra.mxu0 0
        %3312 = vmatprep.subr.bf16.mxu0 0
        %3313 = vmatpush1.bf16.msra.mxu0 0
        %3314 = vmatprep.subr.bf16.mxu0 0
        %3315 = vmatpush1.bf16.msra.mxu0 0
        %3316 = vmatprep.mubr.bf16.mxu0 0
        %3317 = vmatmul.mubr.bf16.gmra.mrb[0].mxu0 %v3279
        %v3318 = vpop.f32.mrb[0].mxu0
        %v3319 = vadd.f32 %v3251, %v3318
        %v3320 = vpop.f32.mrb[0].mxu0
        %v3321 = vpop.f32.mrb[0].mxu0
        %v3322 = vadd.f32 %v3256, %v3321
        %v3323 = vpop.f32.mrb[0].mxu0
        %3324 = vmatprep.mubr.bf16.mxu0 0
        %3325 = vmatmul.mubr.bf16.gmra.mrb[0].mxu0 %v3282
        %v3326 = vpop.f32.mrb[0].mxu0
        %v3327 = vadd.f32 %v3261, %v3326
        %v3328 = vpop.f32.mrb[0].mxu0
        %v3329 = vpop.f32.mrb[0].mxu0
        %v3330 = vadd.f32 %v3266, %v3329
        %v3331 = vpop.f32.mrb[0].mxu0
        %3332 = vdwg.mxu0
        %v3333 = vadd.f32 %v3319, %v3039
        %v3334 = vadd.f32 %v3322, %v3042
        %v3335 = vadd.f32 %v3327, %v3047
        %v3336 = vadd.f32 %v3330, %v3050
        %v3337 = vxor.u32 %v3333, 2147483648
        %v3338 = vxor.u32 %v3334, 2147483648
        %v3339 = vxor.u32 %v3335, 2147483648
        %v3340 = vxor.u32 %v3336, 2147483648
        %v3341 = vmul.f32 %v3337, 1.442695
        %v3342 = vpow.pop %v3341
        %v3343 = vmul.f32 %v3338, 1.442695
        %v3344 = vpow.pop %v3343
        %v3345 = vmul.f32 %v3339, 1.442695
        %v3346 = vpow.pop %v3345
        %v3347 = vmul.f32 %v3340, 1.442695
        %v3348 = vpow.pop %v3347
        %v3349 = vadd.f32 %v3342, 1.0
        %v3350 = vadd.f32 %v3344, 1.0
        %v3351 = vadd.f32 %v3346, 1.0
        %v3352 = vadd.f32 %v3348, 1.0
        %v3353 = vrcp.pop %v3349
        %v3354 = vmul.f32 1.0, %v3353
        %v3355 = vrcp.pop %v3350
        %v3356 = vmul.f32 1.0, %v3355
        %v3357 = vrcp.pop %v3351
        %v3358 = vmul.f32 1.0, %v3357
        %v3359 = vrcp.pop %v3352
        %v3360 = vmul.f32 1.0, %v3359
        %v3361 = vmul.f32 %v3333, %v3354
        %v3362 = vmul.f32 %v3334, %v3356
        %v3363 = vmul.f32 %v3335, %v3358
        %v3364 = vmul.f32 %v3336, %v3360
        %v3365 = vld [vmem:[#allocation5 + $0x8] sm:$0xff]
        %v3366 = vld [vmem:[#allocation5 + $0x10] sm:$0xff]
        %v3368 = vsel %vm1610, %v3361, 0
        %v3371 = vsel %vm1610, %v3362, 0
        %v3374 = vsel %vm1610, %v3363, 0
        %v3377 = vsel %vm1610, %v3364, 0
        %3379 = vmatprep.subr.mxu0 0.0
        %3380 = vmatpush1.msra.mxu0 %v3365
        %3381 = vmatprep.subr.mxu0 0.0
        %3382 = vmatpush1.msra.mxu0 %v3366
        %3383 = vmatprep.subr.mxu0 0.0
        %3384 = vmatpush1.msra.mxu0 0.0
        %3385 = vmatprep.subr.mxu0 0.0
        %3386 = vmatpush1.msra.mxu0 0.0
        %3387 = vmatprep.subr.mxu0 0.0
        %3388 = vmatpush1.msra.mxu0 0.0
        %3389 = vmatprep.subr.mxu0 0.0
        %3390 = vmatpush1.msra.mxu0 0.0
        %3391 = vmatprep.subr.mxu0 0.0
        %3392 = vmatpush1.msra.mxu0 0.0
        %3393 = vmatprep.subr.mxu0 0.0
        %3394 = vmatpush1.msra.mxu0 0.0
        %3395 = vmatprep.subr.mxu0 0.0
        %3396 = vmatpush1.msra.mxu0 0.0
        %3397 = vmatprep.subr.mxu0 0.0
        %3398 = vmatpush1.msra.mxu0 0.0
        %3399 = vmatprep.subr.mxu0 0.0
        %3400 = vmatpush1.msra.mxu0 0.0
        %3401 = vmatprep.subr.mxu0 0.0
        %3402 = vmatpush1.msra.mxu0 0.0
        %3403 = vmatprep.subr.mxu0 0.0
        %3404 = vmatpush1.msra.mxu0 0.0
        %3405 = vmatprep.subr.mxu0 0.0
        %3406 = vmatpush1.msra.mxu0 0.0
        %3407 = vmatprep.subr.mxu0 0.0
        %3408 = vmatpush1.msra.mxu0 0.0
        %3409 = vmatprep.subr.mxu0 0.0
        %3410 = vmatpush1.msra.mxu0 0.0
        %3411 = vmatprep.subr.mxu0 0.0
        %3412 = vmatpush1.msra.mxu0 0.0
        %3413 = vmatprep.subr.mxu0 0.0
        %3414 = vmatpush1.msra.mxu0 0.0
        %3415 = vmatprep.subr.mxu0 0.0
        %3416 = vmatpush1.msra.mxu0 0.0
        %3417 = vmatprep.subr.mxu0 0.0
        %3418 = vmatpush1.msra.mxu0 0.0
        %3419 = vmatprep.subr.mxu0 0.0
        %3420 = vmatpush1.msra.mxu0 0.0
        %3421 = vmatprep.subr.mxu0 0.0
        %3422 = vmatpush1.msra.mxu0 0.0
        %3423 = vmatprep.subr.mxu0 0.0
        %3424 = vmatpush1.msra.mxu0 0.0
        %3425 = vmatprep.subr.mxu0 0.0
        %3426 = vmatpush1.msra.mxu0 0.0
        %3427 = vmatprep.subr.mxu0 0.0
        %3428 = vmatpush1.msra.mxu0 0.0
        %3429 = vmatprep.subr.mxu0 0.0
        %3430 = vmatpush1.msra.mxu0 0.0
        %3431 = vmatprep.subr.mxu0 0.0
        %3432 = vmatpush1.msra.mxu0 0.0
        %3433 = vmatprep.subr.mxu0 0.0
        %3434 = vmatpush1.msra.mxu0 0.0
        %3435 = vmatprep.subr.mxu0 0.0
        %3436 = vmatpush1.msra.mxu0 0.0
        %3437 = vmatprep.subr.mxu0 0.0
        %3438 = vmatpush1.msra.mxu0 0.0
        %3439 = vmatprep.subr.mxu0 0.0
        %3440 = vmatpush1.msra.mxu0 0.0
        %3441 = vmatprep.subr.mxu0 0.0
        %3442 = vmatpush1.msra.mxu0 0.0
        %3443 = vmatprep.mubr.f32.mxu0 0.0
        %3444 = vmatmul.mubr.f32.gmra.mrb[0].mxu0 %v3368
        %v3445 = vpop.f32.mrb[0].mxu0
        %v3446 = vadd.f32 0.0, %v3445
        %v3447 = vpop.f32.mrb[0].mxu0
        %3448 = vmatprep.mubr.f32.mxu0 0.0
        %3449 = vmatmul.mubr.f32.gmra.mrb[0].mxu0 %v3371
        %v3450 = vpop.f32.mrb[0].mxu0
        %v3451 = vadd.f32 0.0, %v3450
        %v3452 = vpop.f32.mrb[0].mxu0
        %3453 = vmatprep.mubr.f32.mxu0 0.0
        %3454 = vmatmul.mubr.f32.gmra.mrb[0].mxu0 %v3374
        %v3455 = vpop.f32.mrb[0].mxu0
        %v3456 = vadd.f32 0.0, %v3455
        %v3457 = vpop.f32.mrb[0].mxu0
        %3458 = vmatprep.mubr.f32.mxu0 0.0
        %3459 = vmatmul.mubr.f32.gmra.mrb[0].mxu0 %v3377
        %v3460 = vpop.f32.mrb[0].mxu0
        %v3461 = vadd.f32 0.0, %v3460
        %v3462 = vpop.f32.mrb[0].mxu0
        %3463 = vdwg.mxu0
        %3468 = vrot.lane.b32.xlu0 %v3446, 1
        %v3469 = vpop.permute.xlu0 %3468
        %3470 = vrot.lane.b32.xlu0 %v3451, 1
        %v3471 = vpop.permute.xlu0 %3470
        %3472 = vrot.lane.b32.xlu0 %v3456, 1
        %v3473 = vpop.permute.xlu0 %3472
        %3474 = vrot.lane.b32.xlu0 %v3461, 1
        %v3475 = vpop.permute.xlu0 %3474
        %v3480 = vsel %vm470, 0.0, %v3469
        %v3481 = vsel %vm470, 0.0, %v3471
        %v3482 = vsel %vm470, 0.0, %v3473
        %v3483 = vsel %vm470, 0.0, %v3475
        %v3484 = vsel %vm1008, %v3480, 0.0
        %v3485 = vsel %vm1008, %v3481, 0.0
        %v3486 = vsel %vm1008, %v3482, 0.0
        %v3487 = vsel %vm1008, %v3483, 0.0
        %3492 = vrot.lane.b32.xlu0 %v3484, 127
        %v3493 = vpop.permute.xlu0 %3492
        %3494 = vrot.lane.b32.xlu0 %v3485, 127
        %v3495 = vpop.permute.xlu0 %3494
        %3496 = vrot.lane.b32.xlu0 %v3486, 127
        %v3497 = vpop.permute.xlu0 %3496
        %3498 = vrot.lane.b32.xlu0 %v3487, 127
        %v3499 = vpop.permute.xlu0 %3498
        %3504 = vrot.lane.b32.xlu0 %v3484, 126
        %v3505 = vpop.permute.xlu0 %3504
        %3506 = vrot.lane.b32.xlu0 %v3485, 126
        %v3507 = vpop.permute.xlu0 %3506
        %3508 = vrot.lane.b32.xlu0 %v3486, 126
        %v3509 = vpop.permute.xlu0 %3508
        %3510 = vrot.lane.b32.xlu0 %v3487, 126
        %v3511 = vpop.permute.xlu0 %3510
        %v3516 = vld [vmem:[%s1 + $0x208] sm:$0xf]
        %v3517 = vld [vmem:[%s1 + $0x210] sm:$0xf]
        %v3518 = vld [vmem:[%s2 + $0x208] sm:$0xff]
        %v3519 = vld [vmem:[%s2 + $0x210] sm:$0xff]
        %v3520 = vpack.c.bf16 %v3485, %v3484
        %v3521 = vpack.c.bf16 %v3487, %v3486
        %v3522 = vpack.c.bf16 %v3495, %v3493
        %v3523 = vpack.c.bf16 %v3499, %v3497
        %v3524 = vpack.c.bf16 %v3507, %v3505
        %v3525 = vpack.c.bf16 %v3511, %v3509
        %3527 = vset.pattern.permute.xlu0 0
        %3528 = vperm.xlu0 %3527, %v3518
        %v3529 = vpop.permute.xlu0 %3528
        %3532 = vset.pattern.permute.xlu0 0
        %3533 = vperm.xlu0 %3532, %v3519
        %v3534 = vpop.permute.xlu0 %3533
        %v3538 = vunpack.c.l.b16 %v3516
        %v3539 = vunpack.c.l.b16 %v3517
        %v3540 = vpack.c.b16 %v3539, %v3538
        %v3542 = vsel %vm1842, %v3540, 0
        %3544 = vmatprep.subr.bf16.mxu0 0
        %3545 = vmatpush1.bf16.msra.mxu0 %v3520
        %3546 = vmatprep.subr.bf16.mxu0 0
        %3547 = vmatpush1.bf16.msra.mxu0 %v3521
        %3548 = vmatprep.subr.bf16.mxu0 0
        %3549 = vmatpush1.bf16.msra.mxu0 %v3522
        %3550 = vmatprep.subr.bf16.mxu0 0
        %3551 = vmatpush1.bf16.msra.mxu0 %v3523
        %3552 = vmatprep.subr.bf16.mxu0 0
        %3553 = vmatpush1.bf16.msra.mxu0 %v3524
        %3554 = vmatprep.subr.bf16.mxu0 0
        %3555 = vmatpush1.bf16.msra.mxu0 %v3525
        %3556 = vmatprep.subr.bf16.mxu0 0
        %3557 = vmatpush1.bf16.msra.mxu0 0
        %3558 = vmatprep.subr.bf16.mxu0 0
        %3559 = vmatpush1.bf16.msra.mxu0 0
        %3560 = vmatprep.subr.bf16.mxu0 0
        %3561 = vmatpush1.bf16.msra.mxu0 0
        %3562 = vmatprep.subr.bf16.mxu0 0
        %3563 = vmatpush1.bf16.msra.mxu0 0
        %3564 = vmatprep.subr.bf16.mxu0 0
        %3565 = vmatpush1.bf16.msra.mxu0 0
        %3566 = vmatprep.subr.bf16.mxu0 0
        %3567 = vmatpush1.bf16.msra.mxu0 0
        %3568 = vmatprep.subr.bf16.mxu0 0
        %3569 = vmatpush1.bf16.msra.mxu0 0
        %3570 = vmatprep.subr.bf16.mxu0 0
        %3571 = vmatpush1.bf16.msra.mxu0 0
        %3572 = vmatprep.subr.bf16.mxu0 0
        %3573 = vmatpush1.bf16.msra.mxu0 0
        %3574 = vmatprep.subr.bf16.mxu0 0
        %3575 = vmatpush1.bf16.msra.mxu0 0
        %3576 = vmatprep.mubr.bf16.mxu0 0
        %3577 = vmatmul.mubr.bf16.gmra.mrb[0].mxu0 %v3542
        %v3578 = vpop.f32.mrb[0].mxu0
        %v3579 = vadd.f32 %v3529, %v3578
        %v3580 = vpop.f32.mrb[0].mxu0
        %v3581 = vpop.f32.mrb[0].mxu0
        %v3582 = vadd.f32 %v3534, %v3581
        %v3583 = vpop.f32.mrb[0].mxu0
        %3584 = vdwg.mxu0
        %v3585 = vld [vmem:[%s1 + $0x1e8] sm:$0xf]
        %v3586 = vld [vmem:[%s1 + $0x1f0] sm:$0xf]
        %v3587 = vld [vmem:[%s2 + $0x1e8] sm:$0xff]
        %v3588 = vld [vmem:[%s2 + $0x1f0] sm:$0xff]
        %3590 = vset.pattern.permute.xlu0 0
        %3591 = vperm.xlu0 %3590, %v3587
        %v3592 = vpop.permute.xlu0 %3591
        %3595 = vset.pattern.permute.xlu0 0
        %3596 = vperm.xlu0 %3595, %v3588
        %v3597 = vpop.permute.xlu0 %3596
        %v3601 = vunpack.c.l.b16 %v3585
        %v3602 = vunpack.c.l.b16 %v3586
        %v3603 = vpack.c.b16 %v3602, %v3601
        %v3605 = vsel %vm1842, %v3603, 0
        %3607 = vmatprep.subr.bf16.mxu0 0
        %3608 = vmatpush1.bf16.msra.mxu0 %v3520
        %3609 = vmatprep.subr.bf16.mxu0 0
        %3610 = vmatpush1.bf16.msra.mxu0 %v3521
        %3611 = vmatprep.subr.bf16.mxu0 0
        %3612 = vmatpush1.bf16.msra.mxu0 %v3522
        %3613 = vmatprep.subr.bf16.mxu0 0
        %3614 = vmatpush1.bf16.msra.mxu0 %v3523
        %3615 = vmatprep.subr.bf16.mxu0 0
        %3616 = vmatpush1.bf16.msra.mxu0 %v3524
        %3617 = vmatprep.subr.bf16.mxu0 0
        %3618 = vmatpush1.bf16.msra.mxu0 %v3525
        %3619 = vmatprep.subr.bf16.mxu0 0
        %3620 = vmatpush1.bf16.msra.mxu0 0
        %3621 = vmatprep.subr.bf16.mxu0 0
        %3622 = vmatpush1.bf16.msra.mxu0 0
        %3623 = vmatprep.subr.bf16.mxu0 0
        %3624 = vmatpush1.bf16.msra.mxu0 0
        %3625 = vmatprep.subr.bf16.mxu0 0
        %3626 = vmatpush1.bf16.msra.mxu0 0
        %3627 = vmatprep.subr.bf16.mxu0 0
        %3628 = vmatpush1.bf16.msra.mxu0 0
        %3629 = vmatprep.subr.bf16.mxu0 0
        %3630 = vmatpush1.bf16.msra.mxu0 0
        %3631 = vmatprep.subr.bf16.mxu0 0
        %3632 = vmatpush1.bf16.msra.mxu0 0
        %3633 = vmatprep.subr.bf16.mxu0 0
        %3634 = vmatpush1.bf16.msra.mxu0 0
        %3635 = vmatprep.subr.bf16.mxu0 0
        %3636 = vmatpush1.bf16.msra.mxu0 0
        %3637 = vmatprep.subr.bf16.mxu0 0
        %3638 = vmatpush1.bf16.msra.mxu0 0
        %3639 = vmatprep.mubr.bf16.mxu0 0
        %3640 = vmatmul.mubr.bf16.gmra.mrb[0].mxu0 %v3605
        %v3641 = vpop.f32.mrb[0].mxu0
        %v3642 = vadd.f32 %v3592, %v3641
        %v3643 = vpop.f32.mrb[0].mxu0
        %v3644 = vpop.f32.mrb[0].mxu0
        %v3645 = vadd.f32 %v3597, %v3644
        %v3646 = vpop.f32.mrb[0].mxu0
        %3647 = vdwg.mxu0
        %v3648 = vxor.u32 %v3642, 2147483648
        %v3649 = vxor.u32 %v3645, 2147483648
        %v3650 = vmul.f32 %v3648, 1.442695
        %v3651 = vpow.pop %v3650
        %v3652 = vmul.f32 %v3649, 1.442695
        %v3653 = vpow.pop %v3652
        %v3654 = vadd.f32 %v3651, 1.0
        %v3655 = vadd.f32 %v3653, 1.0
        %v3656 = vrcp.pop %v3654
        %v3657 = vmul.f32 1.0, %v3656
        %v3658 = vrcp.pop %v3655
        %v3659 = vmul.f32 1.0, %v3658
        %v3660 = vmul.f32 %v3642, %v3657
        %v3661 = vmul.f32 %v3645, %v3659
        %3664 = vrot.lane.b32.xlu0 %v3660, 1
        %v3665 = vpop.permute.xlu0 %3664
        %3666 = vrot.lane.b32.xlu0 %v3661, 1
        %v3667 = vpop.permute.xlu0 %3666
        %v3670 = vsel %vm470, 0.0, %v3665
        %v3671 = vsel %vm470, 0.0, %v3667
        %v3672 = vsel %vm1008, %v3670, 0.0
        %v3673 = vsel %vm1008, %v3671, 0.0
        %3676 = vrot.lane.b32.xlu0 %v3672, 127
        %v3677 = vpop.permute.xlu0 %3676
        %3678 = vrot.lane.b32.xlu0 %v3673, 127
        %v3679 = vpop.permute.xlu0 %3678
        %3682 = vrot.lane.b32.xlu0 %v3672, 126
        %v3683 = vpop.permute.xlu0 %3682
        %3684 = vrot.lane.b32.xlu0 %v3673, 126
        %v3685 = vpop.permute.xlu0 %3684
        %v3688 = vld [vmem:[%s1 + $0x1f8] sm:$0xf]
        %v3689 = vld [vmem:[%s1 + $0x200] sm:$0xf]
        %v3690 = vld [vmem:[%s2 + $0x1f8] sm:$0xff]
        %v3691 = vld [vmem:[%s2 + $0x200] sm:$0xff]
        %v3692 = vpack.c.bf16 %v3673, %v3672
        %v3693 = vpack.c.bf16 %v3679, %v3677
        %v3694 = vpack.c.bf16 %v3685, %v3683
        %3696 = vset.pattern.permute.xlu0 0
        %3697 = vperm.xlu0 %3696, %v3690
        %v3698 = vpop.permute.xlu0 %3697
        %3701 = vset.pattern.permute.xlu0 0
        %3702 = vperm.xlu0 %3701, %v3691
        %v3703 = vpop.permute.xlu0 %3702
        %v3707 = vunpack.c.l.b16 %v3688
        %v3708 = vunpack.c.l.b16 %v3689
        %v3709 = vpack.c.b16 %v3708, %v3707
        %v3711 = vsel %vm1276, %v3709, 0
        %3713 = vmatprep.subr.bf16.mxu0 0
        %3714 = vmatpush1.bf16.msra.mxu0 %v3692
        %3715 = vmatprep.subr.bf16.mxu0 0
        %3716 = vmatpush1.bf16.msra.mxu0 %v3693
        %3717 = vmatprep.subr.bf16.mxu0 0
        %3718 = vmatpush1.bf16.msra.mxu0 %v3694
        %3719 = vmatprep.subr.bf16.mxu0 0
        %3720 = vmatpush1.bf16.msra.mxu0 0
        %3721 = vmatprep.subr.bf16.mxu0 0
        %3722 = vmatpush1.bf16.msra.mxu0 0
        %3723 = vmatprep.subr.bf16.mxu0 0
        %3724 = vmatpush1.bf16.msra.mxu0 0
        %3725 = vmatprep.subr.bf16.mxu0 0
        %3726 = vmatpush1.bf16.msra.mxu0 0
        %3727 = vmatprep.subr.bf16.mxu0 0
        %3728 = vmatpush1.bf16.msra.mxu0 0
        %3729 = vmatprep.subr.bf16.mxu0 0
        %3730 = vmatpush1.bf16.msra.mxu0 0
        %3731 = vmatprep.subr.bf16.mxu0 0
        %3732 = vmatpush1.bf16.msra.mxu0 0
        %3733 = vmatprep.subr.bf16.mxu0 0
        %3734 = vmatpush1.bf16.msra.mxu0 0
        %3735 = vmatprep.subr.bf16.mxu0 0
        %3736 = vmatpush1.bf16.msra.mxu0 0
        %3737 = vmatprep.subr.bf16.mxu0 0
        %3738 = vmatpush1.bf16.msra.mxu0 0
        %3739 = vmatprep.subr.bf16.mxu0 0
        %3740 = vmatpush1.bf16.msra.mxu0 0
        %3741 = vmatprep.subr.bf16.mxu0 0
        %3742 = vmatpush1.bf16.msra.mxu0 0
        %3743 = vmatprep.subr.bf16.mxu0 0
        %3744 = vmatpush1.bf16.msra.mxu0 0
        %3745 = vmatprep.mubr.bf16.mxu0 0
        %3746 = vmatmul.mubr.bf16.gmra.mrb[0].mxu0 %v3711
        %v3747 = vpop.f32.mrb[0].mxu0
        %v3748 = vadd.f32 %v3698, %v3747
        %v3749 = vpop.f32.mrb[0].mxu0
        %v3750 = vpop.f32.mrb[0].mxu0
        %v3751 = vadd.f32 %v3703, %v3750
        %v3752 = vpop.f32.mrb[0].mxu0
        %3753 = vdwg.mxu0
        %v3754 = vadd.f32 %v3748, %v3579
        %v3755 = vadd.f32 %v3751, %v3582
        %v3756 = vxor.u32 %v3754, 2147483648
        %v3757 = vxor.u32 %v3755, 2147483648
        %v3758 = vmul.f32 %v3756, 1.442695
        %v3759 = vpow.pop %v3758
        %v3760 = vmul.f32 %v3757, 1.442695
        %v3761 = vpow.pop %v3760
        %v3762 = vadd.f32 %v3759, 1.0
        %v3763 = vadd.f32 %v3761, 1.0
        %v3764 = vrcp.pop %v3762
        %v3765 = vmul.f32 1.0, %v3764
        %v3766 = vrcp.pop %v3763
        %v3767 = vmul.f32 1.0, %v3766
        %v3768 = vmul.f32 %v3754, %v3765
        %v3769 = vmul.f32 %v3755, %v3767
        %v3770 = vld [vmem:[#allocation5 + $0x18] sm:$0xff]
        %v3771 = vld [vmem:[#allocation5 + $0x20] sm:$0xff]
        %v3772 = vld [vmem:[#allocation5 + $0x28] sm:$0xff]
        %v3773 = vld [vmem:[#allocation5 + $0x30] sm:$0xff]
        %v3775 = vsel %vm1127, %v3768, 0
        %v3778 = vsel %vm1127, %v3769, 0
        %3780 = vmatprep.subr.mxu0 0.0
        %3781 = vmatpush1.msra.mxu0 %v3770
        %3782 = vmatprep.subr.mxu0 0.0
        %3783 = vmatpush1.msra.mxu0 %v3771
        %3784 = vmatprep.subr.mxu0 0.0
        %3785 = vmatpush1.msra.mxu0 %v3772
        %3786 = vmatprep.subr.mxu0 0.0
        %3787 = vmatpush1.msra.mxu0 %v3773
        %3788 = vmatprep.subr.mxu0 0.0
        %3789 = vmatpush1.msra.mxu0 0.0
        %3790 = vmatprep.subr.mxu0 0.0
        %3791 = vmatpush1.msra.mxu0 0.0
        %3792 = vmatprep.subr.mxu0 0.0
        %3793 = vmatpush1.msra.mxu0 0.0
        %3794 = vmatprep.subr.mxu0 0.0
        %3795 = vmatpush1.msra.mxu0 0.0
        %3796 = vmatprep.subr.mxu0 0.0
        %3797 = vmatpush1.msra.mxu0 0.0
        %3798 = vmatprep.subr.mxu0 0.0
        %3799 = vmatpush1.msra.mxu0 0.0
        %3800 = vmatprep.subr.mxu0 0.0
        %3801 = vmatpush1.msra.mxu0 0.0
        %3802 = vmatprep.subr.mxu0 0.0
        %3803 = vmatpush1.msra.mxu0 0.0
        %3804 = vmatprep.subr.mxu0 0.0
        %3805 = vmatpush1.msra.mxu0 0.0
        %3806 = vmatprep.subr.mxu0 0.0
        %3807 = vmatpush1.msra.mxu0 0.0
        %3808 = vmatprep.subr.mxu0 0.0
        %3809 = vmatpush1.msra.mxu0 0.0
        %3810 = vmatprep.subr.mxu0 0.0
        %3811 = vmatpush1.msra.mxu0 0.0
        %3812 = vmatprep.subr.mxu0 0.0
        %3813 = vmatpush1.msra.mxu0 0.0
        %3814 = vmatprep.subr.mxu0 0.0
        %3815 = vmatpush1.msra.mxu0 0.0
        %3816 = vmatprep.subr.mxu0 0.0
        %3817 = vmatpush1.msra.mxu0 0.0
        %3818 = vmatprep.subr.mxu0 0.0
        %3819 = vmatpush1.msra.mxu0 0.0
        %3820 = vmatprep.subr.mxu0 0.0
        %3821 = vmatpush1.msra.mxu0 0.0
        %3822 = vmatprep.subr.mxu0 0.0
        %3823 = vmatpush1.msra.mxu0 0.0
        %3824 = vmatprep.subr.mxu0 0.0
        %3825 = vmatpush1.msra.mxu0 0.0
        %3826 = vmatprep.subr.mxu0 0.0
        %3827 = vmatpush1.msra.mxu0 0.0
        %3828 = vmatprep.subr.mxu0 0.0
        %3829 = vmatpush1.msra.mxu0 0.0
        %3830 = vmatprep.subr.mxu0 0.0
        %3831 = vmatpush1.msra.mxu0 0.0
        %3832 = vmatprep.subr.mxu0 0.0
        %3833 = vmatpush1.msra.mxu0 0.0
        %3834 = vmatprep.subr.mxu0 0.0
        %3835 = vmatpush1.msra.mxu0 0.0
        %3836 = vmatprep.subr.mxu0 0.0
        %3837 = vmatpush1.msra.mxu0 0.0
        %3838 = vmatprep.subr.mxu0 0.0
        %3839 = vmatpush1.msra.mxu0 0.0
        %3840 = vmatprep.subr.mxu0 0.0
        %3841 = vmatpush1.msra.mxu0 0.0
        %3842 = vmatprep.subr.mxu0 0.0
        %3843 = vmatpush1.msra.mxu0 0.0
        %3844 = vmatprep.mubr.f32.mxu0 0.0
        %3845 = vmatmul.mubr.f32.gmra.mrb[0].mxu0 %v3775
        %v3846 = vpop.f32.mrb[0].mxu0
        %v3847 = vadd.f32 0.0, %v3846
        %v3848 = vpop.f32.mrb[0].mxu0
        %3849 = vmatprep.mubr.f32.mxu0 0.0
        %3850 = vmatmul.mubr.f32.gmra.mrb[0].mxu0 %v3778
        %v3851 = vpop.f32.mrb[0].mxu0
        %v3852 = vadd.f32 0.0, %v3851
        %v3853 = vpop.f32.mrb[0].mxu0
        %3854 = vdwg.mxu0
        %3857 = vrot.lane.b32.xlu0 %v3847, 1
        %v3858 = vpop.permute.xlu0 %3857
        %3859 = vrot.lane.b32.xlu0 %v3852, 1
        %v3860 = vpop.permute.xlu0 %3859
        %v3863 = vsel %vm470, 0.0, %v3858
        %v3864 = vsel %vm470, 0.0, %v3860
        %v3865 = vsel %vm698, %v3863, 0.0
        %v3866 = vsel %vm698, %v3864, 0.0
        %3869 = vrot.lane.b32.xlu0 %v3865, 127
        %v3870 = vpop.permute.xlu0 %3869
        %3871 = vrot.lane.b32.xlu0 %v3866, 127
        %v3872 = vpop.permute.xlu0 %3871
        %3875 = vrot.lane.b32.xlu0 %v3865, 126
        %v3876 = vpop.permute.xlu0 %3875
        %3877 = vrot.lane.b32.xlu0 %v3866, 126
        %v3878 = vpop.permute.xlu0 %3877
        %v3881 = vld [vmem:[%s1 + $0x228] sm:$0xf]
        %v3882 = vld [vmem:[%s2 + $0x228] sm:$0xff]
        %v3883 = vpack.c.bf16 %v3866, %v3865
        %v3884 = vpack.c.bf16 %v3872, %v3870
        %v3885 = vpack.c.bf16 %v3878, %v3876
        %3887 = vset.pattern.permute.xlu0 0
        %3888 = vperm.xlu0 %3887, %v3882
        %v3889 = vpop.permute.xlu0 %3888
        %v3892 = vsel %vm1276, %v3881, 0
        %3894 = vmatprep.subr.bf16.mxu0 0
        %3895 = vmatpush1.bf16.msra.mxu0 %v3883
        %3896 = vmatprep.subr.bf16.mxu0 0
        %3897 = vmatpush1.bf16.msra.mxu0 %v3884
        %3898 = vmatprep.subr.bf16.mxu0 0
        %3899 = vmatpush1.bf16.msra.mxu0 %v3885
        %3900 = vmatprep.subr.bf16.mxu0 0
        %3901 = vmatpush1.bf16.msra.mxu0 0
        %3902 = vmatprep.subr.bf16.mxu0 0
        %3903 = vmatpush1.bf16.msra.mxu0 0
        %3904 = vmatprep.subr.bf16.mxu0 0
        %3905 = vmatpush1.bf16.msra.mxu0 0
        %3906 = vmatprep.subr.bf16.mxu0 0
        %3907 = vmatpush1.bf16.msra.mxu0 0
        %3908 = vmatprep.subr.bf16.mxu0 0
        %3909 = vmatpush1.bf16.msra.mxu0 0
        %3910 = vmatprep.subr.bf16.mxu0 0
        %3911 = vmatpush1.bf16.msra.mxu0 0
        %3912 = vmatprep.subr.bf16.mxu0 0
        %3913 = vmatpush1.bf16.msra.mxu0 0
        %3914 = vmatprep.subr.bf16.mxu0 0
        %3915 = vmatpush1.bf16.msra.mxu0 0
        %3916 = vmatprep.subr.bf16.mxu0 0
        %3917 = vmatpush1.bf16.msra.mxu0 0
        %3918 = vmatprep.subr.bf16.mxu0 0
        %3919 = vmatpush1.bf16.msra.mxu0 0
        %3920 = vmatprep.subr.bf16.mxu0 0
        %3921 = vmatpush1.bf16.msra.mxu0 0
        %3922 = vmatprep.subr.bf16.mxu0 0
        %3923 = vmatpush1.bf16.msra.mxu0 0
        %3924 = vmatprep.subr.bf16.mxu0 0
        %3925 = vmatpush1.bf16.msra.mxu0 0
        %3926 = vmatprep.mubr.bf16.mxu0 0
        %3927 = vmatmul.mubr.bf16.gmra.mrb[0].mxu0 %v3892
        %v3928 = vpop.f32.mrb[0].mxu0
        %v3929 = vadd.f32 %v3889, %v3928
        %v3930 = vpop.f32.mrb[0].mxu0
        %v3931 = vpop.f32.mrb[0].mxu0
        %v3932 = vpop.f32.mrb[0].mxu0
        %3933 = vdwg.mxu0
        %v3934 = vld [vmem:[%s1 + $0x218] sm:$0xf]
        %v3935 = vld [vmem:[%s2 + $0x218] sm:$0xff]
        %3937 = vset.pattern.permute.xlu0 0
        %3938 = vperm.xlu0 %3937, %v3935
        %v3939 = vpop.permute.xlu0 %3938
        %v3942 = vsel %vm1276, %v3934, 0
        %3944 = vmatprep.subr.bf16.mxu0 0
        %3945 = vmatpush1.bf16.msra.mxu0 %v3883
        %3946 = vmatprep.subr.bf16.mxu0 0
        %3947 = vmatpush1.bf16.msra.mxu0 %v3884
        %3948 = vmatprep.subr.bf16.mxu0 0
        %3949 = vmatpush1.bf16.msra.mxu0 %v3885
        %3950 = vmatprep.subr.bf16.mxu0 0
        %3951 = vmatpush1.bf16.msra.mxu0 0
        %3952 = vmatprep.subr.bf16.mxu0 0
        %3953 = vmatpush1.bf16.msra.mxu0 0
        %3954 = vmatprep.subr.bf16.mxu0 0
        %3955 = vmatpush1.bf16.msra.mxu0 0
        %3956 = vmatprep.subr.bf16.mxu0 0
        %3957 = vmatpush1.bf16.msra.mxu0 0
        %3958 = vmatprep.subr.bf16.mxu0 0
        %3959 = vmatpush1.bf16.msra.mxu0 0
        %3960 = vmatprep.subr.bf16.mxu0 0
        %3961 = vmatpush1.bf16.msra.mxu0 0
        %3962 = vmatprep.subr.bf16.mxu0 0
        %3963 = vmatpush1.bf16.msra.mxu0 0
        %3964 = vmatprep.subr.bf16.mxu0 0
        %3965 = vmatpush1.bf16.msra.mxu0 0
        %3966 = vmatprep.subr.bf16.mxu0 0
        %3967 = vmatpush1.bf16.msra.mxu0 0
        %3968 = vmatprep.subr.bf16.mxu0 0
        %3969 = vmatpush1.bf16.msra.mxu0 0
        %3970 = vmatprep.subr.bf16.mxu0 0
        %3971 = vmatpush1.bf16.msra.mxu0 0
        %3972 = vmatprep.subr.bf16.mxu0 0
        %3973 = vmatpush1.bf16.msra.mxu0 0
        %3974 = vmatprep.subr.bf16.mxu0 0
        %3975 = vmatpush1.bf16.msra.mxu0 0
        %3976 = vmatprep.mubr.bf16.mxu0 0
        %3977 = vmatmul.mubr.bf16.gmra.mrb[0].mxu0 %v3942
        %v3978 = vpop.f32.mrb[0].mxu0
        %v3979 = vadd.f32 %v3939, %v3978
        %v3980 = vpop.f32.mrb[0].mxu0
        %v3981 = vpop.f32.mrb[0].mxu0
        %v3982 = vpop.f32.mrb[0].mxu0
        %3983 = vdwg.mxu0
        %v3984 = vxor.u32 %v3979, 2147483648
        %v3985 = vmul.f32 %v3984, 1.442695
        %v3986 = vpow.pop %v3985
        %v3987 = vadd.f32 %v3986, 1.0
        %v3988 = vrcp.pop %v3987
        %v3989 = vmul.f32 1.0, %v3988
        %v3990 = vmul.f32 %v3979, %v3989
        %3992 = vrot.lane.b32.xlu0 %v3990, 1
        %v3993 = vpop.permute.xlu0 %3992
        %v3995 = vsel %vm470, 0.0, %v3993
        %v3996 = vsel %vm698, %v3995, 0.0
        %3998 = vrot.lane.b32.xlu0 %v3996, 127
        %v3999 = vpop.permute.xlu0 %3998
        %4001 = vrot.lane.b32.xlu0 %v3996, 126
        %v4002 = vpop.permute.xlu0 %4001
        %v4004 = vld [vmem:[%s1 + $0x220] sm:$0xf]
        %v4005 = vld [vmem:[%s2 + $0x220] sm:$0xff]
        %v4006 = vpack.c.bf16 %v3999, %v3996
        %v4007 = vpack.c.bf16 %v4002, %v4002
        %4009 = vset.pattern.permute.xlu0 0
        %4010 = vperm.xlu0 %4009, %v4005
        %v4011 = vpop.permute.xlu0 %4010
        %v4014 = vsel %vm898, %v4004, 0
        %v4017 = vsel %vm396, %v4007, 0
        %4019 = vmatprep.subr.bf16.mxu0 0
        %4020 = vmatpush1.bf16.msra.mxu0 %v4006
        %4021 = vmatprep.subr.bf16.mxu0 0
        %4022 = vmatpush1.bf16.msra.mxu0 %v4017
        %4023 = vmatprep.subr.bf16.mxu0 0
        %4024 = vmatpush1.bf16.msra.mxu0 0
        %4025 = vmatprep.subr.bf16.mxu0 0
        %4026 = vmatpush1.bf16.msra.mxu0 0
        %4027 = vmatprep.subr.bf16.mxu0 0
        %4028 = vmatpush1.bf16.msra.mxu0 0
        %4029 = vmatprep.subr.bf16.mxu0 0
        %4030 = vmatpush1.bf16.msra.mxu0 0
        %4031 = vmatprep.subr.bf16.mxu0 0
        %4032 = vmatpush1.bf16.msra.mxu0 0
        %4033 = vmatprep.subr.bf16.mxu0 0
        %4034 = vmatpush1.bf16.msra.mxu0 0
        %4035 = vmatprep.subr.bf16.mxu0 0
        %4036 = vmatpush1.bf16.msra.mxu0 0
        %4037 = vmatprep.subr.bf16.mxu0 0
        %4038 = vmatpush1.bf16.msra.mxu0 0
        %4039 = vmatprep.subr.bf16.mxu0 0
        %4040 = vmatpush1.bf16.msra.mxu0 0
        %4041 = vmatprep.subr.bf16.mxu0 0
        %4042 = vmatpush1.bf16.msra.mxu0 0
        %4043 = vmatprep.subr.bf16.mxu0 0
        %4044 = vmatpush1.bf16.msra.mxu0 0
        %4045 = vmatprep.subr.bf16.mxu0 0
        %4046 = vmatpush1.bf16.msra.mxu0 0
        %4047 = vmatprep.subr.bf16.mxu0 0
        %4048 = vmatpush1.bf16.msra.mxu0 0
        %4049 = vmatprep.subr.bf16.mxu0 0
        %4050 = vmatpush1.bf16.msra.mxu0 0
        %4051 = vmatprep.mubr.bf16.mxu0 0
        %4052 = vmatmul.mubr.bf16.gmra.mrb[0].mxu0 %v4014
        %v4053 = vpop.f32.mrb[0].mxu0
        %v4054 = vadd.f32 %v4011, %v4053
        %v4055 = vpop.f32.mrb[0].mxu0
        %v4056 = vpop.f32.mrb[0].mxu0
        %v4057 = vpop.f32.mrb[0].mxu0
        %4058 = vdwg.mxu0
        %v4059 = vadd.f32 %v4054, %v3929
        %v4060 = vxor.u32 %v4059, 2147483648
        %v4061 = vmul.f32 %v4060, 1.442695
        %v4062 = vpow.pop %v4061
        %v4063 = vadd.f32 %v4062, 1.0
        %v4064 = vrcp.pop %v4063
        %v4065 = vmul.f32 1.0, %v4064
        %v4066 = vmul.f32 %v4059, %v4065
        %v4067 = vld [vmem:[#allocation5 + $0x38] sm:$0xff]
        %v4068 = vld [vmem:[#allocation5 + $0x40] sm:$0xff]
        %v4069 = vld [vmem:[#allocation5 + $0x48] sm:$0xff]
        %v4070 = vld [vmem:[#allocation5 + $0x50] sm:$0xff]
        %v4071 = vld [vmem:[#allocation5 + $0x58] sm:$0xff]
        %v4072 = vld [vmem:[#allocation5 + $0x60] sm:$0xff]
        %v4073 = vld [vmem:[#allocation5 + $0x68] sm:$0xff]
        %v4074 = vld [vmem:[#allocation5 + $0x70] sm:$0xff]
        %v4076 = vsel %vm790, %v4066, 0
        %4078 = vmatprep.subr.mxu0 0.0
        %4079 = vmatpush1.msra.mxu0 %v4067
        %4080 = vmatprep.subr.mxu0 0.0
        %4081 = vmatpush1.msra.mxu0 %v4068
        %4082 = vmatprep.subr.mxu0 0.0
        %4083 = vmatpush1.msra.mxu0 %v4069
        %4084 = vmatprep.subr.mxu0 0.0
        %4085 = vmatpush1.msra.mxu0 %v4070
        %4086 = vmatprep.subr.mxu0 0.0
        %4087 = vmatpush1.msra.mxu0 %v4071
        %4088 = vmatprep.subr.mxu0 0.0
        %4089 = vmatpush1.msra.mxu0 %v4072
        %4090 = vmatprep.subr.mxu0 0.0
        %4091 = vmatpush1.msra.mxu0 %v4073
        %4092 = vmatprep.subr.mxu0 0.0
        %4093 = vmatpush1.msra.mxu0 %v4074
        %4094 = vmatprep.subr.mxu0 0.0
        %4095 = vmatpush1.msra.mxu0 0.0
        %4096 = vmatprep.subr.mxu0 0.0
        %4097 = vmatpush1.msra.mxu0 0.0
        %4098 = vmatprep.subr.mxu0 0.0
        %4099 = vmatpush1.msra.mxu0 0.0
        %4100 = vmatprep.subr.mxu0 0.0
        %4101 = vmatpush1.msra.mxu0 0.0
        %4102 = vmatprep.subr.mxu0 0.0
        %4103 = vmatpush1.msra.mxu0 0.0
        %4104 = vmatprep.subr.mxu0 0.0
        %4105 = vmatpush1.msra.mxu0 0.0
        %4106 = vmatprep.subr.mxu0 0.0
        %4107 = vmatpush1.msra.mxu0 0.0
        %4108 = vmatprep.subr.mxu0 0.0
        %4109 = vmatpush1.msra.mxu0 0.0
        %4110 = vmatprep.subr.mxu0 0.0
        %4111 = vmatpush1.msra.mxu0 0.0
        %4112 = vmatprep.subr.mxu0 0.0
        %4113 = vmatpush1.msra.mxu0 0.0
        %4114 = vmatprep.subr.mxu0 0.0
        %4115 = vmatpush1.msra.mxu0 0.0
        %4116 = vmatprep.subr.mxu0 0.0
        %4117 = vmatpush1.msra.mxu0 0.0
        %4118 = vmatprep.subr.mxu0 0.0
        %4119 = vmatpush1.msra.mxu0 0.0
        %4120 = vmatprep.subr.mxu0 0.0
        %4121 = vmatpush1.msra.mxu0 0.0
        %4122 = vmatprep.subr.mxu0 0.0
        %4123 = vmatpush1.msra.mxu0 0.0
        %4124 = vmatprep.subr.mxu0 0.0
        %4125 = vmatpush1.msra.mxu0 0.0
        %4126 = vmatprep.subr.mxu0 0.0
        %4127 = vmatpush1.msra.mxu0 0.0
        %4128 = vmatprep.subr.mxu0 0.0
        %4129 = vmatpush1.msra.mxu0 0.0
        %4130 = vmatprep.subr.mxu0 0.0
        %4131 = vmatpush1.msra.mxu0 0.0
        %4132 = vmatprep.subr.mxu0 0.0
        %4133 = vmatpush1.msra.mxu0 0.0
        %4134 = vmatprep.subr.mxu0 0.0
        %4135 = vmatpush1.msra.mxu0 0.0
        %4136 = vmatprep.subr.mxu0 0.0
        %4137 = vmatpush1.msra.mxu0 0.0
        %4138 = vmatprep.subr.mxu0 0.0
        %4139 = vmatpush1.msra.mxu0 0.0
        %4140 = vmatprep.subr.mxu0 0.0
        %4141 = vmatpush1.msra.mxu0 0.0
        %4142 = vmatprep.mubr.f32.mxu0 0.0
        %4143 = vmatmul.mubr.f32.gmra.mrb[0].mxu0 %v4076
        %v4144 = vpop.f32.mrb[0].mxu0
        %v4145 = vadd.f32 0.0, %v4144
        %v4146 = vpop.f32.mrb[0].mxu0
        %4147 = vdwg.mxu0
        %4149 = vrot.lane.b32.xlu0 %v4145, 1
        %v4150 = vpop.permute.xlu0 %4149
        %v4152 = vsel %vm470, 0.0, %v4150
        %v4153 = vsel %vm470, %v4150, 0.0
        %4156 = vrot.lane.b32.xlu0 %v4152, 127
        %v4157 = vpop.permute.xlu0 %4156
        %4158 = vrot.lane.b32.xlu0 %v4153, 127
        %v4159 = vpop.permute.xlu0 %4158
        %v4160 = vsel %vm342, %v4157, %v4159
        %4162 = vrot.lane.b32.xlu0 %v4152, 126
        %v4163 = vpop.permute.xlu0 %4162
        %4164 = vrot.lane.b32.xlu0 %v4153, 126
        %v4165 = vpop.permute.xlu0 %4164
        %v4166 = vsel %vm351, %v4163, %v4165
        %v4168 = vld [vmem:[%s1 + $0x240] sm:$0x3]
        %v4169 = vld [vmem:[%s2 + $0x240] sm:$0xf]
        %v4170 = vpack.c.bf16 %v4160, %v4152
        %v4171 = vpack.c.bf16 %v4166, %v4166
        %4173 = vset.pattern.permute.xlu0 0
        %4174 = vperm.xlu0 %4173, %v4169
        %v4175 = vpop.permute.xlu0 %4174
        %v4178 = vsel %vm898, %v4168, 0
        %v4181 = vsel %vm396, %v4171, 0
        %4183 = vmatprep.subr.bf16.mxu0 0
        %4184 = vmatpush1.bf16.msra.mxu0 %v4170
        %4185 = vmatprep.subr.bf16.mxu0 0
        %4186 = vmatpush1.bf16.msra.mxu0 %v4181
        %4187 = vmatprep.subr.bf16.mxu0 0
        %4188 = vmatpush1.bf16.msra.mxu0 0
        %4189 = vmatprep.subr.bf16.mxu0 0
        %4190 = vmatpush1.bf16.msra.mxu0 0
        %4191 = vmatprep.subr.bf16.mxu0 0
        %4192 = vmatpush1.bf16.msra.mxu0 0
        %4193 = vmatprep.subr.bf16.mxu0 0
        %4194 = vmatpush1.bf16.msra.mxu0 0
        %4195 = vmatprep.subr.bf16.mxu0 0
        %4196 = vmatpush1.bf16.msra.mxu0 0
        %4197 = vmatprep.subr.bf16.mxu0 0
        %4198 = vmatpush1.bf16.msra.mxu0 0
        %4199 = vmatprep.subr.bf16.mxu0 0
        %4200 = vmatpush1.bf16.msra.mxu0 0
        %4201 = vmatprep.subr.bf16.mxu0 0
        %4202 = vmatpush1.bf16.msra.mxu0 0
        %4203 = vmatprep.subr.bf16.mxu0 0
        %4204 = vmatpush1.bf16.msra.mxu0 0
        %4205 = vmatprep.subr.bf16.mxu0 0
        %4206 = vmatpush1.bf16.msra.mxu0 0
        %4207 = vmatprep.subr.bf16.mxu0 0
        %4208 = vmatpush1.bf16.msra.mxu0 0
        %4209 = vmatprep.subr.bf16.mxu0 0
        %4210 = vmatpush1.bf16.msra.mxu0 0
        %4211 = vmatprep.subr.bf16.mxu0 0
        %4212 = vmatpush1.bf16.msra.mxu0 0
        %4213 = vmatprep.subr.bf16.mxu0 0
        %4214 = vmatpush1.bf16.msra.mxu0 0
        %4215 = vmatprep.mubr.bf16.mxu0 0
        %4216 = vmatmul.mubr.bf16.gmra.mrb[0].mxu0 %v4178
        %v4217 = vpop.f32.mrb[0].mxu0
        %v4218 = vadd.f32 %v4175, %v4217
        %v4219 = vpop.f32.mrb[0].mxu0
        %v4220 = vpop.f32.mrb[0].mxu0
        %v4221 = vpop.f32.mrb[0].mxu0
        %4222 = vdwg.mxu0
        %v4223 = vld [vmem:[%s1 + $0x230] sm:$0x3]
        %v4224 = vld [vmem:[%s2 + $0x230] sm:$0xf]
        %4226 = vset.pattern.permute.xlu0 0
        %4227 = vperm.xlu0 %4226, %v4224
        %v4228 = vpop.permute.xlu0 %4227
        %v4231 = vsel %vm898, %v4223, 0
        %4233 = vmatprep.subr.bf16.mxu0 0
        %4234 = vmatpush1.bf16.msra.mxu0 %v4170
        %4235 = vmatprep.subr.bf16.mxu0 0
        %4236 = vmatpush1.bf16.msra.mxu0 %v4181
        %4237 = vmatprep.subr.bf16.mxu0 0
        %4238 = vmatpush1.bf16.msra.mxu0 0
        %4239 = vmatprep.subr.bf16.mxu0 0
        %4240 = vmatpush1.bf16.msra.mxu0 0
        %4241 = vmatprep.subr.bf16.mxu0 0
        %4242 = vmatpush1.bf16.msra.mxu0 0
        %4243 = vmatprep.subr.bf16.mxu0 0
        %4244 = vmatpush1.bf16.msra.mxu0 0
        %4245 = vmatprep.subr.bf16.mxu0 0
        %4246 = vmatpush1.bf16.msra.mxu0 0
        %4247 = vmatprep.subr.bf16.mxu0 0
        %4248 = vmatpush1.bf16.msra.mxu0 0
        %4249 = vmatprep.subr.bf16.mxu0 0
        %4250 = vmatpush1.bf16.msra.mxu0 0
        %4251 = vmatprep.subr.bf16.mxu0 0
        %4252 = vmatpush1.bf16.msra.mxu0 0
        %4253 = vmatprep.subr.bf16.mxu0 0
        %4254 = vmatpush1.bf16.msra.mxu0 0
        %4255 = vmatprep.subr.bf16.mxu0 0
        %4256 = vmatpush1.bf16.msra.mxu0 0
        %4257 = vmatprep.subr.bf16.mxu0 0
        %4258 = vmatpush1.bf16.msra.mxu0 0
        %4259 = vmatprep.subr.bf16.mxu0 0
        %4260 = vmatpush1.bf16.msra.mxu0 0
        %4261 = vmatprep.subr.bf16.mxu0 0
        %4262 = vmatpush1.bf16.msra.mxu0 0
        %4263 = vmatprep.subr.bf16.mxu0 0
        %4264 = vmatpush1.bf16.msra.mxu0 0
        %4265 = vmatprep.mubr.bf16.mxu0 0
        %4266 = vmatmul.mubr.bf16.gmra.mrb[0].mxu0 %v4231
        %v4267 = vpop.f32.mrb[0].mxu0
        %v4268 = vadd.f32 %v4228, %v4267
        %v4269 = vpop.f32.mrb[0].mxu0
        %v4270 = vpop.f32.mrb[0].mxu0
        %v4271 = vpop.f32.mrb[0].mxu0
        %4272 = vdwg.mxu0
        %v4273 = vxor.u32 %v4268, 2147483648
        %v4274 = vmul.f32 %v4273, 1.442695
        %v4275 = vpow.pop %v4274
        %v4276 = vadd.f32 %v4275, 1.0
        %v4277 = vrcp.pop %v4276
        %v4278 = vmul.f32 1.0, %v4277
        %v4279 = vmul.f32 %v4268, %v4278
        %4281 = vrot.lane.b32.xlu0 %v4279, 1
        %v4282 = vpop.permute.xlu0 %4281
        %v4284 = vsel %vm470, 0.0, %v4282
        %v4285 = vsel %vm470, %v4282, 0.0
        %v4288 = vrot.slane %v4284, 4
        %v4289 = vrot.slane %v4285, 4
        %4290 = vrot.lane.b32.xlu0 %v4288, 127
        %v4291 = vpop.permute.xlu0 %4290
        %4292 = vrot.lane.b32.xlu0 %v4289, 127
        %v4293 = vpop.permute.xlu0 %4292
        %v4294 = vsel %vm342, %v4291, %v4293
        %4296 = vrot.lane.b32.xlu0 %v4284, 126
        %v4297 = vpop.permute.xlu0 %4296
        %4298 = vrot.lane.b32.xlu0 %v4285, 126
        %v4299 = vpop.permute.xlu0 %4298
        %v4300 = vsel %vm351, %v4297, %v4299
        %v4302 = vsel %vm396, %v4284, %v4294
        %v4303 = vld [vmem:[%s1 + $0x238] sm:$0x3]
        %v4304 = vld [vmem:[%s2 + $0x238] sm:$0xf]
        %v4305 = vpack.c.bf16 %v4300, %v4302
        %4307 = vset.pattern.permute.xlu0 0
        %4308 = vperm.xlu0 %4307, %v4304
        %v4309 = vpop.permute.xlu0 %4308
        %v4312 = vsel %vm589, %v4303, 0
        %v4315 = vsel %vm400, %v4305, 0
        %4317 = vmatprep.subr.bf16.mxu0 0
        %4318 = vmatpush1.bf16.msra.mxu0 %v4315
        %4319 = vmatprep.subr.bf16.mxu0 0
        %4320 = vmatpush1.bf16.msra.mxu0 0
        %4321 = vmatprep.subr.bf16.mxu0 0
        %4322 = vmatpush1.bf16.msra.mxu0 0
        %4323 = vmatprep.subr.bf16.mxu0 0
        %4324 = vmatpush1.bf16.msra.mxu0 0
        %4325 = vmatprep.subr.bf16.mxu0 0
        %4326 = vmatpush1.bf16.msra.mxu0 0
        %4327 = vmatprep.subr.bf16.mxu0 0
        %4328 = vmatpush1.bf16.msra.mxu0 0
        %4329 = vmatprep.subr.bf16.mxu0 0
        %4330 = vmatpush1.bf16.msra.mxu0 0
        %4331 = vmatprep.subr.bf16.mxu0 0
        %4332 = vmatpush1.bf16.msra.mxu0 0
        %4333 = vmatprep.subr.bf16.mxu0 0
        %4334 = vmatpush1.bf16.msra.mxu0 0
        %4335 = vmatprep.subr.bf16.mxu0 0
        %4336 = vmatpush1.bf16.msra.mxu0 0
        %4337 = vmatprep.subr.bf16.mxu0 0
        %4338 = vmatpush1.bf16.msra.mxu0 0
        %4339 = vmatprep.subr.bf16.mxu0 0
        %4340 = vmatpush1.bf16.msra.mxu0 0
        %4341 = vmatprep.subr.bf16.mxu0 0
        %4342 = vmatpush1.bf16.msra.mxu0 0
        %4343 = vmatprep.subr.bf16.mxu0 0
        %4344 = vmatpush1.bf16.msra.mxu0 0
        %4345 = vmatprep.subr.bf16.mxu0 0
        %4346 = vmatpush1.bf16.msra.mxu0 0
        %4347 = vmatprep.subr.bf16.mxu0 0
        %4348 = vmatpush1.bf16.msra.mxu0 0
        %4349 = vmatprep.mubr.bf16.mxu0 0
        %4350 = vmatmul.mubr.bf16.gmra.mrb[0].mxu0 %v4312
        %v4351 = vpop.f32.mrb[0].mxu0
        %v4352 = vadd.f32 %v4309, %v4351
        %v4353 = vpop.f32.mrb[0].mxu0
        %v4354 = vpop.f32.mrb[0].mxu0
        %v4355 = vpop.f32.mrb[0].mxu0
        %4356 = vdwg.mxu0
        %v4357 = vadd.f32 %v4352, %v4218
        %v4358 = vxor.u32 %v4357, 2147483648
        %v4359 = vmul.f32 %v4358, 1.442695
        %v4360 = vpow.pop %v4359
        %v4361 = vadd.f32 %v4360, 1.0
        %v4362 = vrcp.pop %v4361
        %v4363 = vmul.f32 1.0, %v4362
        %v4364 = vmul.f32 %v4357, %v4363
        %4366 = vrot.lane.b32.xlu0 %v4364, 1
        %v4367 = vpop.permute.xlu0 %4366
        %v4369 = vsel %vm470, 0.0, %v4367
        %v4370 = vsel %vm470, %v4367, 0.0
        %v4373 = vrot.slane %v4369, 4
        %v4374 = vrot.slane %v4370, 4
        %4375 = vrot.lane.b32.xlu0 %v4373, 127
        %v4376 = vpop.permute.xlu0 %4375
        %4377 = vrot.lane.b32.xlu0 %v4374, 127
        %v4378 = vpop.permute.xlu0 %4377
        %v4379 = vsel %vm342, %v4376, %v4378
        %4381 = vrot.lane.b32.xlu0 %v4369, 126
        %v4382 = vpop.permute.xlu0 %4381
        %4383 = vrot.lane.b32.xlu0 %v4370, 126
        %v4384 = vpop.permute.xlu0 %4383
        %v4385 = vsel %vm351, %v4382, %v4384
        %v4387 = vsel %vm396, %v4369, %v4379
        %v4388 = vld [vmem:[%s1 + $0x248] sm:$0x1]
        %v4389 = vld [vmem:[%s2 + $0x248] sm:$0x1]
        %v4390 = vpack.c.bf16 %v4385, %v4387
        %4392 = vset.pattern.permute.xlu0 0
        %4393 = vperm.xlu0 %4392, %v4389
        %v4394 = vpop.permute.xlu0 %4393
        %v4397 = vsel %vm589, %v4388, 0
        %v4400 = vsel %vm400, %v4390, 0
        %4402 = vmatprep.subr.bf16.mxu0 0
        %4403 = vmatpush1.bf16.msra.mxu0 %v4400
        %4404 = vmatprep.subr.bf16.mxu0 0
        %4405 = vmatpush1.bf16.msra.mxu0 0
        %4406 = vmatprep.subr.bf16.mxu0 0
        %4407 = vmatpush1.bf16.msra.mxu0 0
        %4408 = vmatprep.subr.bf16.mxu0 0
        %4409 = vmatpush1.bf16.msra.mxu0 0
        %4410 = vmatprep.subr.bf16.mxu0 0
        %4411 = vmatpush1.bf16.msra.mxu0 0
        %4412 = vmatprep.subr.bf16.mxu0 0
        %4413 = vmatpush1.bf16.msra.mxu0 0
        %4414 = vmatprep.subr.bf16.mxu0 0
        %4415 = vmatpush1.bf16.msra.mxu0 0
        %4416 = vmatprep.subr.bf16.mxu0 0
        %4417 = vmatpush1.bf16.msra.mxu0 0
        %4418 = vmatprep.subr.bf16.mxu0 0
        %4419 = vmatpush1.bf16.msra.mxu0 0
        %4420 = vmatprep.subr.bf16.mxu0 0
        %4421 = vmatpush1.bf16.msra.mxu0 0
        %4422 = vmatprep.subr.bf16.mxu0 0
        %4423 = vmatpush1.bf16.msra.mxu0 0
        %4424 = vmatprep.subr.bf16.mxu0 0
        %4425 = vmatpush1.bf16.msra.mxu0 0
        %4426 = vmatprep.subr.bf16.mxu0 0
        %4427 = vmatpush1.bf16.msra.mxu0 0
        %4428 = vmatprep.subr.bf16.mxu0 0
        %4429 = vmatpush1.bf16.msra.mxu0 0
        %4430 = vmatprep.subr.bf16.mxu0 0
        %4431 = vmatpush1.bf16.msra.mxu0 0
        %4432 = vmatprep.subr.bf16.mxu0 0
        %4433 = vmatpush1.bf16.msra.mxu0 0
        %4434 = vmatprep.mubr.bf16.mxu0 0
        %4435 = vmatmul.mubr.bf16.gmra.mrb[0].mxu0 %v4397
        %v4436 = vpop.f32.mrb[0].mxu0
        %v4437 = vadd.f32 %v4394, %v4436
        %v4438 = vpop.f32.mrb[0].mxu0
        %v4439 = vpop.f32.mrb[0].mxu0
        %v4440 = vpop.f32.mrb[0].mxu0
        %4441 = vdwg.mxu0
        %v4442 = vtanh.pop %v4437
        %v4443 = vmul.f32 %v4442, 6.2831855
        %4444 = vst [vmem:[%s297] sm:$0x1] %v4443
        %vm4445 = vcmask 39936
        %4446 = vst.msk [vmem:[%s316] sm:$0xff] %vm4445, %v2472
        %4447 = vst.msk [vmem:[%s320] sm:$0xff] %vm4445, %v2475
        %s4448 = sand.u32 %s142, 1
        %s4449 = scalar_lea.sflag [#allocation4], %s4448
        %s4450 = sand.u32 %s142, 1
        %s4451 = scalar_lea.vmem [#allocation7], %s4450
        %p4452 = scmp.lt.s32.totalorder %s24, 1
        %s4453 = scalar_select %p4452, %s24, 1
        %s4454 = smul.addr %s4453, 8
        %s4455 = scalar_lea.vmem %s6, %s4454
        %p4456 = scmp.lt.s32.totalorder %s24, 1
        %s4457 = scalar_select %p4456, %s24, 1
        %s4458 = smul.addr %s4457, 8
        %s4459 = scalar_lea.vmem %s7, %s4458
        // Predicated region
        $region49: #{_vae_forward_impl.1} parent=39 // pred_check
          %p4460 = pneg %p152
        $region50: #{_vae_forward_impl.1} parent=39 // pred_check_branch
          %4462 = sbr.rel (%p4460) target = $region52
        $region51: #{_vae_forward_impl.1} parent=39 // pred_region
          %s4464 = ssub.s32 16, 16
          %4465 = vsyncadd %s4449, %s4464
          %s4466 = smul.addr %s24, 16
          %s4467 = scalar_lea.hbm %s5, %s4466
          %s4469 = sshll.u32 %s4451, 4
          %s4470 = int_to_ptr.vmem [resolvable:$true] %s4469
          %4472 = dma.vmem_to_hbm [thread:$0]  %s4470, 16, %s4467, %s4449
        $region52: #{_vae_forward_impl.1} parent=39 // pred_fallthru
          _
        // Predicated region
        $region53: #{_vae_forward_impl.1} parent=39 // pred_check
          %p4473 = pneg %p178
        $region54: #{_vae_forward_impl.1} parent=39 // pred_check_branch
          %4475 = sbr.rel (%p4473) target = $region56
        $region55: #{_vae_forward_impl.1} parent=39 // pred_region
          _
        $region56: #{_vae_forward_impl.1} parent=39 // pred_fallthru
          _
        // Predicated region
        $region57: #{_vae_forward_impl.1} parent=39 // pred_check
          %p4476 = pneg %p204
        $region58: #{_vae_forward_impl.1} parent=39 // pred_check_branch
          %4478 = sbr.rel (%p4476) target = $region60
        $region59: #{_vae_forward_impl.1} parent=39 // pred_region
          _
        $region60: #{_vae_forward_impl.1} parent=39 // pred_fallthru
          _
      $region40: #{_vae_forward_impl.1} parent=5 // pred_fallthru
        _
      %p4479 = scmp.le.s32.totalorder 2, %s19
      // Predicated region
      $region61: #{_vae_forward_impl.1} parent=5 // pred_check
        %p4480 = pneg %p4479
      $region62: #{_vae_forward_impl.1} parent=5 // pred_check_branch
        %4482 = sbr.rel (%p4480) target = $region64
      $region63: #{_vae_forward_impl.1} parent=5 // pred_region
        %s4483 = ssub.s32 %s19, 2
        // Predicated region
        $region65: #{_vae_forward_impl.1} parent=63 // pred_check
          %p4484 = pneg %p158
        $region66: #{_vae_forward_impl.1} parent=63 // pred_check_branch
          %4486 = sbr.rel (%p4484) target = $region68
        $region67: #{_vae_forward_impl.1} parent=63 // pred_region
          %s4487 = sand.u32 %s143, 1
          %s4488 = scalar_lea.sflag [#allocation4], %s4487
          %s4489 = sand.u32 %s143, 1
          %s4490 = scalar_lea.vmem [#allocation7], %s4489
          %4491 = dma.done %s4488, 16
        $region68: #{_vae_forward_impl.1} parent=63 // pred_fallthru
          _
        // Predicated region
        $region69: #{_vae_forward_impl.1} parent=63 // pred_check
          %p4492 = pneg %p184
        $region70: #{_vae_forward_impl.1} parent=63 // pred_check_branch
          %4494 = sbr.rel (%p4492) target = $region72
        $region71: #{_vae_forward_impl.1} parent=63 // pred_region
          %p4495 = scmp.lt.s32.totalorder %s25, 1
          %s4496 = scalar_select %p4495, %s25, 1
          %s4497 = smul.addr %s4496, 8
          %s4498 = scalar_lea.vmem %s6, %s4497
        $region72: #{_vae_forward_impl.1} parent=63 // pred_fallthru
          _
        // Predicated region
        $region73: #{_vae_forward_impl.1} parent=63 // pred_check
          %p4499 = pneg %p210
        $region74: #{_vae_forward_impl.1} parent=63 // pred_check_branch
          %4501 = sbr.rel (%p4499) target = $region76
        $region75: #{_vae_forward_impl.1} parent=63 // pred_region
          %p4502 = scmp.lt.s32.totalorder %s25, 1
          %s4503 = scalar_select %p4502, %s25, 1
          %s4504 = smul.addr %s4503, 8
          %s4505 = scalar_lea.vmem %s7, %s4504
        $region76: #{_vae_forward_impl.1} parent=63 // pred_fallthru
          _
      $region64: #{_vae_forward_impl.1} parent=5 // pred_fallthru
        _
    $region6: #{_vae_forward_impl.1} parent=1 // loop_footer
      %s23 = sadd.s32 1, %s19
    $region7: #{_vae_forward_impl.1} parent=1 // loop_footer_branch
      %18 = sbr.rel target = $region3
    $region8: #{_vae_forward_impl.1} parent=1 // loop_exit
      _
    %4506 = vsyncpa [#allocation3], 1
    %s4507 = scalar_lea.sflag [#allocation3], 1
    %4508 = vsyncpa %s4507, 1
    %4509 = vsyncpa [#allocation6], 1
    %4510 = vsyncpa [#allocation4], 1
    %s4511 = scalar_lea.sflag [#allocation4], 1
    %4512 = vsyncpa %s4511, 1

</llo_original>
